<compile_context>
chip_gen: v6e
topology: v6e:2x2x1
jax: 0.10.0
libtpu: 0.0.40
codegen_flags: <defaults>
</compile_context>

<pallas_src>
import jax
import jax.numpy as jnp
from jax.experimental import pallas as pl
from jax.experimental.pallas import tpu as pltpu


D_IN, H1, H2 = 784, 128, 64
H2_PAD = 128   # bottleneck padded to a full 128-lane tile (weight-side, free)

# Whether this jax build accepts pipeline_mode=pl.Buffered(1) on grid-invariant
# inputs (probed on the first call, then cached).
_SINGLE_BUFFER_WEIGHTS_OK = None


def _round_up(n, m):
    return ((n + m - 1) // m) * m


def autoencoder_kernel(x_ref,
                       w1_ref, b1_ref,
                       w2_ref, b2_ref,
                       w3_ref, b3_ref,
                       w4_ref, b4_ref,
                       o_ref):
    cd = w1_ref.dtype                      # matmul-operand dtype (bf16 or f32)
    x = x_ref[...].astype(cd)

    # Encoder: Linear(784->128)+ReLU, Linear(128->64 [padded to 128])+ReLU.
    h = jnp.dot(x, w1_ref[...], preferred_element_type=jnp.float32) + b1_ref[...]
    h = jnp.maximum(h, 0.0)
    h = jnp.dot(h.astype(cd), w2_ref[...],
                preferred_element_type=jnp.float32) + b2_ref[...]
    h = jnp.maximum(h, 0.0)

    # Decoder: Linear(64->128 [padded])+ReLU, Linear(128->784)+Sigmoid.
    # (v6e/v7x note: the 128-wide layers only fill half the 256-wide MXU; the
    #  kernel is memory-bound so this is not worth restructuring.)
    h = jnp.dot(h.astype(cd), w3_ref[...],
                preferred_element_type=jnp.float32) + b3_ref[...]
    h = jnp.maximum(h, 0.0)
    h = jnp.dot(h.astype(cd), w4_ref[...],
                preferred_element_type=jnp.float32) + b4_ref[...]

    # sigmoid(h) = 1 / (1 + exp(-h)).  exp in the compute dtype (bf16 EUP is
    # ~2x on v6e/v7x) + approx EUP reciprocal; clamp keeps the output inside
    # [0, 1] despite the approximation (safe for downstream BCE-style losses).
    e = jnp.exp((-h).astype(cd)).astype(jnp.float32)
    sig = pl.reciprocal(1.0 + e, approx=True)
    o_ref[...] = jnp.clip(sig, 0.0, 1.0).astype(o_ref.dtype)


def prepare_params(params, compute_dtype=jnp.bfloat16):
    """One-time weight preparation (hoisted out of the per-call path).

    `params` holds weights already transposed to (in, out) layout (i.e. the
    transpose of PyTorch nn.Linear's (out, in) weight) and (1, out) biases.
    Matmul operands are cast to `compute_dtype`; biases stay f32; only the
    64-wide bottleneck is zero-padded to 128 lanes.
    """
    cd = compute_dtype
    f32 = jnp.float32
    w1 = params["w1"].astype(cd)                                       # (784, 128)
    b1 = params["b1"].astype(f32)                                      # (1, 128)
    w2 = jnp.zeros((H1, H2_PAD), cd).at[:, :H2].set(params["w2"].astype(cd))
    b2 = jnp.zeros((1, H2_PAD), f32).at[:, :H2].set(params["b2"].astype(f32))
    w3 = jnp.zeros((H2_PAD, H1), cd).at[:H2, :].set(params["w3"].astype(cd))
    b3 = params["b3"].astype(f32)                                      # (1, 128)
    w4 = params["w4"].astype(cd)                                       # (128, 784)
    b4 = params["b4"].astype(f32)                                      # (1, 784)
    return (w1, b1, w2, b2, w3, b3, w4, b4)


def vanilla_autoencoder(x, prepared, *, tile_b=512, out_dtype=None,
                        vmem_limit_bytes=None):
    """x: (B, 784). `prepared` = prepare_params(...). Returns (B, 784)."""
    B, D = x.shape
    assert D == D_IN
    assert tile_b % 8 == 0
    w1, b1, w2, b2, w3, b3, w4, b4 = prepared
    out_dtype = x.dtype if out_dtype is None else out_dtype

    # Large tiles amortize the ~0.35us/step pipeline overhead and fill the MXU
    # M dimension; cap at (rounded-up) B for small batches, and keep >= 2 grid
    # steps when the batch allows it so v7x's second TensorCore gets work.
    tile_b = min(tile_b, _round_up(B, 8))
    if B > 8 and pl.cdiv(B, tile_b) < 2:
        tile_b = _round_up(pl.cdiv(B, 2), 8)
    grid = (pl.cdiv(B, tile_b),)
    # TODO(synk): tile_b=1024 with f32 I/O is ~14 MiB of VMEM, right at v5e's
    # 16 MiB default scoped limit -- pass vmem_limit_bytes=24<<20 there.

    flops = 2 * B * (D_IN * H1 + H1 * H2_PAD + H2_PAD * H1 + H1 * D_IN)
    weight_bytes = sum(int(a.size) * a.dtype.itemsize for a in prepared)
    cost = pl.CostEstimate(
        flops=flops,
        transcendentals=B * D_IN,
        bytes_accessed=B * D_IN * (x.dtype.itemsize
                                   + jnp.dtype(out_dtype).itemsize) + weight_bytes,
    )

    def run(weight_mode):
        def wspec(a):
            if weight_mode is None:
                return pl.BlockSpec(a.shape, lambda i: (0, 0))
            return pl.BlockSpec(a.shape, lambda i: (0, 0),
                                pipeline_mode=weight_mode)

        return pl.pallas_call(
            autoencoder_kernel,
            out_shape=jax.ShapeDtypeStruct((B, D_IN), out_dtype),
            grid_spec=pltpu.PrefetchScalarGridSpec(
                num_scalar_prefetch=0,
                grid=grid,
                in_specs=[
                    pl.BlockSpec((tile_b, D_IN), lambda i: (i, 0)),   # x tile
                    wspec(w1), wspec(b1),
                    wspec(w2), wspec(b2),
                    wspec(w3), wspec(b3),
                    wspec(w4), wspec(b4),
                ],
                out_specs=pl.BlockSpec((tile_b, D_IN), lambda i: (i, 0)),
            ),
            compiler_params=pltpu.CompilerParams(
                dimension_semantics=("parallel",),
                vmem_limit_bytes=vmem_limit_bytes),
            cost_estimate=cost,
        )(x, w1, b1, w2, b2, w3, b3, w4, b4)

    global _SINGLE_BUFFER_WEIGHTS_OK
    if _SINGLE_BUFFER_WEIGHTS_OK is None:
        try:
            out = run(pl.Buffered(1))
            _SINGLE_BUFFER_WEIGHTS_OK = True
            return out
        except Exception:
            # TODO(synk): this jax build rejected pipeline_mode=pl.Buffered(1)
            # for grid-invariant weights; fall back to default double-buffering
            # (~0.5 MiB extra VMEM, otherwise identical).
            _SINGLE_BUFFER_WEIGHTS_OK = False
            return run(None)
    return run(pl.Buffered(1)) if _SINGLE_BUFFER_WEIGHTS_OK else run(None)


def init_params(key):
    """Deterministic parameter init (PyTorch Linear-style uniform fan-in)."""
    def linear(key, fan_in, fan_out):
        kw, kb = jax.random.split(key)
        bound = 1.0 / jnp.sqrt(fan_in)
        # stored pre-transposed: (fan_in, fan_out)
        w = jax.random.uniform(kw, (fan_in, fan_out), jnp.float32, -bound, bound)
        b = jax.random.uniform(kb, (1, fan_out), jnp.float32, -bound, bound)
        return w, b

    k1, k2, k3, k4 = jax.random.split(key, 4)
    w1, b1 = linear(k1, D_IN, H1)
    w2, b2 = linear(k2, H1, H2)
    w3, b3 = linear(k3, H2, H1)
    w4, b4 = linear(k4, H1, D_IN)
    return dict(w1=w1, b1=b1, w2=w2, b2=b2, w3=w3, b3=b3, w4=w4, b4=b4)


def reference_forward(x, p):
    relu = lambda v: jnp.maximum(v, 0.0)
    h = relu(x @ p["w1"] + p["b1"])
    h = relu(h @ p["w2"] + p["b2"])
    h = relu(h @ p["w3"] + p["b3"])
    return jax.nn.sigmoid(h @ p["w4"] + p["b4"])


if __name__ == "__main__":
    key = jax.random.PRNGKey(0)
    kx, kp = jax.random.split(key)

    B = 16
    x = jax.random.uniform(kx, (B, D_IN), jnp.float32)   # MNIST-like flattened batch
    params = init_params(kp)
    ref = reference_forward(x, params)

    # f32 compute path: tight check of kernel logic / cdiv-grid plumbing
    # (tolerance covers the approx-EUP reciprocal in the sigmoid epilogue).
    out_f32 = jax.block_until_ready(
        vanilla_autoencoder(x, prepare_params(params, compute_dtype=jnp.float32)))
    assert out_f32.shape == (B, D_IN)
    assert jnp.allclose(out_f32, ref, atol=5e-3, rtol=0.0), \
        float(jnp.max(jnp.abs(out_f32 - ref)))

    # Default bf16-operand path (MXU / EUP fast path on v6e/v7x).
    out = jax.block_until_ready(vanilla_autoencoder(x, prepare_params(params)))
    assert out.shape == (B, D_IN)
    assert jnp.allclose(out, ref, atol=2e-2, rtol=0.0), \
        float(jnp.max(jnp.abs(out - ref)))

    print("KERNEL_OK")
</pallas_src>

<mosaic_0001>
module attributes {stable_mosaic.version = 11 : i64} {
  func.func @autoencoder_kernel(%arg0: i32, %arg1: memref<8x784xf32, #tpu.memory_space<vmem>>, %arg2: memref<784x128xf32, #tpu.memory_space<vmem>>, %arg3: memref<1x128xf32, #tpu.memory_space<vmem>>, %arg4: memref<128x128xf32, #tpu.memory_space<vmem>>, %arg5: memref<1x128xf32, #tpu.memory_space<vmem>>, %arg6: memref<128x128xf32, #tpu.memory_space<vmem>>, %arg7: memref<1x128xf32, #tpu.memory_space<vmem>>, %arg8: memref<128x784xf32, #tpu.memory_space<vmem>>, %arg9: memref<1x784xf32, #tpu.memory_space<vmem>>, %arg10: memref<8x784xf32, #tpu.memory_space<vmem>>) attributes {dimension_semantics = [#tpu.dimension_semantics<parallel>], iteration_bounds = array<i64: 2>, scalar_prefetch = 0 : i64, scratch_operands = 0 : i64, tpu.core_type = #tpu.core_type<tc>, window_params = [{transform_indices = @transform_0, window_bounds = array<i64: 8, 784>}, {pipeline_mode = #tpu.pipeline_mode<synchronous>, transform_indices = @transform_1, window_bounds = array<i64: 784, 128>}, {pipeline_mode = #tpu.pipeline_mode<synchronous>, transform_indices = @transform_2, window_bounds = array<i64: 1, 128>}, {pipeline_mode = #tpu.pipeline_mode<synchronous>, transform_indices = @transform_3, window_bounds = array<i64: 128, 128>}, {pipeline_mode = #tpu.pipeline_mode<synchronous>, transform_indices = @transform_4, window_bounds = array<i64: 1, 128>}, {pipeline_mode = #tpu.pipeline_mode<synchronous>, transform_indices = @transform_5, window_bounds = array<i64: 128, 128>}, {pipeline_mode = #tpu.pipeline_mode<synchronous>, transform_indices = @transform_6, window_bounds = array<i64: 1, 128>}, {pipeline_mode = #tpu.pipeline_mode<synchronous>, transform_indices = @transform_7, window_bounds = array<i64: 128, 784>}, {pipeline_mode = #tpu.pipeline_mode<synchronous>, transform_indices = @transform_8, window_bounds = array<i64: 1, 784>}, {transform_indices = @transform_9, window_bounds = array<i64: 8, 784>}]} {
    %c0 = arith.constant 0 : index
    %c0_0 = arith.constant 0 : index
    %0 = vector.load %arg1[%c0, %c0_0] : memref<8x784xf32, #tpu.memory_space<vmem>>, vector<8x784xf32>
    %c0_1 = arith.constant 0 : index
    %c0_2 = arith.constant 0 : index
    %1 = vector.load %arg2[%c0_1, %c0_2] : memref<784x128xf32, #tpu.memory_space<vmem>>, vector<784x128xf32>
    %cst = arith.constant dense<0.000000e+00> : vector<8x128xf32>
    %2 = tpu.matmul %0, %1, %cst {dimension_numbers = #tpu.dot_dimension_numbers<[1], [0], [0], [1], [0, 0, 1, 1], [], []>} : vector<8x784xf32>, vector<784x128xf32>, vector<8x128xf32> -> vector<8x128xf32>
    %c0_3 = arith.constant 0 : index
    %c0_4 = arith.constant 0 : index
    %3 = vector.load %arg3[%c0_3, %c0_4] : memref<1x128xf32, #tpu.memory_space<vmem>>, vector<1x128xf32>
    %4 = vector.broadcast %3 : vector<1x128xf32> to vector<8x128xf32>
    %5 = arith.addf %2, %4 : vector<8x128xf32>
    %cst_5 = arith.constant 0.000000e+00 : f32
    %6 = vector.broadcast %cst_5 : f32 to vector<8x128xf32>
    %7 = arith.maximumf %5, %6 : vector<8x128xf32>
    %c0_6 = arith.constant 0 : index
    %c0_7 = arith.constant 0 : index
    %8 = vector.load %arg4[%c0_6, %c0_7] : memref<128x128xf32, #tpu.memory_space<vmem>>, vector<128x128xf32>
    %cst_8 = arith.constant dense<0.000000e+00> : vector<8x128xf32>
    %9 = tpu.matmul %7, %8, %cst_8 {dimension_numbers = #tpu.dot_dimension_numbers<[1], [0], [0], [1], [0, 0, 1, 1], [], []>} : vector<8x128xf32>, vector<128x128xf32>, vector<8x128xf32> -> vector<8x128xf32>
    %c0_9 = arith.constant 0 : index
    %c0_10 = arith.constant 0 : index
    %10 = vector.load %arg5[%c0_9, %c0_10] : memref<1x128xf32, #tpu.memory_space<vmem>>, vector<1x128xf32>
    %11 = vector.broadcast %10 : vector<1x128xf32> to vector<8x128xf32>
    %12 = arith.addf %9, %11 : vector<8x128xf32>
    %cst_11 = arith.constant 0.000000e+00 : f32
    %13 = vector.broadcast %cst_11 : f32 to vector<8x128xf32>
    %14 = arith.maximumf %12, %13 : vector<8x128xf32>
    %c0_12 = arith.constant 0 : index
    %c0_13 = arith.constant 0 : index
    %15 = vector.load %arg6[%c0_12, %c0_13] : memref<128x128xf32, #tpu.memory_space<vmem>>, vector<128x128xf32>
    %cst_14 = arith.constant dense<0.000000e+00> : vector<8x128xf32>
    %16 = tpu.matmul %14, %15, %cst_14 {dimension_numbers = #tpu.dot_dimension_numbers<[1], [0], [0], [1], [0, 0, 1, 1], [], []>} : vector<8x128xf32>, vector<128x128xf32>, vector<8x128xf32> -> vector<8x128xf32>
    %c0_15 = arith.constant 0 : index
    %c0_16 = arith.constant 0 : index
    %17 = vector.load %arg7[%c0_15, %c0_16] : memref<1x128xf32, #tpu.memory_space<vmem>>, vector<1x128xf32>
    %18 = vector.broadcast %17 : vector<1x128xf32> to vector<8x128xf32>
    %19 = arith.addf %16, %18 : vector<8x128xf32>
    %cst_17 = arith.constant 0.000000e+00 : f32
    %20 = vector.broadcast %cst_17 : f32 to vector<8x128xf32>
    %21 = arith.maximumf %19, %20 : vector<8x128xf32>
    %c0_18 = arith.constant 0 : index
    %c0_19 = arith.constant 0 : index
    %22 = vector.load %arg8[%c0_18, %c0_19] : memref<128x784xf32, #tpu.memory_space<vmem>>, vector<128x784xf32>
    %cst_20 = arith.constant dense<0.000000e+00> : vector<8x784xf32>
    %23 = tpu.matmul %21, %22, %cst_20 {dimension_numbers = #tpu.dot_dimension_numbers<[1], [0], [0], [1], [0, 0, 1, 1], [], []>} : vector<8x128xf32>, vector<128x784xf32>, vector<8x784xf32> -> vector<8x784xf32>
    %c0_21 = arith.constant 0 : index
    %c0_22 = arith.constant 0 : index
    %24 = vector.load %arg9[%c0_21, %c0_22] : memref<1x784xf32, #tpu.memory_space<vmem>>, vector<1x784xf32>
    %25 = vector.broadcast %24 : vector<1x784xf32> to vector<8x784xf32>
    %26 = arith.addf %23, %25 : vector<8x784xf32>
    %cst_23 = arith.constant 0.000000e+00 : f32
    %27 = vector.broadcast %cst_23 : f32 to vector<8x784xf32>
    %28 = arith.subf %27, %26 : vector<8x784xf32>
    %29 = math.exp %28 : vector<8x784xf32>
    %cst_24 = arith.constant 1.000000e+00 : f32
    %30 = vector.broadcast %cst_24 : f32 to vector<8x784xf32>
    %31 = arith.addf %30, %29 : vector<8x784xf32>
    %32 = tpu.reciprocal %31 {approx = true} : vector<8x784xf32> -> vector<8x784xf32>
    %cst_25 = arith.constant 0.000000e+00 : f32
    %cst_26 = arith.constant 1.000000e+00 : f32
    %33 = vector.broadcast %cst_25 : f32 to vector<8x784xf32>
    %34 = arith.maximumf %33, %32 : vector<8x784xf32>
    %35 = vector.broadcast %cst_26 : f32 to vector<8x784xf32>
    %36 = arith.minimumf %35, %34 : vector<8x784xf32>
    %c0_27 = arith.constant 0 : index
    %c0_28 = arith.constant 0 : index
    %37 = vector.load %arg10[%c0_27, %c0_28] : memref<8x784xf32, #tpu.memory_space<vmem>>, vector<8x784xf32>
    tpu.vector_store %arg10[%c0_27, %c0_28], %36 {strides = array<i32>} : memref<8x784xf32, #tpu.memory_space<vmem>>, vector<8x784xf32>,
    return
  }
  func.func @transform_0(%arg0: i32) -> (i32, i32) {
    %c0_i32 = arith.constant 0 : i32
    %c0_i32_0 = arith.constant 0 : i32
    return %arg0, %c0_i32 : i32, i32
  }
  func.func @transform_1(%arg0: i32) -> (i32, i32) {
    %c0_i32 = arith.constant 0 : i32
    %c0_i32_0 = arith.constant 0 : i32
    %c0_i32_1 = arith.constant 0 : i32
    return %c0_i32, %c0_i32_0 : i32, i32
  }
  func.func @transform_2(%arg0: i32) -> (i32, i32) {
    %c0_i32 = arith.constant 0 : i32
    %c0_i32_0 = arith.constant 0 : i32
    %c0_i32_1 = arith.constant 0 : i32
    return %c0_i32, %c0_i32_0 : i32, i32
  }
  func.func @transform_3(%arg0: i32) -> (i32, i32) {
    %c0_i32 = arith.constant 0 : i32
    %c0_i32_0 = arith.constant 0 : i32
    %c0_i32_1 = arith.constant 0 : i32
    return %c0_i32, %c0_i32_0 : i32, i32
  }
  func.func @transform_4(%arg0: i32) -> (i32, i32) {
    %c0_i32 = arith.constant 0 : i32
    %c0_i32_0 = arith.constant 0 : i32
    %c0_i32_1 = arith.constant 0 : i32
    return %c0_i32, %c0_i32_0 : i32, i32
  }
  func.func @transform_5(%arg0: i32) -> (i32, i32) {
    %c0_i32 = arith.constant 0 : i32
    %c0_i32_0 = arith.constant 0 : i32
    %c0_i32_1 = arith.constant 0 : i32
    return %c0_i32, %c0_i32_0 : i32, i32
  }
  func.func @transform_6(%arg0: i32) -> (i32, i32) {
    %c0_i32 = arith.constant 0 : i32
    %c0_i32_0 = arith.constant 0 : i32
    %c0_i32_1 = arith.constant 0 : i32
    return %c0_i32, %c0_i32_0 : i32, i32
  }
  func.func @transform_7(%arg0: i32) -> (i32, i32) {
    %c0_i32 = arith.constant 0 : i32
    %c0_i32_0 = arith.constant 0 : i32
    %c0_i32_1 = arith.constant 0 : i32
    return %c0_i32, %c0_i32_0 : i32, i32
  }
  func.func @transform_8(%arg0: i32) -> (i32, i32) {
    %c0_i32 = arith.constant 0 : i32
    %c0_i32_0 = arith.constant 0 : i32
    %c0_i32_1 = arith.constant 0 : i32
    return %c0_i32, %c0_i32_0 : i32, i32
  }
  func.func @transform_9(%arg0: i32) -> (i32, i32) {
    %c0_i32 = arith.constant 0 : i32
    %c0_i32_0 = arith.constant 0 : i32
    return %arg0, %c0_i32 : i32, i32
  }
}

module attributes {stable_mosaic.version = 11 : i64} {
  func.func @autoencoder_kernel(%arg0: i32, %arg1: memref<8x784xf32, #tpu.memory_space<vmem>>, %arg2: memref<784x128xf32, #tpu.memory_space<vmem>>, %arg3: memref<1x128xf32, #tpu.memory_space<vmem>>, %arg4: memref<128x128xf32, #tpu.memory_space<vmem>>, %arg5: memref<1x128xf32, #tpu.memory_space<vmem>>, %arg6: memref<128x128xf32, #tpu.memory_space<vmem>>, %arg7: memref<1x128xf32, #tpu.memory_space<vmem>>, %arg8: memref<128x784xf32, #tpu.memory_space<vmem>>, %arg9: memref<1x784xf32, #tpu.memory_space<vmem>>, %arg10: memref<8x784xf32, #tpu.memory_space<vmem>>) attributes {dimension_semantics = [#tpu.dimension_semantics<parallel>], iteration_bounds = array<i64: 2>, scalar_prefetch = 0 : i64, scratch_operands = 0 : i64, tpu.core_type = #tpu.core_type<tc>, window_params = [{transform_indices = @transform_0, window_bounds = array<i64: 8, 784>}, {pipeline_mode = #tpu.pipeline_mode<synchronous>, transform_indices = @transform_1, window_bounds = array<i64: 784, 128>}, {pipeline_mode = #tpu.pipeline_mode<synchronous>, transform_indices = @transform_2, window_bounds = array<i64: 1, 128>}, {pipeline_mode = #tpu.pipeline_mode<synchronous>, transform_indices = @transform_3, window_bounds = array<i64: 128, 128>}, {pipeline_mode = #tpu.pipeline_mode<synchronous>, transform_indices = @transform_4, window_bounds = array<i64: 1, 128>}, {pipeline_mode = #tpu.pipeline_mode<synchronous>, transform_indices = @transform_5, window_bounds = array<i64: 128, 128>}, {pipeline_mode = #tpu.pipeline_mode<synchronous>, transform_indices = @transform_6, window_bounds = array<i64: 1, 128>}, {pipeline_mode = #tpu.pipeline_mode<synchronous>, transform_indices = @transform_7, window_bounds = array<i64: 128, 784>}, {pipeline_mode = #tpu.pipeline_mode<synchronous>, transform_indices = @transform_8, window_bounds = array<i64: 1, 784>}, {transform_indices = @transform_9, window_bounds = array<i64: 8, 784>}]} {
    %c0 = arith.constant 0 : index
    %c0_0 = arith.constant 0 : index
    %0 = vector.load %arg1[%c0, %c0_0] : memref<8x784xf32, #tpu.memory_space<vmem>>, vector<8x784xf32>
    %c0_1 = arith.constant 0 : index
    %c0_2 = arith.constant 0 : index
    %1 = vector.load %arg2[%c0_1, %c0_2] : memref<784x128xf32, #tpu.memory_space<vmem>>, vector<784x128xf32>
    %cst = arith.constant dense<0.000000e+00> : vector<8x128xf32>
    %2 = tpu.matmul %0, %1, %cst {dimension_numbers = #tpu.dot_dimension_numbers<[1], [0], [0], [1], [0, 0, 1, 1], [], []>} : vector<8x784xf32>, vector<784x128xf32>, vector<8x128xf32> -> vector<8x128xf32>
    %c0_3 = arith.constant 0 : index
    %c0_4 = arith.constant 0 : index
    %3 = vector.load %arg3[%c0_3, %c0_4] : memref<1x128xf32, #tpu.memory_space<vmem>>, vector<1x128xf32>
    %4 = vector.broadcast %3 : vector<1x128xf32> to vector<8x128xf32>
    %5 = arith.addf %2, %4 : vector<8x128xf32>
    %cst_5 = arith.constant 0.000000e+00 : f32
    %6 = vector.broadcast %cst_5 : f32 to vector<8x128xf32>
    %7 = arith.maximumf %5, %6 : vector<8x128xf32>
    %c0_6 = arith.constant 0 : index
    %c0_7 = arith.constant 0 : index
    %8 = vector.load %arg4[%c0_6, %c0_7] : memref<128x128xf32, #tpu.memory_space<vmem>>, vector<128x128xf32>
    %cst_8 = arith.constant dense<0.000000e+00> : vector<8x128xf32>
    %9 = tpu.matmul %7, %8, %cst_8 {dimension_numbers = #tpu.dot_dimension_numbers<[1], [0], [0], [1], [0, 0, 1, 1], [], []>} : vector<8x128xf32>, vector<128x128xf32>, vector<8x128xf32> -> vector<8x128xf32>
    %c0_9 = arith.constant 0 : index
    %c0_10 = arith.constant 0 : index
    %10 = vector.load %arg5[%c0_9, %c0_10] : memref<1x128xf32, #tpu.memory_space<vmem>>, vector<1x128xf32>
    %11 = vector.broadcast %10 : vector<1x128xf32> to vector<8x128xf32>
    %12 = arith.addf %9, %11 : vector<8x128xf32>
    %cst_11 = arith.constant 0.000000e+00 : f32
    %13 = vector.broadcast %cst_11 : f32 to vector<8x128xf32>
    %14 = arith.maximumf %12, %13 : vector<8x128xf32>
    %c0_12 = arith.constant 0 : index
    %c0_13 = arith.constant 0 : index
    %15 = vector.load %arg6[%c0_12, %c0_13] : memref<128x128xf32, #tpu.memory_space<vmem>>, vector<128x128xf32>
    %cst_14 = arith.constant dense<0.000000e+00> : vector<8x128xf32>
    %16 = tpu.matmul %14, %15, %cst_14 {dimension_numbers = #tpu.dot_dimension_numbers<[1], [0], [0], [1], [0, 0, 1, 1], [], []>} : vector<8x128xf32>, vector<128x128xf32>, vector<8x128xf32> -> vector<8x128xf32>
    %c0_15 = arith.constant 0 : index
    %c0_16 = arith.constant 0 : index
    %17 = vector.load %arg7[%c0_15, %c0_16] : memref<1x128xf32, #tpu.memory_space<vmem>>, vector<1x128xf32>
    %18 = vector.broadcast %17 : vector<1x128xf32> to vector<8x128xf32>
    %19 = arith.addf %16, %18 : vector<8x128xf32>
    %cst_17 = arith.constant 0.000000e+00 : f32
    %20 = vector.broadcast %cst_17 : f32 to vector<8x128xf32>
    %21 = arith.maximumf %19, %20 : vector<8x128xf32>
    %c0_18 = arith.constant 0 : index
    %c0_19 = arith.constant 0 : index
    %22 = vector.load %arg8[%c0_18, %c0_19] : memref<128x784xf32, #tpu.memory_space<vmem>>, vector<128x784xf32>
    %cst_20 = arith.constant dense<0.000000e+00> : vector<8x784xf32>
    %23 = tpu.matmul %21, %22, %cst_20 {dimension_numbers = #tpu.dot_dimension_numbers<[1], [0], [0], [1], [0, 0, 1, 1], [], []>} : vector<8x128xf32>, vector<128x784xf32>, vector<8x784xf32> -> vector<8x784xf32>
    %c0_21 = arith.constant 0 : index
    %c0_22 = arith.constant 0 : index
    %24 = vector.load %arg9[%c0_21, %c0_22] : memref<1x784xf32, #tpu.memory_space<vmem>>, vector<1x784xf32>
    %25 = vector.broadcast %24 : vector<1x784xf32> to vector<8x784xf32>
    %26 = arith.addf %23, %25 : vector<8x784xf32>
    %cst_23 = arith.constant 0.000000e+00 : f32
    %27 = vector.broadcast %cst_23 : f32 to vector<8x784xf32>
    %28 = arith.subf %27, %26 : vector<8x784xf32>
    %29 = math.exp %28 : vector<8x784xf32>
    %cst_24 = arith.constant 1.000000e+00 : f32
    %30 = vector.broadcast %cst_24 : f32 to vector<8x784xf32>
    %31 = arith.addf %30, %29 : vector<8x784xf32>
    %32 = tpu.reciprocal %31 {approx = true} : vector<8x784xf32> -> vector<8x784xf32>
    %cst_25 = arith.constant 0.000000e+00 : f32
    %cst_26 = arith.constant 1.000000e+00 : f32
    %33 = vector.broadcast %cst_25 : f32 to vector<8x784xf32>
    %34 = arith.maximumf %33, %32 : vector<8x784xf32>
    %35 = vector.broadcast %cst_26 : f32 to vector<8x784xf32>
    %36 = arith.minimumf %35, %34 : vector<8x784xf32>
    %c0_27 = arith.constant 0 : index
    %c0_28 = arith.constant 0 : index
    %37 = vector.load %arg10[%c0_27, %c0_28] : memref<8x784xf32, #tpu.memory_space<vmem>>, vector<8x784xf32>
    tpu.vector_store %arg10[%c0_27, %c0_28], %36 {strides = array<i32>} : memref<8x784xf32, #tpu.memory_space<vmem>>, vector<8x784xf32>,
    return
  }
  func.func @transform_0(%arg0: i32) -> (i32, i32) {
    %c0_i32 = arith.constant 0 : i32
    %c0_i32_0 = arith.constant 0 : i32
    return %arg0, %c0_i32 : i32, i32
  }
  func.func @transform_1(%arg0: i32) -> (i32, i32) {
    %c0_i32 = arith.constant 0 : i32
    %c0_i32_0 = arith.constant 0 : i32
    %c0_i32_1 = arith.constant 0 : i32
    return %c0_i32, %c0_i32_0 : i32, i32
  }
  func.func @transform_2(%arg0: i32) -> (i32, i32) {
    %c0_i32 = arith.constant 0 : i32
    %c0_i32_0 = arith.constant 0 : i32
    %c0_i32_1 = arith.constant 0 : i32
    return %c0_i32, %c0_i32_0 : i32, i32
  }
  func.func @transform_3(%arg0: i32) -> (i32, i32) {
    %c0_i32 = arith.constant 0 : i32
    %c0_i32_0 = arith.constant 0 : i32
    %c0_i32_1 = arith.constant 0 : i32
    return %c0_i32, %c0_i32_0 : i32, i32
  }
  func.func @transform_4(%arg0: i32) -> (i32, i32) {
    %c0_i32 = arith.constant 0 : i32
    %c0_i32_0 = arith.constant 0 : i32
    %c0_i32_1 = arith.constant 0 : i32
    return %c0_i32, %c0_i32_0 : i32, i32
  }
  func.func @transform_5(%arg0: i32) -> (i32, i32) {
    %c0_i32 = arith.constant 0 : i32
    %c0_i32_0 = arith.constant 0 : i32
    %c0_i32_1 = arith.constant 0 : i32
    return %c0_i32, %c0_i32_0 : i32, i32
  }
  func.func @transform_6(%arg0: i32) -> (i32, i32) {
    %c0_i32 = arith.constant 0 : i32
    %c0_i32_0 = arith.constant 0 : i32
    %c0_i32_1 = arith.constant 0 : i32
    return %c0_i32, %c0_i32_0 : i32, i32
  }
  func.func @transform_7(%arg0: i32) -> (i32, i32) {
    %c0_i32 = arith.constant 0 : i32
    %c0_i32_0 = arith.constant 0 : i32
    %c0_i32_1 = arith.constant 0 : i32
    return %c0_i32, %c0_i32_0 : i32, i32
  }
  func.func @transform_8(%arg0: i32) -> (i32, i32) {
    %c0_i32 = arith.constant 0 : i32
    %c0_i32_0 = arith.constant 0 : i32
    %c0_i32_1 = arith.constant 0 : i32
    return %c0_i32, %c0_i32_0 : i32, i32
  }
  func.func @transform_9(%arg0: i32) -> (i32, i32) {
    %c0_i32 = arith.constant 0 : i32
    %c0_i32_0 = arith.constant 0 : i32
    return %arg0, %c0_i32 : i32, i32
  }
}

</mosaic_0001>

<llo_original>
// kernel: tpu_custom_call.1
$region0: #{tpu_custom_call.1}
  #allocation0 [shape = 'u32[]', space=smem, size = 0x4, offset = 0x4, fixed_abs, tag = 'smem constant byte address 0x4 - core index']
  #allocation1 [shape = 'u32[144,128]{1,0:T(1,128)}', space=vmem, size = 0x12000, scoped, tag = 'internal scratch']
  %s0 = inlined_call_operand.vmem [shape: f32[16,784], index: 0, kind: input, shape index: {}]
  %s1 = inlined_call_operand.vmem [shape: f32[784,128], index: 1, kind: input, shape index: {}]
  %s2 = inlined_call_operand.vmem [shape: f32[1,128], index: 2, kind: input, shape index: {}]
  %s3 = inlined_call_operand.vmem [shape: f32[128,128], index: 3, kind: input, shape index: {}]
  %s4 = inlined_call_operand.vmem [shape: f32[1,128], index: 4, kind: input, shape index: {}]
  %s5 = inlined_call_operand.vmem [shape: f32[128,128], index: 5, kind: input, shape index: {}]
  %s6 = inlined_call_operand.vmem [shape: f32[1,128], index: 6, kind: input, shape index: {}]
  %s7 = inlined_call_operand.vmem [shape: f32[128,784], index: 7, kind: input, shape index: {}]
  %s8 = inlined_call_operand.vmem [shape: f32[1,784], index: 8, kind: input, shape index: {}]
  %s9 = inlined_call_operand.hbm [shape: f32[16,784], index: 9, kind: output, shape index: {}]
  %s10 = sld [smem:[#allocation0]]
  $region69: #{tpu_custom_call.1} parent=0
    _
  %s12 = ssub.s32 1, %s10
  %s13 = scalar_select 0, %s12, %s10
  $region1: #{tpu_custom_call.1} parent=0
    #allocation2 [shape = 'u8[57344]{0}', space=vmem, size = 0xe000, scoped, tag = 'output window, operand 0']
    #allocation3 [shape = 's32[2]{0}', space=sflag, size = 0x8, scoped, tag = 'scoped memory for tpu_custom_call.1']
    %14 = vsyncpa [#allocation3], 0
    %s15 = scalar_lea.sflag [#allocation3], 1
    %16 = vsyncpa %s15, 0
    loop: start=0, step=1, limit=4
    $region2: #{tpu_custom_call.1} parent=1 // loop_pre_header
      _
    $region3: #{tpu_custom_call.1} parent=1 // loop_header
      %s18 = sphi 0, %s22
      %p19 = scmp.ge.s32.totalorder %s18, 4
      %s28 = sphi 0, %s30
      %s31 = sphi 0, %s28
      %s32 = sphi 0, %s31
      %s48 = sphi 0, %s32
      %s52 = sphi 0, %s52
      %s54 = sphi 0, %s52
      %s55 = sphi 0, %s54
      %s69 = sphi 0, %s55
      %s73 = sphi 0, %s73
      %s75 = sphi 0, %s73
      %s76 = sphi 0, %s75
      %s90 = sphi 0, %s76
      %s94 = sphi 0, %s94
      %s96 = sphi 0, %s94
      %s97 = sphi 0, %s96
      %s111 = sphi 0, %s97
      %s115 = sphi 0, %s115
      %s117 = sphi 0, %s115
      %s118 = sphi 0, %s117
      %s132 = sphi 0, %s118
      %s136 = sphi 0, %s136
      %s138 = sphi 0, %s136
      %s139 = sphi 0, %s138
      %s153 = sphi 0, %s139
      %s157 = sphi 0, %s157
      %s159 = sphi 0, %s157
      %s160 = sphi 0, %s159
      %s174 = sphi 0, %s160
      %s178 = sphi 0, %s178
      %s180 = sphi 0, %s178
      %s181 = sphi 0, %s180
      %s195 = sphi 0, %s181
      %s199 = sphi 0, %s199
      %s201 = sphi 0, %s199
      %s202 = sphi 0, %s201
      %s216 = sphi 0, %s202
      %s222 = sphi 0, %s224
      %s225 = sphi 0, %s222
      %s226 = sphi 0, %s225
      %s242 = sphi 0, %s226
    $region4: #{tpu_custom_call.1} parent=1 // loop_header_branch
      %21 = sbr.rel (%p19) target = $region8
    $region5: #{tpu_custom_call.1} parent=1 // loop_body
      %s23 = ssub.s32 %s18, 1
      %s24 = ssub.s32 %s18, 2
      %s25 = sadd.s32 %s18, 1
      %s26 = ssub.s32 %s18, %s25
      %p27 = scmp.eq.s32.totalorder %s26, 0
      %s29 = sadd.s32 %s28, 1
      %s30 = scalar_select %p27, %s28, %s29
      %p33 = pneg %p27
      %p34 = scmp.eq.s32.totalorder %s18, 1
      %p35 = por %p33, %p34
      %p36 = scmp.ne.s32.totalorder %s28, %s31
      %p37 = scmp.eq.s32.totalorder %s18, 0
      %p38 = por %p36, %p37
      %p39 = scmp.ne.s32.totalorder %s28, %s31
      %p40 = scmp.eq.s32.totalorder %s23, 1
      %p41 = por %p39, %p40
      %p42 = scmp.ne.s32.totalorder %s31, %s32
      %p43 = scmp.eq.s32.totalorder %s23, 0
      %p44 = por %p42, %p43
      %p45 = scmp.ne.s32.totalorder %s31, %s32
      %p46 = scmp.eq.s32.totalorder %s24, 1
      %p47 = por %p45, %p46
      %p49 = scmp.ne.s32.totalorder %s32, %s48
      %p50 = scmp.eq.s32.totalorder %s24, 0
      %p51 = por %p49, %p50
      %s53 = sadd.s32 %s52, 1
      %p56 = scmp.eq.s32.totalorder %s18, 1
      %p57 = scmp.ne.s32.totalorder %s52, %s54
      %p58 = scmp.eq.s32.totalorder %s18, 0
      %p59 = por %p57, %p58
      %p60 = scmp.ne.s32.totalorder %s52, %s54
      %p61 = scmp.eq.s32.totalorder %s23, 1
      %p62 = por %p60, %p61
      %p63 = scmp.ne.s32.totalorder %s54, %s55
      %p64 = scmp.eq.s32.totalorder %s23, 0
      %p65 = por %p63, %p64
      %p66 = scmp.ne.s32.totalorder %s54, %s55
      %p67 = scmp.eq.s32.totalorder %s24, 1
      %p68 = por %p66, %p67
      %p70 = scmp.ne.s32.totalorder %s55, %s69
      %p71 = scmp.eq.s32.totalorder %s24, 0
      %p72 = por %p70, %p71
      %s74 = sadd.s32 %s73, 1
      %p77 = scmp.eq.s32.totalorder %s18, 1
      %p78 = scmp.ne.s32.totalorder %s73, %s75
      %p79 = scmp.eq.s32.totalorder %s18, 0
      %p80 = por %p78, %p79
      %p81 = scmp.ne.s32.totalorder %s73, %s75
      %p82 = scmp.eq.s32.totalorder %s23, 1
      %p83 = por %p81, %p82
      %p84 = scmp.ne.s32.totalorder %s75, %s76
      %p85 = scmp.eq.s32.totalorder %s23, 0
      %p86 = por %p84, %p85
      %p87 = scmp.ne.s32.totalorder %s75, %s76
      %p88 = scmp.eq.s32.totalorder %s24, 1
      %p89 = por %p87, %p88
      %p91 = scmp.ne.s32.totalorder %s76, %s90
      %p92 = scmp.eq.s32.totalorder %s24, 0
      %p93 = por %p91, %p92
      %s95 = sadd.s32 %s94, 1
      %p98 = scmp.eq.s32.totalorder %s18, 1
      %p99 = scmp.ne.s32.totalorder %s94, %s96
      %p100 = scmp.eq.s32.totalorder %s18, 0
      %p101 = por %p99, %p100
      %p102 = scmp.ne.s32.totalorder %s94, %s96
      %p103 = scmp.eq.s32.totalorder %s23, 1
      %p104 = por %p102, %p103
      %p105 = scmp.ne.s32.totalorder %s96, %s97
      %p106 = scmp.eq.s32.totalorder %s23, 0
      %p107 = por %p105, %p106
      %p108 = scmp.ne.s32.totalorder %s96, %s97
      %p109 = scmp.eq.s32.totalorder %s24, 1
      %p110 = por %p108, %p109
      %p112 = scmp.ne.s32.totalorder %s97, %s111
      %p113 = scmp.eq.s32.totalorder %s24, 0
      %p114 = por %p112, %p113
      %s116 = sadd.s32 %s115, 1
      %p119 = scmp.eq.s32.totalorder %s18, 1
      %p120 = scmp.ne.s32.totalorder %s115, %s117
      %p121 = scmp.eq.s32.totalorder %s18, 0
      %p122 = por %p120, %p121
      %p123 = scmp.ne.s32.totalorder %s115, %s117
      %p124 = scmp.eq.s32.totalorder %s23, 1
      %p125 = por %p123, %p124
      %p126 = scmp.ne.s32.totalorder %s117, %s118
      %p127 = scmp.eq.s32.totalorder %s23, 0
      %p128 = por %p126, %p127
      %p129 = scmp.ne.s32.totalorder %s117, %s118
      %p130 = scmp.eq.s32.totalorder %s24, 1
      %p131 = por %p129, %p130
      %p133 = scmp.ne.s32.totalorder %s118, %s132
      %p134 = scmp.eq.s32.totalorder %s24, 0
      %p135 = por %p133, %p134
      %s137 = sadd.s32 %s136, 1
      %p140 = scmp.eq.s32.totalorder %s18, 1
      %p141 = scmp.ne.s32.totalorder %s136, %s138
      %p142 = scmp.eq.s32.totalorder %s18, 0
      %p143 = por %p141, %p142
      %p144 = scmp.ne.s32.totalorder %s136, %s138
      %p145 = scmp.eq.s32.totalorder %s23, 1
      %p146 = por %p144, %p145
      %p147 = scmp.ne.s32.totalorder %s138, %s139
      %p148 = scmp.eq.s32.totalorder %s23, 0
      %p149 = por %p147, %p148
      %p150 = scmp.ne.s32.totalorder %s138, %s139
      %p151 = scmp.eq.s32.totalorder %s24, 1
      %p152 = por %p150, %p151
      %p154 = scmp.ne.s32.totalorder %s139, %s153
      %p155 = scmp.eq.s32.totalorder %s24, 0
      %p156 = por %p154, %p155
      %s158 = sadd.s32 %s157, 1
      %p161 = scmp.eq.s32.totalorder %s18, 1
      %p162 = scmp.ne.s32.totalorder %s157, %s159
      %p163 = scmp.eq.s32.totalorder %s18, 0
      %p164 = por %p162, %p163
      %p165 = scmp.ne.s32.totalorder %s157, %s159
      %p166 = scmp.eq.s32.totalorder %s23, 1
      %p167 = por %p165, %p166
      %p168 = scmp.ne.s32.totalorder %s159, %s160
      %p169 = scmp.eq.s32.totalorder %s23, 0
      %p170 = por %p168, %p169
      %p171 = scmp.ne.s32.totalorder %s159, %s160
      %p172 = scmp.eq.s32.totalorder %s24, 1
      %p173 = por %p171, %p172
      %p175 = scmp.ne.s32.totalorder %s160, %s174
      %p176 = scmp.eq.s32.totalorder %s24, 0
      %p177 = por %p175, %p176
      %s179 = sadd.s32 %s178, 1
      %p182 = scmp.eq.s32.totalorder %s18, 1
      %p183 = scmp.ne.s32.totalorder %s178, %s180
      %p184 = scmp.eq.s32.totalorder %s18, 0
      %p185 = por %p183, %p184
      %p186 = scmp.ne.s32.totalorder %s178, %s180
      %p187 = scmp.eq.s32.totalorder %s23, 1
      %p188 = por %p186, %p187
      %p189 = scmp.ne.s32.totalorder %s180, %s181
      %p190 = scmp.eq.s32.totalorder %s23, 0
      %p191 = por %p189, %p190
      %p192 = scmp.ne.s32.totalorder %s180, %s181
      %p193 = scmp.eq.s32.totalorder %s24, 1
      %p194 = por %p192, %p193
      %p196 = scmp.ne.s32.totalorder %s181, %s195
      %p197 = scmp.eq.s32.totalorder %s24, 0
      %p198 = por %p196, %p197
      %s200 = sadd.s32 %s199, 1
      %p203 = scmp.eq.s32.totalorder %s18, 1
      %p204 = scmp.ne.s32.totalorder %s199, %s201
      %p205 = scmp.eq.s32.totalorder %s18, 0
      %p206 = por %p204, %p205
      %p207 = scmp.ne.s32.totalorder %s199, %s201
      %p208 = scmp.eq.s32.totalorder %s23, 1
      %p209 = por %p207, %p208
      %p210 = scmp.ne.s32.totalorder %s201, %s202
      %p211 = scmp.eq.s32.totalorder %s23, 0
      %p212 = por %p210, %p211
      %p213 = scmp.ne.s32.totalorder %s201, %s202
      %p214 = scmp.eq.s32.totalorder %s24, 1
      %p215 = por %p213, %p214
      %p217 = scmp.ne.s32.totalorder %s202, %s216
      %p218 = scmp.eq.s32.totalorder %s24, 0
      %p219 = por %p217, %p218
      %s220 = ssub.s32 %s18, %s25
      %p221 = scmp.eq.s32.totalorder %s220, 0
      %s223 = sadd.s32 %s222, 1
      %s224 = scalar_select %p221, %s222, %s223
      %p227 = pneg %p221
      %p228 = scmp.eq.s32.totalorder %s18, 1
      %p229 = por %p227, %p228
      %p230 = scmp.ne.s32.totalorder %s222, %s225
      %p231 = scmp.eq.s32.totalorder %s18, 0
      %p232 = por %p230, %p231
      %p233 = scmp.ne.s32.totalorder %s222, %s225
      %p234 = scmp.eq.s32.totalorder %s23, 1
      %p235 = por %p233, %p234
      %p236 = scmp.ne.s32.totalorder %s225, %s226
      %p237 = scmp.eq.s32.totalorder %s23, 0
      %p238 = por %p236, %p237
      %p239 = scmp.ne.s32.totalorder %s225, %s226
      %p240 = scmp.eq.s32.totalorder %s24, 1
      %p241 = por %p239, %p240
      %p243 = scmp.ne.s32.totalorder %s226, %s242
      %p244 = scmp.eq.s32.totalorder %s24, 0
      %p245 = por %p243, %p244
      %p246 = scmp.le.s32.totalorder 1, %s18
      %p247 = scmp.lt.s32.totalorder %s18, 3
      %p248 = pnand %p246, %p247
      %p249 = pneg %p248
      // Predicated region
      $region9: #{tpu_custom_call.1} parent=5 // pred_check
        _
      $region10: #{tpu_custom_call.1} parent=5 // pred_check_branch
        %251 = sbr.rel (%p248) target = $region12
      $region11: #{tpu_custom_call.1} parent=5 // pred_region
        %s252 = ssub.s32 %s18, 1
        // Predicated region
        $region13: #{tpu_custom_call.1} parent=11 // pred_check
          %p253 = pneg %p65
        $region14: #{tpu_custom_call.1} parent=11 // pred_check_branch
          %255 = sbr.rel (%p253) target = $region16
        $region15: #{tpu_custom_call.1} parent=11 // pred_region
          _
        $region16: #{tpu_custom_call.1} parent=11 // pred_fallthru
          _
        // Predicated region
        $region17: #{tpu_custom_call.1} parent=11 // pred_check
          %p256 = pneg %p86
        $region18: #{tpu_custom_call.1} parent=11 // pred_check_branch
          %258 = sbr.rel (%p256) target = $region20
        $region19: #{tpu_custom_call.1} parent=11 // pred_region
          _
        $region20: #{tpu_custom_call.1} parent=11 // pred_fallthru
          _
        // Predicated region
        $region21: #{tpu_custom_call.1} parent=11 // pred_check
          %p259 = pneg %p107
        $region22: #{tpu_custom_call.1} parent=11 // pred_check_branch
          %261 = sbr.rel (%p259) target = $region24
        $region23: #{tpu_custom_call.1} parent=11 // pred_region
          _
        $region24: #{tpu_custom_call.1} parent=11 // pred_fallthru
          _
        // Predicated region
        $region25: #{tpu_custom_call.1} parent=11 // pred_check
          %p262 = pneg %p128
        $region26: #{tpu_custom_call.1} parent=11 // pred_check_branch
          %264 = sbr.rel (%p262) target = $region28
        $region27: #{tpu_custom_call.1} parent=11 // pred_region
          _
        $region28: #{tpu_custom_call.1} parent=11 // pred_fallthru
          _
        // Predicated region
        $region29: #{tpu_custom_call.1} parent=11 // pred_check
          %p265 = pneg %p149
        $region30: #{tpu_custom_call.1} parent=11 // pred_check_branch
          %267 = sbr.rel (%p265) target = $region32
        $region31: #{tpu_custom_call.1} parent=11 // pred_region
          _
        $region32: #{tpu_custom_call.1} parent=11 // pred_fallthru
          _
        // Predicated region
        $region33: #{tpu_custom_call.1} parent=11 // pred_check
          %p268 = pneg %p170
        $region34: #{tpu_custom_call.1} parent=11 // pred_check_branch
          %270 = sbr.rel (%p268) target = $region36
        $region35: #{tpu_custom_call.1} parent=11 // pred_region
          _
        $region36: #{tpu_custom_call.1} parent=11 // pred_fallthru
          _
        // Predicated region
        $region37: #{tpu_custom_call.1} parent=11 // pred_check
          %p271 = pneg %p191
        $region38: #{tpu_custom_call.1} parent=11 // pred_check_branch
          %273 = sbr.rel (%p271) target = $region40
        $region39: #{tpu_custom_call.1} parent=11 // pred_region
          _
        $region40: #{tpu_custom_call.1} parent=11 // pred_fallthru
          _
        // Predicated region
        $region41: #{tpu_custom_call.1} parent=11 // pred_check
          %p274 = pneg %p212
        $region42: #{tpu_custom_call.1} parent=11 // pred_check_branch
          %276 = sbr.rel (%p274) target = $region44
        $region43: #{tpu_custom_call.1} parent=11 // pred_region
          _
        $region44: #{tpu_custom_call.1} parent=11 // pred_fallthru
          _
      $region12: #{tpu_custom_call.1} parent=5 // pred_fallthru
        _
      %p277 = scmp.lt.s32.totalorder %s18, 2
      // Predicated region
      $region45: #{tpu_custom_call.1} parent=5 // pred_check
        %p278 = pneg %p277
      $region46: #{tpu_custom_call.1} parent=5 // pred_check_branch
        %280 = sbr.rel (%p278) target = $region48
      $region47: #{tpu_custom_call.1} parent=5 // pred_region
        // Predicated region
        $region49: #{tpu_custom_call.1} parent=47 // pred_check
          %p281 = pneg %p38
        $region50: #{tpu_custom_call.1} parent=47 // pred_check_branch
          %283 = sbr.rel (%p281) target = $region52
        $region51: #{tpu_custom_call.1} parent=47 // pred_region
          %p284 = scmp.lt.s32.totalorder %s18, 1
          %s285 = scalar_select %p284, %s18, 1
          %s286 = smul.addr %s285, 7
          %s287 = smul.addr %s286, 8
          %s288 = scalar_lea.vmem %s0, %s287
        $region52: #{tpu_custom_call.1} parent=47 // pred_fallthru
          _
      $region48: #{tpu_custom_call.1} parent=5 // pred_fallthru
        _
      %p289 = scmp.le.s32.totalorder 1, %s18
      %p290 = scmp.lt.s32.totalorder %s18, 3
      %p291 = pnand %p289, %p290
      %p292 = pneg %p291
      // Predicated region
      $region53: #{tpu_custom_call.1} parent=5 // pred_check
        _
      $region54: #{tpu_custom_call.1} parent=5 // pred_check_branch
        %294 = sbr.rel (%p291) target = $region56
      $region55: #{tpu_custom_call.1} parent=5 // pred_region
        %s295 = ssub.s32 %s18, 1
        %p296 = scmp.lt.s32.totalorder %s23, 1
        %s297 = scalar_select %p296, %s23, 1
        %s298 = smul.addr %s297, 7
        %s299 = smul.addr %s298, 8
        %s300 = scalar_lea.vmem %s0, %s299
        %p301 = pneg %p44
        %p302 = pneg %p41
        %p303 = pneg %p65
        %p304 = pneg %p62
        %p305 = pneg %p86
        %p306 = pneg %p83
        %p307 = pneg %p107
        %p308 = pneg %p104
        %p309 = pneg %p128
        %p310 = pneg %p125
        %p311 = pneg %p149
        %p312 = pneg %p146
        %p313 = pneg %p170
        %p314 = pneg %p167
        %p315 = pneg %p191
        %p316 = pneg %p188
        %p317 = pneg %p212
        %p318 = pneg %p209
        %p319 = pneg %p238
        %p320 = pneg %p235
        %s321 = sand.u32 %s225, 1
        %s322 = scalar_lea.sflag [#allocation3], %s321
        %s323 = sand.u32 %s225, 1
        %s324 = smul.addr %s323, 56
        %s325 = scalar_lea.vmem [#allocation2], %s324
        %p326 = scmp.lt.s32.totalorder %s23, 1
        %s327 = scalar_select %p326, %s23, 1
        %s328 = smul.addr %s327, 7
        %s329 = smul.addr %s328, 8
        %s330 = scalar_lea.vmem %s0, %s329
        %v331 = vld [vmem:[%s330] sm:$0xff]
        %v332 = vld [vmem:[%s330 + $0x8] sm:$0xff]
        %v333 = vld [vmem:[%s330 + $0x10] sm:$0xff]
        %v334 = vld [vmem:[%s330 + $0x18] sm:$0xff]
        %v335 = vld [vmem:[%s330 + $0x20] sm:$0xff]
        %v336 = vld [vmem:[%s330 + $0x28] sm:$0xff]
        %v337 = vld [vmem:[%s330 + $0x30] sm:$0xff]
        %v338 = vld [vmem:[%s1] sm:$0xff]
        %v339 = vld [vmem:[%s1 + $0x8] sm:$0xff]
        %v340 = vld [vmem:[%s1 + $0x10] sm:$0xff]
        %v341 = vld [vmem:[%s1 + $0x18] sm:$0xff]
        %v342 = vld [vmem:[%s1 + $0x20] sm:$0xff]
        %v343 = vld [vmem:[%s1 + $0x28] sm:$0xff]
        %v344 = vld [vmem:[%s1 + $0x30] sm:$0xff]
        %v345 = vld [vmem:[%s1 + $0x38] sm:$0xff]
        %v346 = vld [vmem:[%s1 + $0x40] sm:$0xff]
        %v347 = vld [vmem:[%s1 + $0x48] sm:$0xff]
        %v348 = vld [vmem:[%s1 + $0x50] sm:$0xff]
        %v349 = vld [vmem:[%s1 + $0x58] sm:$0xff]
        %v350 = vld [vmem:[%s1 + $0x60] sm:$0xff]
        %v351 = vld [vmem:[%s1 + $0x68] sm:$0xff]
        %v352 = vld [vmem:[%s1 + $0x70] sm:$0xff]
        %v353 = vld [vmem:[%s1 + $0x78] sm:$0xff]
        %v354 = vld [vmem:[%s1 + $0x80] sm:$0xff]
        %v355 = vld [vmem:[%s1 + $0x88] sm:$0xff]
        %v356 = vld [vmem:[%s1 + $0x90] sm:$0xff]
        %v357 = vld [vmem:[%s1 + $0x98] sm:$0xff]
        %v358 = vld [vmem:[%s1 + $0xa0] sm:$0xff]
        %v359 = vld [vmem:[%s1 + $0xa8] sm:$0xff]
        %v360 = vld [vmem:[%s1 + $0xb0] sm:$0xff]
        %v361 = vld [vmem:[%s1 + $0xb8] sm:$0xff]
        %v362 = vld [vmem:[%s1 + $0xc0] sm:$0xff]
        %v363 = vld [vmem:[%s1 + $0xc8] sm:$0xff]
        %v364 = vld [vmem:[%s1 + $0xd0] sm:$0xff]
        %v365 = vld [vmem:[%s1 + $0xd8] sm:$0xff]
        %v366 = vld [vmem:[%s1 + $0xe0] sm:$0xff]
        %v367 = vld [vmem:[%s1 + $0xe8] sm:$0xff]
        %v368 = vld [vmem:[%s1 + $0xf0] sm:$0xff]
        %v369 = vld [vmem:[%s1 + $0xf8] sm:$0xff]
        %v370 = vld [vmem:[%s1 + $0x100] sm:$0xff]
        %v371 = vld [vmem:[%s1 + $0x108] sm:$0xff]
        %v372 = vld [vmem:[%s1 + $0x110] sm:$0xff]
        %v373 = vld [vmem:[%s1 + $0x118] sm:$0xff]
        %v374 = vld [vmem:[%s1 + $0x120] sm:$0xff]
        %v375 = vld [vmem:[%s1 + $0x128] sm:$0xff]
        %v376 = vld [vmem:[%s1 + $0x130] sm:$0xff]
        %v377 = vld [vmem:[%s1 + $0x138] sm:$0xff]
        %v378 = vld [vmem:[%s1 + $0x140] sm:$0xff]
        %v379 = vld [vmem:[%s1 + $0x148] sm:$0xff]
        %v380 = vld [vmem:[%s1 + $0x150] sm:$0xff]
        %v381 = vld [vmem:[%s1 + $0x158] sm:$0xff]
        %v382 = vld [vmem:[%s1 + $0x160] sm:$0xff]
        %v383 = vld [vmem:[%s1 + $0x168] sm:$0xff]
        %v384 = vld [vmem:[%s1 + $0x170] sm:$0xff]
        %v385 = vld [vmem:[%s1 + $0x178] sm:$0xff]
        %v386 = vld [vmem:[%s1 + $0x180] sm:$0xff]
        %v387 = vld [vmem:[%s1 + $0x188] sm:$0xff]
        %v388 = vld [vmem:[%s1 + $0x190] sm:$0xff]
        %v389 = vld [vmem:[%s1 + $0x198] sm:$0xff]
        %v390 = vld [vmem:[%s1 + $0x1a0] sm:$0xff]
        %v391 = vld [vmem:[%s1 + $0x1a8] sm:$0xff]
        %v392 = vld [vmem:[%s1 + $0x1b0] sm:$0xff]
        %v393 = vld [vmem:[%s1 + $0x1b8] sm:$0xff]
        %v394 = vld [vmem:[%s1 + $0x1c0] sm:$0xff]
        %v395 = vld [vmem:[%s1 + $0x1c8] sm:$0xff]
        %v396 = vld [vmem:[%s1 + $0x1d0] sm:$0xff]
        %v397 = vld [vmem:[%s1 + $0x1d8] sm:$0xff]
        %v398 = vld [vmem:[%s1 + $0x1e0] sm:$0xff]
        %v399 = vld [vmem:[%s1 + $0x1e8] sm:$0xff]
        %v400 = vld [vmem:[%s1 + $0x1f0] sm:$0xff]
        %v401 = vld [vmem:[%s1 + $0x1f8] sm:$0xff]
        %v402 = vld [vmem:[%s1 + $0x200] sm:$0xff]
        %v403 = vld [vmem:[%s1 + $0x208] sm:$0xff]
        %v404 = vld [vmem:[%s1 + $0x210] sm:$0xff]
        %v405 = vld [vmem:[%s1 + $0x218] sm:$0xff]
        %v406 = vld [vmem:[%s1 + $0x220] sm:$0xff]
        %v407 = vld [vmem:[%s1 + $0x228] sm:$0xff]
        %v408 = vld [vmem:[%s1 + $0x230] sm:$0xff]
        %v409 = vld [vmem:[%s1 + $0x238] sm:$0xff]
        %v410 = vld [vmem:[%s1 + $0x240] sm:$0xff]
        %v411 = vld [vmem:[%s1 + $0x248] sm:$0xff]
        %v412 = vld [vmem:[%s1 + $0x250] sm:$0xff]
        %v413 = vld [vmem:[%s1 + $0x258] sm:$0xff]
        %v414 = vld [vmem:[%s1 + $0x260] sm:$0xff]
        %v415 = vld [vmem:[%s1 + $0x268] sm:$0xff]
        %v416 = vld [vmem:[%s1 + $0x270] sm:$0xff]
        %v417 = vld [vmem:[%s1 + $0x278] sm:$0xff]
        %v418 = vld [vmem:[%s1 + $0x280] sm:$0xff]
        %v419 = vld [vmem:[%s1 + $0x288] sm:$0xff]
        %v420 = vld [vmem:[%s1 + $0x290] sm:$0xff]
        %v421 = vld [vmem:[%s1 + $0x298] sm:$0xff]
        %v422 = vld [vmem:[%s1 + $0x2a0] sm:$0xff]
        %v423 = vld [vmem:[%s1 + $0x2a8] sm:$0xff]
        %v424 = vld [vmem:[%s1 + $0x2b0] sm:$0xff]
        %v425 = vld [vmem:[%s1 + $0x2b8] sm:$0xff]
        %v426 = vld [vmem:[%s1 + $0x2c0] sm:$0xff]
        %v427 = vld [vmem:[%s1 + $0x2c8] sm:$0xff]
        %v428 = vld [vmem:[%s1 + $0x2d0] sm:$0xff]
        %v429 = vld [vmem:[%s1 + $0x2d8] sm:$0xff]
        %v430 = vld [vmem:[%s1 + $0x2e0] sm:$0xff]
        %v431 = vld [vmem:[%s1 + $0x2e8] sm:$0xff]
        %v432 = vld [vmem:[%s1 + $0x2f0] sm:$0xff]
        %v433 = vld [vmem:[%s1 + $0x2f8] sm:$0xff]
        %v434 = vld [vmem:[%s1 + $0x300] sm:$0xff]
        %v435 = vld [vmem:[%s1 + $0x308] sm:$0xff]
        %v436 = vld [vmem:[%s2] sm:$0x1]
        %v438 = vlaneseq
        %v439 = vshrl.u32 %v438, 7
        %v440 = vsub.s32 0, %v439
        %v441 = vrot.slane %v436, %v440
        %vm443 = vcmask 130048
        %v445 = vsel %vm443, %v337, 0
        %447 = vmatprep.subr.mxu0 0.0
        %448 = vmatpush1.msra.mxu0 %v353
        %449 = vmatprep.subr.mxu0 0.0
        %450 = vmatpush1.msra.mxu0 %v352
        %451 = vmatprep.subr.mxu0 0.0
        %452 = vmatpush1.msra.mxu0 %v351
        %453 = vmatprep.subr.mxu0 0.0
        %454 = vmatpush1.msra.mxu0 %v350
        %455 = vmatprep.subr.mxu0 0.0
        %456 = vmatpush1.msra.mxu0 %v349
        %457 = vmatprep.subr.mxu0 0.0
        %458 = vmatpush1.msra.mxu0 %v348
        %459 = vmatprep.subr.mxu0 0.0
        %460 = vmatpush1.msra.mxu0 %v347
        %461 = vmatprep.subr.mxu0 0.0
        %462 = vmatpush1.msra.mxu0 %v346
        %463 = vmatprep.subr.mxu0 0.0
        %464 = vmatpush1.msra.mxu0 %v345
        %465 = vmatprep.subr.mxu0 0.0
        %466 = vmatpush1.msra.mxu0 %v344
        %467 = vmatprep.subr.mxu0 0.0
        %468 = vmatpush1.msra.mxu0 %v343
        %469 = vmatprep.subr.mxu0 0.0
        %470 = vmatpush1.msra.mxu0 %v342
        %471 = vmatprep.subr.mxu0 0.0
        %472 = vmatpush1.msra.mxu0 %v341
        %473 = vmatprep.subr.mxu0 0.0
        %474 = vmatpush1.msra.mxu0 %v340
        %475 = vmatprep.subr.mxu0 0.0
        %476 = vmatpush1.msra.mxu0 %v339
        %477 = vmatprep.subr.mxu0 0.0
        %478 = vmatpush1.msra.mxu0 %v338
        %479 = vmatprep.subr.mxu0 0.0
        %480 = vmatpush2.msra.mxu0 %v369
        %481 = vmatprep.subr.mxu0 0.0
        %482 = vmatpush2.msra.mxu0 %v368
        %483 = vmatprep.subr.mxu0 0.0
        %484 = vmatpush2.msra.mxu0 %v367
        %485 = vmatprep.subr.mxu0 0.0
        %486 = vmatpush2.msra.mxu0 %v366
        %487 = vmatprep.subr.mxu0 0.0
        %488 = vmatpush2.msra.mxu0 %v365
        %489 = vmatprep.subr.mxu0 0.0
        %490 = vmatpush2.msra.mxu0 %v364
        %491 = vmatprep.subr.mxu0 0.0
        %492 = vmatpush2.msra.mxu0 %v363
        %493 = vmatprep.subr.mxu0 0.0
        %494 = vmatpush2.msra.mxu0 %v362
        %495 = vmatprep.subr.mxu0 0.0
        %496 = vmatpush2.msra.mxu0 %v361
        %497 = vmatprep.subr.mxu0 0.0
        %498 = vmatpush2.msra.mxu0 %v360
        %499 = vmatprep.subr.mxu0 0.0
        %500 = vmatpush2.msra.mxu0 %v359
        %501 = vmatprep.subr.mxu0 0.0
        %502 = vmatpush2.msra.mxu0 %v358
        %503 = vmatprep.subr.mxu0 0.0
        %504 = vmatpush2.msra.mxu0 %v357
        %505 = vmatprep.subr.mxu0 0.0
        %506 = vmatpush2.msra.mxu0 %v356
        %507 = vmatprep.subr.mxu0 0.0
        %508 = vmatpush2.msra.mxu0 %v355
        %509 = vmatprep.subr.mxu0 0.0
        %510 = vmatpush2.msra.mxu0 %v354
        %511 = vmatprep.mubr.f32.mxu0 %v332
        %512 = vmatmul.mubr.f32.gmra.mxu0 %v331
        %v513 = vpop.f32.mrf.mxu0
        %v514 = vadd.f32 %v441, %v513
        %v515 = vpop.f32.mrf.mxu0
        %516 = vdwg.mxu0
        %517 = vmatprep.subr.mxu0 0.0
        %518 = vmatpush1.msra.mxu0 %v385
        %519 = vmatprep.subr.mxu0 0.0
        %520 = vmatpush1.msra.mxu0 %v384
        %521 = vmatprep.subr.mxu0 0.0
        %522 = vmatpush1.msra.mxu0 %v383
        %523 = vmatprep.subr.mxu0 0.0
        %524 = vmatpush1.msra.mxu0 %v382
        %525 = vmatprep.subr.mxu0 0.0
        %526 = vmatpush1.msra.mxu0 %v381
        %527 = vmatprep.subr.mxu0 0.0
        %528 = vmatpush1.msra.mxu0 %v380
        %529 = vmatprep.subr.mxu0 0.0
        %530 = vmatpush1.msra.mxu0 %v379
        %531 = vmatprep.subr.mxu0 0.0
        %532 = vmatpush1.msra.mxu0 %v378
        %533 = vmatprep.subr.mxu0 0.0
        %534 = vmatpush1.msra.mxu0 %v377
        %535 = vmatprep.subr.mxu0 0.0
        %536 = vmatpush1.msra.mxu0 %v376
        %537 = vmatprep.subr.mxu0 0.0
        %538 = vmatpush1.msra.mxu0 %v375
        %539 = vmatprep.subr.mxu0 0.0
        %540 = vmatpush1.msra.mxu0 %v374
        %541 = vmatprep.subr.mxu0 0.0
        %542 = vmatpush1.msra.mxu0 %v373
        %543 = vmatprep.subr.mxu0 0.0
        %544 = vmatpush1.msra.mxu0 %v372
        %545 = vmatprep.subr.mxu0 0.0
        %546 = vmatpush1.msra.mxu0 %v371
        %547 = vmatprep.subr.mxu0 0.0
        %548 = vmatpush1.msra.mxu0 %v370
        %549 = vmatprep.subr.mxu0 0.0
        %550 = vmatpush2.msra.mxu0 %v401
        %551 = vmatprep.subr.mxu0 0.0
        %552 = vmatpush2.msra.mxu0 %v400
        %553 = vmatprep.subr.mxu0 0.0
        %554 = vmatpush2.msra.mxu0 %v399
        %555 = vmatprep.subr.mxu0 0.0
        %556 = vmatpush2.msra.mxu0 %v398
        %557 = vmatprep.subr.mxu0 0.0
        %558 = vmatpush2.msra.mxu0 %v397
        %559 = vmatprep.subr.mxu0 0.0
        %560 = vmatpush2.msra.mxu0 %v396
        %561 = vmatprep.subr.mxu0 0.0
        %562 = vmatpush2.msra.mxu0 %v395
        %563 = vmatprep.subr.mxu0 0.0
        %564 = vmatpush2.msra.mxu0 %v394
        %565 = vmatprep.subr.mxu0 0.0
        %566 = vmatpush2.msra.mxu0 %v393
        %567 = vmatprep.subr.mxu0 0.0
        %568 = vmatpush2.msra.mxu0 %v392
        %569 = vmatprep.subr.mxu0 0.0
        %570 = vmatpush2.msra.mxu0 %v391
        %571 = vmatprep.subr.mxu0 0.0
        %572 = vmatpush2.msra.mxu0 %v390
        %573 = vmatprep.subr.mxu0 0.0
        %574 = vmatpush2.msra.mxu0 %v389
        %575 = vmatprep.subr.mxu0 0.0
        %576 = vmatpush2.msra.mxu0 %v388
        %577 = vmatprep.subr.mxu0 0.0
        %578 = vmatpush2.msra.mxu0 %v387
        %579 = vmatprep.subr.mxu0 0.0
        %580 = vmatpush2.msra.mxu0 %v386
        %581 = vmatprep.mubr.f32.mxu0 %v334
        %582 = vmatmul.mubr.f32.gmra.mxu0 %v333
        %v583 = vpop.f32.mrf.mxu0
        %v584 = vadd.f32 %v514, %v583
        %v585 = vpop.f32.mrf.mxu0
        %586 = vdwg.mxu0
        %587 = vmatprep.subr.mxu0 0.0
        %588 = vmatpush1.msra.mxu0 %v417
        %589 = vmatprep.subr.mxu0 0.0
        %590 = vmatpush1.msra.mxu0 %v416
        %591 = vmatprep.subr.mxu0 0.0
        %592 = vmatpush1.msra.mxu0 %v415
        %593 = vmatprep.subr.mxu0 0.0
        %594 = vmatpush1.msra.mxu0 %v414
        %595 = vmatprep.subr.mxu0 0.0
        %596 = vmatpush1.msra.mxu0 %v413
        %597 = vmatprep.subr.mxu0 0.0
        %598 = vmatpush1.msra.mxu0 %v412
        %599 = vmatprep.subr.mxu0 0.0
        %600 = vmatpush1.msra.mxu0 %v411
        %601 = vmatprep.subr.mxu0 0.0
        %602 = vmatpush1.msra.mxu0 %v410
        %603 = vmatprep.subr.mxu0 0.0
        %604 = vmatpush1.msra.mxu0 %v409
        %605 = vmatprep.subr.mxu0 0.0
        %606 = vmatpush1.msra.mxu0 %v408
        %607 = vmatprep.subr.mxu0 0.0
        %608 = vmatpush1.msra.mxu0 %v407
        %609 = vmatprep.subr.mxu0 0.0
        %610 = vmatpush1.msra.mxu0 %v406
        %611 = vmatprep.subr.mxu0 0.0
        %612 = vmatpush1.msra.mxu0 %v405
        %613 = vmatprep.subr.mxu0 0.0
        %614 = vmatpush1.msra.mxu0 %v404
        %615 = vmatprep.subr.mxu0 0.0
        %616 = vmatpush1.msra.mxu0 %v403
        %617 = vmatprep.subr.mxu0 0.0
        %618 = vmatpush1.msra.mxu0 %v402
        %619 = vmatprep.subr.mxu0 0.0
        %620 = vmatpush2.msra.mxu0 %v433
        %621 = vmatprep.subr.mxu0 0.0
        %622 = vmatpush2.msra.mxu0 %v432
        %623 = vmatprep.subr.mxu0 0.0
        %624 = vmatpush2.msra.mxu0 %v431
        %625 = vmatprep.subr.mxu0 0.0
        %626 = vmatpush2.msra.mxu0 %v430
        %627 = vmatprep.subr.mxu0 0.0
        %628 = vmatpush2.msra.mxu0 %v429
        %629 = vmatprep.subr.mxu0 0.0
        %630 = vmatpush2.msra.mxu0 %v428
        %631 = vmatprep.subr.mxu0 0.0
        %632 = vmatpush2.msra.mxu0 %v427
        %633 = vmatprep.subr.mxu0 0.0
        %634 = vmatpush2.msra.mxu0 %v426
        %635 = vmatprep.subr.mxu0 0.0
        %636 = vmatpush2.msra.mxu0 %v425
        %637 = vmatprep.subr.mxu0 0.0
        %638 = vmatpush2.msra.mxu0 %v424
        %639 = vmatprep.subr.mxu0 0.0
        %640 = vmatpush2.msra.mxu0 %v423
        %641 = vmatprep.subr.mxu0 0.0
        %642 = vmatpush2.msra.mxu0 %v422
        %643 = vmatprep.subr.mxu0 0.0
        %644 = vmatpush2.msra.mxu0 %v421
        %645 = vmatprep.subr.mxu0 0.0
        %646 = vmatpush2.msra.mxu0 %v420
        %647 = vmatprep.subr.mxu0 0.0
        %648 = vmatpush2.msra.mxu0 %v419
        %649 = vmatprep.subr.mxu0 0.0
        %650 = vmatpush2.msra.mxu0 %v418
        %651 = vmatprep.mubr.f32.mxu0 %v336
        %652 = vmatmul.mubr.f32.gmra.mxu0 %v335
        %v653 = vpop.f32.mrf.mxu0
        %v654 = vadd.f32 %v584, %v653
        %v655 = vpop.f32.mrf.mxu0
        %656 = vdwg.mxu0
        %657 = vmatprep.subr.mxu0 0.0
        %658 = vmatpush1.msra.mxu0 0.0
        %659 = vmatprep.subr.mxu0 0.0
        %660 = vmatpush1.msra.mxu0 0.0
        %661 = vmatprep.subr.mxu0 0.0
        %662 = vmatpush1.msra.mxu0 0.0
        %663 = vmatprep.subr.mxu0 0.0
        %664 = vmatpush1.msra.mxu0 0.0
        %665 = vmatprep.subr.mxu0 0.0
        %666 = vmatpush1.msra.mxu0 0.0
        %667 = vmatprep.subr.mxu0 0.0
        %668 = vmatpush1.msra.mxu0 0.0
        %669 = vmatprep.subr.mxu0 0.0
        %670 = vmatpush1.msra.mxu0 0.0
        %671 = vmatprep.subr.mxu0 0.0
        %672 = vmatpush1.msra.mxu0 0.0
        %673 = vmatprep.subr.mxu0 0.0
        %674 = vmatpush1.msra.mxu0 0.0
        %675 = vmatprep.subr.mxu0 0.0
        %676 = vmatpush1.msra.mxu0 0.0
        %677 = vmatprep.subr.mxu0 0.0
        %678 = vmatpush1.msra.mxu0 0.0
        %679 = vmatprep.subr.mxu0 0.0
        %680 = vmatpush1.msra.mxu0 0.0
        %681 = vmatprep.subr.mxu0 0.0
        %682 = vmatpush1.msra.mxu0 0.0
        %683 = vmatprep.subr.mxu0 0.0
        %684 = vmatpush1.msra.mxu0 0.0
        %685 = vmatprep.subr.mxu0 0.0
        %686 = vmatpush1.msra.mxu0 %v435
        %687 = vmatprep.subr.mxu0 0.0
        %688 = vmatpush1.msra.mxu0 %v434
        %689 = vmatprep.subr.mxu0 0.0
        %690 = vmatpush2.msra.mxu0 0.0
        %691 = vmatprep.subr.mxu0 0.0
        %692 = vmatpush2.msra.mxu0 0.0
        %693 = vmatprep.subr.mxu0 0.0
        %694 = vmatpush2.msra.mxu0 0.0
        %695 = vmatprep.subr.mxu0 0.0
        %696 = vmatpush2.msra.mxu0 0.0
        %697 = vmatprep.subr.mxu0 0.0
        %698 = vmatpush2.msra.mxu0 0.0
        %699 = vmatprep.subr.mxu0 0.0
        %700 = vmatpush2.msra.mxu0 0.0
        %701 = vmatprep.subr.mxu0 0.0
        %702 = vmatpush2.msra.mxu0 0.0
        %703 = vmatprep.subr.mxu0 0.0
        %704 = vmatpush2.msra.mxu0 0.0
        %705 = vmatprep.subr.mxu0 0.0
        %706 = vmatpush2.msra.mxu0 0.0
        %707 = vmatprep.subr.mxu0 0.0
        %708 = vmatpush2.msra.mxu0 0.0
        %709 = vmatprep.subr.mxu0 0.0
        %710 = vmatpush2.msra.mxu0 0.0
        %711 = vmatprep.subr.mxu0 0.0
        %712 = vmatpush2.msra.mxu0 0.0
        %713 = vmatprep.subr.mxu0 0.0
        %714 = vmatpush2.msra.mxu0 0.0
        %715 = vmatprep.subr.mxu0 0.0
        %716 = vmatpush2.msra.mxu0 0.0
        %717 = vmatprep.subr.mxu0 0.0
        %718 = vmatpush2.msra.mxu0 0.0
        %719 = vmatprep.subr.mxu0 0.0
        %720 = vmatpush2.msra.mxu0 0.0
        %721 = vmatprep.mubr.f32.mxu0 0.0
        %722 = vmatmul.mubr.f32.gmra.mxu0 %v445
        %v723 = vpop.f32.mrf.mxu0
        %v724 = vadd.f32 %v654, %v723
        %v725 = vpop.f32.mrf.mxu0
        %726 = vdwg.mxu0
        %v727 = vmax.f32 %v724, 0.0
        %v728 = vld [vmem:[%s3] sm:$0xff]
        %v729 = vld [vmem:[%s3 + $0x8] sm:$0xff]
        %v730 = vld [vmem:[%s3 + $0x10] sm:$0xff]
        %v731 = vld [vmem:[%s3 + $0x18] sm:$0xff]
        %v732 = vld [vmem:[%s3 + $0x20] sm:$0xff]
        %v733 = vld [vmem:[%s3 + $0x28] sm:$0xff]
        %v734 = vld [vmem:[%s3 + $0x30] sm:$0xff]
        %v735 = vld [vmem:[%s3 + $0x38] sm:$0xff]
        %v736 = vld [vmem:[%s3 + $0x40] sm:$0xff]
        %v737 = vld [vmem:[%s3 + $0x48] sm:$0xff]
        %v738 = vld [vmem:[%s3 + $0x50] sm:$0xff]
        %v739 = vld [vmem:[%s3 + $0x58] sm:$0xff]
        %v740 = vld [vmem:[%s3 + $0x60] sm:$0xff]
        %v741 = vld [vmem:[%s3 + $0x68] sm:$0xff]
        %v742 = vld [vmem:[%s3 + $0x70] sm:$0xff]
        %v743 = vld [vmem:[%s3 + $0x78] sm:$0xff]
        %v744 = vld [vmem:[%s4] sm:$0x1]
        %v746 = vlaneseq
        %v747 = vshrl.u32 %v746, 7
        %v748 = vsub.s32 0, %v747
        %v749 = vrot.slane %v744, %v748
        %751 = vmatprep.subr.mxu0 0.0
        %752 = vmatpush1.msra.mxu0 %v743
        %753 = vmatprep.subr.mxu0 0.0
        %754 = vmatpush1.msra.mxu0 %v742
        %755 = vmatprep.subr.mxu0 0.0
        %756 = vmatpush1.msra.mxu0 %v741
        %757 = vmatprep.subr.mxu0 0.0
        %758 = vmatpush1.msra.mxu0 %v740
        %759 = vmatprep.subr.mxu0 0.0
        %760 = vmatpush1.msra.mxu0 %v739
        %761 = vmatprep.subr.mxu0 0.0
        %762 = vmatpush1.msra.mxu0 %v738
        %763 = vmatprep.subr.mxu0 0.0
        %764 = vmatpush1.msra.mxu0 %v737
        %765 = vmatprep.subr.mxu0 0.0
        %766 = vmatpush1.msra.mxu0 %v736
        %767 = vmatprep.subr.mxu0 0.0
        %768 = vmatpush1.msra.mxu0 %v735
        %769 = vmatprep.subr.mxu0 0.0
        %770 = vmatpush1.msra.mxu0 %v734
        %771 = vmatprep.subr.mxu0 0.0
        %772 = vmatpush1.msra.mxu0 %v733
        %773 = vmatprep.subr.mxu0 0.0
        %774 = vmatpush1.msra.mxu0 %v732
        %775 = vmatprep.subr.mxu0 0.0
        %776 = vmatpush1.msra.mxu0 %v731
        %777 = vmatprep.subr.mxu0 0.0
        %778 = vmatpush1.msra.mxu0 %v730
        %779 = vmatprep.subr.mxu0 0.0
        %780 = vmatpush1.msra.mxu0 %v729
        %781 = vmatprep.subr.mxu0 0.0
        %782 = vmatpush1.msra.mxu0 %v728
        %783 = vmatprep.subr.mxu0 0.0
        %784 = vmatpush2.msra.mxu0 0.0
        %785 = vmatprep.subr.mxu0 0.0
        %786 = vmatpush2.msra.mxu0 0.0
        %787 = vmatprep.subr.mxu0 0.0
        %788 = vmatpush2.msra.mxu0 0.0
        %789 = vmatprep.subr.mxu0 0.0
        %790 = vmatpush2.msra.mxu0 0.0
        %791 = vmatprep.subr.mxu0 0.0
        %792 = vmatpush2.msra.mxu0 0.0
        %793 = vmatprep.subr.mxu0 0.0
        %794 = vmatpush2.msra.mxu0 0.0
        %795 = vmatprep.subr.mxu0 0.0
        %796 = vmatpush2.msra.mxu0 0.0
        %797 = vmatprep.subr.mxu0 0.0
        %798 = vmatpush2.msra.mxu0 0.0
        %799 = vmatprep.subr.mxu0 0.0
        %800 = vmatpush2.msra.mxu0 0.0
        %801 = vmatprep.subr.mxu0 0.0
        %802 = vmatpush2.msra.mxu0 0.0
        %803 = vmatprep.subr.mxu0 0.0
        %804 = vmatpush2.msra.mxu0 0.0
        %805 = vmatprep.subr.mxu0 0.0
        %806 = vmatpush2.msra.mxu0 0.0
        %807 = vmatprep.subr.mxu0 0.0
        %808 = vmatpush2.msra.mxu0 0.0
        %809 = vmatprep.subr.mxu0 0.0
        %810 = vmatpush2.msra.mxu0 0.0
        %811 = vmatprep.subr.mxu0 0.0
        %812 = vmatpush2.msra.mxu0 0.0
        %813 = vmatprep.subr.mxu0 0.0
        %814 = vmatpush2.msra.mxu0 0.0
        %815 = vmatprep.mubr.f32.mxu0 0.0
        %816 = vmatmul.mubr.f32.gmra.mxu0 %v727
        %v817 = vpop.f32.mrf.mxu0
        %v818 = vadd.f32 %v749, %v817
        %v819 = vpop.f32.mrf.mxu0
        %820 = vdwg.mxu0
        %v821 = vmax.f32 %v818, 0.0
        %v822 = vld [vmem:[%s5] sm:$0xff]
        %v823 = vld [vmem:[%s5 + $0x8] sm:$0xff]
        %v824 = vld [vmem:[%s5 + $0x10] sm:$0xff]
        %v825 = vld [vmem:[%s5 + $0x18] sm:$0xff]
        %v826 = vld [vmem:[%s5 + $0x20] sm:$0xff]
        %v827 = vld [vmem:[%s5 + $0x28] sm:$0xff]
        %v828 = vld [vmem:[%s5 + $0x30] sm:$0xff]
        %v829 = vld [vmem:[%s5 + $0x38] sm:$0xff]
        %v830 = vld [vmem:[%s5 + $0x40] sm:$0xff]
        %v831 = vld [vmem:[%s5 + $0x48] sm:$0xff]
        %v832 = vld [vmem:[%s5 + $0x50] sm:$0xff]
        %v833 = vld [vmem:[%s5 + $0x58] sm:$0xff]
        %v834 = vld [vmem:[%s5 + $0x60] sm:$0xff]
        %v835 = vld [vmem:[%s5 + $0x68] sm:$0xff]
        %v836 = vld [vmem:[%s5 + $0x70] sm:$0xff]
        %v837 = vld [vmem:[%s5 + $0x78] sm:$0xff]
        %v838 = vld [vmem:[%s6] sm:$0x1]
        %v840 = vlaneseq
        %v841 = vshrl.u32 %v840, 7
        %v842 = vsub.s32 0, %v841
        %v843 = vrot.slane %v838, %v842
        %845 = vmatprep.subr.mxu0 0.0
        %846 = vmatpush1.msra.mxu0 %v837
        %847 = vmatprep.subr.mxu0 0.0
        %848 = vmatpush1.msra.mxu0 %v836
        %849 = vmatprep.subr.mxu0 0.0
        %850 = vmatpush1.msra.mxu0 %v835
        %851 = vmatprep.subr.mxu0 0.0
        %852 = vmatpush1.msra.mxu0 %v834
        %853 = vmatprep.subr.mxu0 0.0
        %854 = vmatpush1.msra.mxu0 %v833
        %855 = vmatprep.subr.mxu0 0.0
        %856 = vmatpush1.msra.mxu0 %v832
        %857 = vmatprep.subr.mxu0 0.0
        %858 = vmatpush1.msra.mxu0 %v831
        %859 = vmatprep.subr.mxu0 0.0
        %860 = vmatpush1.msra.mxu0 %v830
        %861 = vmatprep.subr.mxu0 0.0
        %862 = vmatpush1.msra.mxu0 %v829
        %863 = vmatprep.subr.mxu0 0.0
        %864 = vmatpush1.msra.mxu0 %v828
        %865 = vmatprep.subr.mxu0 0.0
        %866 = vmatpush1.msra.mxu0 %v827
        %867 = vmatprep.subr.mxu0 0.0
        %868 = vmatpush1.msra.mxu0 %v826
        %869 = vmatprep.subr.mxu0 0.0
        %870 = vmatpush1.msra.mxu0 %v825
        %871 = vmatprep.subr.mxu0 0.0
        %872 = vmatpush1.msra.mxu0 %v824
        %873 = vmatprep.subr.mxu0 0.0
        %874 = vmatpush1.msra.mxu0 %v823
        %875 = vmatprep.subr.mxu0 0.0
        %876 = vmatpush1.msra.mxu0 %v822
        %877 = vmatprep.subr.mxu0 0.0
        %878 = vmatpush2.msra.mxu0 0.0
        %879 = vmatprep.subr.mxu0 0.0
        %880 = vmatpush2.msra.mxu0 0.0
        %881 = vmatprep.subr.mxu0 0.0
        %882 = vmatpush2.msra.mxu0 0.0
        %883 = vmatprep.subr.mxu0 0.0
        %884 = vmatpush2.msra.mxu0 0.0
        %885 = vmatprep.subr.mxu0 0.0
        %886 = vmatpush2.msra.mxu0 0.0
        %887 = vmatprep.subr.mxu0 0.0
        %888 = vmatpush2.msra.mxu0 0.0
        %889 = vmatprep.subr.mxu0 0.0
        %890 = vmatpush2.msra.mxu0 0.0
        %891 = vmatprep.subr.mxu0 0.0
        %892 = vmatpush2.msra.mxu0 0.0
        %893 = vmatprep.subr.mxu0 0.0
        %894 = vmatpush2.msra.mxu0 0.0
        %895 = vmatprep.subr.mxu0 0.0
        %896 = vmatpush2.msra.mxu0 0.0
        %897 = vmatprep.subr.mxu0 0.0
        %898 = vmatpush2.msra.mxu0 0.0
        %899 = vmatprep.subr.mxu0 0.0
        %900 = vmatpush2.msra.mxu0 0.0
        %901 = vmatprep.subr.mxu0 0.0
        %902 = vmatpush2.msra.mxu0 0.0
        %903 = vmatprep.subr.mxu0 0.0
        %904 = vmatpush2.msra.mxu0 0.0
        %905 = vmatprep.subr.mxu0 0.0
        %906 = vmatpush2.msra.mxu0 0.0
        %907 = vmatprep.subr.mxu0 0.0
        %908 = vmatpush2.msra.mxu0 0.0
        %909 = vmatprep.mubr.f32.mxu0 0.0
        %910 = vmatmul.mubr.f32.gmra.mxu0 %v821
        %v911 = vpop.f32.mrf.mxu0
        %v912 = vadd.f32 %v843, %v911
        %v913 = vpop.f32.mrf.mxu0
        %914 = vdwg.mxu0
        %v915 = vmax.f32 %v912, 0.0
        %v916 = vld [vmem:[%s7] sm:$0xff]
        %v917 = vld [vmem:[%s7 + $0x8] sm:$0xff]
        %v918 = vld [vmem:[%s7 + $0x10] sm:$0xff]
        %v919 = vld [vmem:[%s7 + $0x18] sm:$0xff]
        %v920 = vld [vmem:[%s7 + $0x20] sm:$0xff]
        %v921 = vld [vmem:[%s7 + $0x28] sm:$0xff]
        %v922 = vld [vmem:[%s7 + $0x30] sm:$0xff]
        %v923 = vld [vmem:[%s7 + $0x38] sm:$0xff]
        %v924 = vld [vmem:[%s7 + $0x40] sm:$0xff]
        %v925 = vld [vmem:[%s7 + $0x48] sm:$0xff]
        %v926 = vld [vmem:[%s7 + $0x50] sm:$0xff]
        %v927 = vld [vmem:[%s7 + $0x58] sm:$0xff]
        %v928 = vld [vmem:[%s7 + $0x60] sm:$0xff]
        %v929 = vld [vmem:[%s7 + $0x68] sm:$0xff]
        %v930 = vld [vmem:[%s7 + $0x70] sm:$0xff]
        %v931 = vld [vmem:[%s7 + $0x78] sm:$0xff]
        %v932 = vld [vmem:[%s7 + $0x80] sm:$0xff]
        %v933 = vld [vmem:[%s7 + $0x88] sm:$0xff]
        %v934 = vld [vmem:[%s7 + $0x90] sm:$0xff]
        %v935 = vld [vmem:[%s7 + $0x98] sm:$0xff]
        %v936 = vld [vmem:[%s7 + $0xa0] sm:$0xff]
        %v937 = vld [vmem:[%s7 + $0xa8] sm:$0xff]
        %v938 = vld [vmem:[%s7 + $0xb0] sm:$0xff]
        %v939 = vld [vmem:[%s7 + $0xb8] sm:$0xff]
        %v940 = vld [vmem:[%s7 + $0xc0] sm:$0xff]
        %v941 = vld [vmem:[%s7 + $0xc8] sm:$0xff]
        %v942 = vld [vmem:[%s7 + $0xd0] sm:$0xff]
        %v943 = vld [vmem:[%s7 + $0xd8] sm:$0xff]
        %v944 = vld [vmem:[%s7 + $0xe0] sm:$0xff]
        %v945 = vld [vmem:[%s7 + $0xe8] sm:$0xff]
        %v946 = vld [vmem:[%s7 + $0xf0] sm:$0xff]
        %v947 = vld [vmem:[%s7 + $0xf8] sm:$0xff]
        %v948 = vld [vmem:[%s7 + $0x100] sm:$0xff]
        %v949 = vld [vmem:[%s7 + $0x108] sm:$0xff]
        %v950 = vld [vmem:[%s7 + $0x110] sm:$0xff]
        %v951 = vld [vmem:[%s7 + $0x118] sm:$0xff]
        %v952 = vld [vmem:[%s7 + $0x120] sm:$0xff]
        %v953 = vld [vmem:[%s7 + $0x128] sm:$0xff]
        %v954 = vld [vmem:[%s7 + $0x130] sm:$0xff]
        %v955 = vld [vmem:[%s7 + $0x138] sm:$0xff]
        %v956 = vld [vmem:[%s7 + $0x140] sm:$0xff]
        %v957 = vld [vmem:[%s7 + $0x148] sm:$0xff]
        %v958 = vld [vmem:[%s7 + $0x150] sm:$0xff]
        %v959 = vld [vmem:[%s7 + $0x158] sm:$0xff]
        %v960 = vld [vmem:[%s7 + $0x160] sm:$0xff]
        %v961 = vld [vmem:[%s7 + $0x168] sm:$0xff]
        %v962 = vld [vmem:[%s7 + $0x170] sm:$0xff]
        %v963 = vld [vmem:[%s7 + $0x178] sm:$0xff]
        %v964 = vld [vmem:[%s7 + $0x180] sm:$0xff]
        %v965 = vld [vmem:[%s7 + $0x188] sm:$0xff]
        %v966 = vld [vmem:[%s7 + $0x190] sm:$0xff]
        %v967 = vld [vmem:[%s7 + $0x198] sm:$0xff]
        %v968 = vld [vmem:[%s7 + $0x1a0] sm:$0xff]
        %v969 = vld [vmem:[%s7 + $0x1a8] sm:$0xff]
        %v970 = vld [vmem:[%s7 + $0x1b0] sm:$0xff]
        %v971 = vld [vmem:[%s7 + $0x1b8] sm:$0xff]
        %v972 = vld [vmem:[%s7 + $0x1c0] sm:$0xff]
        %v973 = vld [vmem:[%s7 + $0x1c8] sm:$0xff]
        %v974 = vld [vmem:[%s7 + $0x1d0] sm:$0xff]
        %v975 = vld [vmem:[%s7 + $0x1d8] sm:$0xff]
        %v976 = vld [vmem:[%s7 + $0x1e0] sm:$0xff]
        %v977 = vld [vmem:[%s7 + $0x1e8] sm:$0xff]
        %v978 = vld [vmem:[%s7 + $0x1f0] sm:$0xff]
        %v979 = vld [vmem:[%s7 + $0x1f8] sm:$0xff]
        %v980 = vld [vmem:[%s7 + $0x200] sm:$0xff]
        %v981 = vld [vmem:[%s7 + $0x208] sm:$0xff]
        %v982 = vld [vmem:[%s7 + $0x210] sm:$0xff]
        %v983 = vld [vmem:[%s7 + $0x218] sm:$0xff]
        %v984 = vld [vmem:[%s7 + $0x220] sm:$0xff]
        %v985 = vld [vmem:[%s7 + $0x228] sm:$0xff]
        %v986 = vld [vmem:[%s7 + $0x230] sm:$0xff]
        %v987 = vld [vmem:[%s7 + $0x238] sm:$0xff]
        %v988 = vld [vmem:[%s7 + $0x240] sm:$0xff]
        %v989 = vld [vmem:[%s7 + $0x248] sm:$0xff]
        %v990 = vld [vmem:[%s7 + $0x250] sm:$0xff]
        %v991 = vld [vmem:[%s7 + $0x258] sm:$0xff]
        %v992 = vld [vmem:[%s7 + $0x260] sm:$0xff]
        %v993 = vld [vmem:[%s7 + $0x268] sm:$0xff]
        %v994 = vld [vmem:[%s7 + $0x270] sm:$0xff]
        %v995 = vld [vmem:[%s7 + $0x278] sm:$0xff]
        %v996 = vld [vmem:[%s7 + $0x280] sm:$0xff]
        %v997 = vld [vmem:[%s7 + $0x288] sm:$0xff]
        %v998 = vld [vmem:[%s7 + $0x290] sm:$0xff]
        %v999 = vld [vmem:[%s7 + $0x298] sm:$0xff]
        %v1000 = vld [vmem:[%s7 + $0x2a0] sm:$0xff]
        %v1001 = vld [vmem:[%s7 + $0x2a8] sm:$0xff]
        %v1002 = vld [vmem:[%s7 + $0x2b0] sm:$0xff]
        %v1003 = vld [vmem:[%s7 + $0x2b8] sm:$0xff]
        %v1004 = vld [vmem:[%s7 + $0x2c0] sm:$0xff]
        %v1005 = vld [vmem:[%s7 + $0x2c8] sm:$0xff]
        %v1006 = vld [vmem:[%s7 + $0x2d0] sm:$0xff]
        %v1007 = vld [vmem:[%s7 + $0x2d8] sm:$0xff]
        %v1008 = vld [vmem:[%s7 + $0x2e0] sm:$0xff]
        %v1009 = vld [vmem:[%s7 + $0x2e8] sm:$0xff]
        %v1010 = vld [vmem:[%s7 + $0x2f0] sm:$0xff]
        %v1011 = vld [vmem:[%s7 + $0x2f8] sm:$0xff]
        %v1012 = vld [vmem:[%s7 + $0x300] sm:$0xff]
        %v1013 = vld [vmem:[%s7 + $0x308] sm:$0xff]
        %v1014 = vld [vmem:[%s7 + $0x310] sm:$0xff]
        %v1015 = vld [vmem:[%s7 + $0x318] sm:$0xff]
        %v1016 = vld [vmem:[%s7 + $0x320] sm:$0xff]
        %v1017 = vld [vmem:[%s7 + $0x328] sm:$0xff]
        %v1018 = vld [vmem:[%s7 + $0x330] sm:$0xff]
        %v1019 = vld [vmem:[%s7 + $0x338] sm:$0xff]
        %v1020 = vld [vmem:[%s7 + $0x340] sm:$0xff]
        %v1021 = vld [vmem:[%s7 + $0x348] sm:$0xff]
        %v1022 = vld [vmem:[%s7 + $0x350] sm:$0xff]
        %v1023 = vld [vmem:[%s7 + $0x358] sm:$0xff]
        %v1024 = vld [vmem:[%s7 + $0x360] sm:$0xff]
        %v1025 = vld [vmem:[%s7 + $0x368] sm:$0xff]
        %v1026 = vld [vmem:[%s7 + $0x370] sm:$0xff]
        %v1027 = vld [vmem:[%s7 + $0x378] sm:$0xff]
        %v1028 = vld [vmem:[%s8] sm:$0x7f]
        %v1030 = vlaneseq
        %v1031 = vshrl.u32 %v1030, 7
        %v1032 = vsub.s32 0, %v1031
        %v1033 = vrot.slane %v1028, %v1032
        %v1034 = vlaneseq
        %v1035 = vshrl.u32 %v1034, 7
        %v1036 = vsub.s32 1, %v1035
        %v1037 = vrot.slane %v1028, %v1036
        %v1038 = vlaneseq
        %v1039 = vshrl.u32 %v1038, 7
        %v1040 = vsub.s32 2, %v1039
        %v1041 = vrot.slane %v1028, %v1040
        %v1042 = vlaneseq
        %v1043 = vshrl.u32 %v1042, 7
        %v1044 = vsub.s32 3, %v1043
        %v1045 = vrot.slane %v1028, %v1044
        %v1046 = vlaneseq
        %v1047 = vshrl.u32 %v1046, 7
        %v1048 = vsub.s32 4, %v1047
        %v1049 = vrot.slane %v1028, %v1048
        %v1050 = vlaneseq
        %v1051 = vshrl.u32 %v1050, 7
        %v1052 = vsub.s32 5, %v1051
        %v1053 = vrot.slane %v1028, %v1052
        %v1054 = vlaneseq
        %v1055 = vshrl.u32 %v1054, 7
        %v1056 = vsub.s32 6, %v1055
        %v1057 = vrot.slane %v1028, %v1056
        %1065 = vmatprep.subr.mxu0 %v1022
        %1066 = vmatpush1.msra.mxu0 %v1021
        %1067 = vmatprep.subr.mxu0 %v1015
        %1068 = vmatpush1.msra.mxu0 %v1014
        %1069 = vmatprep.subr.mxu0 %v1008
        %1070 = vmatpush1.msra.mxu0 %v1007
        %1071 = vmatprep.subr.mxu0 %v1001
        %1072 = vmatpush1.msra.mxu0 %v1000
        %1073 = vmatprep.subr.mxu0 %v994
        %1074 = vmatpush1.msra.mxu0 %v993
        %1075 = vmatprep.subr.mxu0 %v987
        %1076 = vmatpush1.msra.mxu0 %v986
        %1077 = vmatprep.subr.mxu0 %v980
        %1078 = vmatpush1.msra.mxu0 %v979
        %1079 = vmatprep.subr.mxu0 %v973
        %1080 = vmatpush1.msra.mxu0 %v972
        %1081 = vmatprep.subr.mxu0 %v966
        %1082 = vmatpush1.msra.mxu0 %v965
        %1083 = vmatprep.subr.mxu0 %v959
        %1084 = vmatpush1.msra.mxu0 %v958
        %1085 = vmatprep.subr.mxu0 %v952
        %1086 = vmatpush1.msra.mxu0 %v951
        %1087 = vmatprep.subr.mxu0 %v945
        %1088 = vmatpush1.msra.mxu0 %v944
        %1089 = vmatprep.subr.mxu0 %v938
        %1090 = vmatpush1.msra.mxu0 %v937
        %1091 = vmatprep.subr.mxu0 %v931
        %1092 = vmatpush1.msra.mxu0 %v930
        %1093 = vmatprep.subr.mxu0 %v924
        %1094 = vmatpush1.msra.mxu0 %v923
        %1095 = vmatprep.subr.mxu0 %v917
        %1096 = vmatpush1.msra.mxu0 %v916
        %1097 = vmatprep.subr.mxu0 0.0
        %1098 = vmatpush2.msra.mxu0 0.0
        %1099 = vmatprep.subr.mxu0 0.0
        %1100 = vmatpush2.msra.mxu0 0.0
        %1101 = vmatprep.subr.mxu0 0.0
        %1102 = vmatpush2.msra.mxu0 0.0
        %1103 = vmatprep.subr.mxu0 0.0
        %1104 = vmatpush2.msra.mxu0 0.0
        %1105 = vmatprep.subr.mxu0 0.0
        %1106 = vmatpush2.msra.mxu0 0.0
        %1107 = vmatprep.subr.mxu0 0.0
        %1108 = vmatpush2.msra.mxu0 0.0
        %1109 = vmatprep.subr.mxu0 0.0
        %1110 = vmatpush2.msra.mxu0 0.0
        %1111 = vmatprep.subr.mxu0 0.0
        %1112 = vmatpush2.msra.mxu0 0.0
        %1113 = vmatprep.subr.mxu0 0.0
        %1114 = vmatpush2.msra.mxu0 0.0
        %1115 = vmatprep.subr.mxu0 0.0
        %1116 = vmatpush2.msra.mxu0 0.0
        %1117 = vmatprep.subr.mxu0 0.0
        %1118 = vmatpush2.msra.mxu0 0.0
        %1119 = vmatprep.subr.mxu0 0.0
        %1120 = vmatpush2.msra.mxu0 0.0
        %1121 = vmatprep.subr.mxu0 0.0
        %1122 = vmatpush2.msra.mxu0 0.0
        %1123 = vmatprep.subr.mxu0 0.0
        %1124 = vmatpush2.msra.mxu0 0.0
        %1125 = vmatprep.subr.mxu0 0.0
        %1126 = vmatpush2.msra.mxu0 0.0
        %1127 = vmatprep.subr.mxu0 0.0
        %1128 = vmatpush2.msra.mxu0 0.0
        %1129 = vmatprep.mubr.f32.mxu0 0.0
        %1130 = vmatmul.mubr.f32.gmra.mxu0 %v915
        %v1131 = vpop.f32.mrf.mxu0
        %v1132 = vadd.f32 %v1033, %v1131
        %v1133 = vpop.f32.mrf.mxu0
        %v1134 = vadd.f32 %v1037, %v1133
        %1135 = vdwg.mxu0
        %1136 = vmatprep.subr.mxu0 %v1024
        %1137 = vmatpush1.msra.mxu0 %v1023
        %1138 = vmatprep.subr.mxu0 %v1017
        %1139 = vmatpush1.msra.mxu0 %v1016
        %1140 = vmatprep.subr.mxu0 %v1010
        %1141 = vmatpush1.msra.mxu0 %v1009
        %1142 = vmatprep.subr.mxu0 %v1003
        %1143 = vmatpush1.msra.mxu0 %v1002
        %1144 = vmatprep.subr.mxu0 %v996
        %1145 = vmatpush1.msra.mxu0 %v995
        %1146 = vmatprep.subr.mxu0 %v989
        %1147 = vmatpush1.msra.mxu0 %v988
        %1148 = vmatprep.subr.mxu0 %v982
        %1149 = vmatpush1.msra.mxu0 %v981
        %1150 = vmatprep.subr.mxu0 %v975
        %1151 = vmatpush1.msra.mxu0 %v974
        %1152 = vmatprep.subr.mxu0 %v968
        %1153 = vmatpush1.msra.mxu0 %v967
        %1154 = vmatprep.subr.mxu0 %v961
        %1155 = vmatpush1.msra.mxu0 %v960
        %1156 = vmatprep.subr.mxu0 %v954
        %1157 = vmatpush1.msra.mxu0 %v953
        %1158 = vmatprep.subr.mxu0 %v947
        %1159 = vmatpush1.msra.mxu0 %v946
        %1160 = vmatprep.subr.mxu0 %v940
        %1161 = vmatpush1.msra.mxu0 %v939
        %1162 = vmatprep.subr.mxu0 %v933
        %1163 = vmatpush1.msra.mxu0 %v932
        %1164 = vmatprep.subr.mxu0 %v926
        %1165 = vmatpush1.msra.mxu0 %v925
        %1166 = vmatprep.subr.mxu0 %v919
        %1167 = vmatpush1.msra.mxu0 %v918
        %1168 = vmatprep.subr.mxu0 0.0
        %1169 = vmatpush2.msra.mxu0 0.0
        %1170 = vmatprep.subr.mxu0 0.0
        %1171 = vmatpush2.msra.mxu0 0.0
        %1172 = vmatprep.subr.mxu0 0.0
        %1173 = vmatpush2.msra.mxu0 0.0
        %1174 = vmatprep.subr.mxu0 0.0
        %1175 = vmatpush2.msra.mxu0 0.0
        %1176 = vmatprep.subr.mxu0 0.0
        %1177 = vmatpush2.msra.mxu0 0.0
        %1178 = vmatprep.subr.mxu0 0.0
        %1179 = vmatpush2.msra.mxu0 0.0
        %1180 = vmatprep.subr.mxu0 0.0
        %1181 = vmatpush2.msra.mxu0 0.0
        %1182 = vmatprep.subr.mxu0 0.0
        %1183 = vmatpush2.msra.mxu0 0.0
        %1184 = vmatprep.subr.mxu0 0.0
        %1185 = vmatpush2.msra.mxu0 0.0
        %1186 = vmatprep.subr.mxu0 0.0
        %1187 = vmatpush2.msra.mxu0 0.0
        %1188 = vmatprep.subr.mxu0 0.0
        %1189 = vmatpush2.msra.mxu0 0.0
        %1190 = vmatprep.subr.mxu0 0.0
        %1191 = vmatpush2.msra.mxu0 0.0
        %1192 = vmatprep.subr.mxu0 0.0
        %1193 = vmatpush2.msra.mxu0 0.0
        %1194 = vmatprep.subr.mxu0 0.0
        %1195 = vmatpush2.msra.mxu0 0.0
        %1196 = vmatprep.subr.mxu0 0.0
        %1197 = vmatpush2.msra.mxu0 0.0
        %1198 = vmatprep.subr.mxu0 0.0
        %1199 = vmatpush2.msra.mxu0 0.0
        %1200 = vmatprep.mubr.f32.mxu0 0.0
        %1201 = vmatmul.mubr.f32.gmra.mxu0 %v915
        %v1202 = vpop.f32.mrf.mxu0
        %v1203 = vadd.f32 %v1041, %v1202
        %v1204 = vpop.f32.mrf.mxu0
        %v1205 = vadd.f32 %v1045, %v1204
        %1206 = vdwg.mxu0
        %1207 = vmatprep.subr.mxu0 %v1026
        %1208 = vmatpush1.msra.mxu0 %v1025
        %1209 = vmatprep.subr.mxu0 %v1019
        %1210 = vmatpush1.msra.mxu0 %v1018
        %1211 = vmatprep.subr.mxu0 %v1012
        %1212 = vmatpush1.msra.mxu0 %v1011
        %1213 = vmatprep.subr.mxu0 %v1005
        %1214 = vmatpush1.msra.mxu0 %v1004
        %1215 = vmatprep.subr.mxu0 %v998
        %1216 = vmatpush1.msra.mxu0 %v997
        %1217 = vmatprep.subr.mxu0 %v991
        %1218 = vmatpush1.msra.mxu0 %v990
        %1219 = vmatprep.subr.mxu0 %v984
        %1220 = vmatpush1.msra.mxu0 %v983
        %1221 = vmatprep.subr.mxu0 %v977
        %1222 = vmatpush1.msra.mxu0 %v976
        %1223 = vmatprep.subr.mxu0 %v970
        %1224 = vmatpush1.msra.mxu0 %v969
        %1225 = vmatprep.subr.mxu0 %v963
        %1226 = vmatpush1.msra.mxu0 %v962
        %1227 = vmatprep.subr.mxu0 %v956
        %1228 = vmatpush1.msra.mxu0 %v955
        %1229 = vmatprep.subr.mxu0 %v949
        %1230 = vmatpush1.msra.mxu0 %v948
        %1231 = vmatprep.subr.mxu0 %v942
        %1232 = vmatpush1.msra.mxu0 %v941
        %1233 = vmatprep.subr.mxu0 %v935
        %1234 = vmatpush1.msra.mxu0 %v934
        %1235 = vmatprep.subr.mxu0 %v928
        %1236 = vmatpush1.msra.mxu0 %v927
        %1237 = vmatprep.subr.mxu0 %v921
        %1238 = vmatpush1.msra.mxu0 %v920
        %1239 = vmatprep.subr.mxu0 0.0
        %1240 = vmatpush2.msra.mxu0 0.0
        %1241 = vmatprep.subr.mxu0 0.0
        %1242 = vmatpush2.msra.mxu0 0.0
        %1243 = vmatprep.subr.mxu0 0.0
        %1244 = vmatpush2.msra.mxu0 0.0
        %1245 = vmatprep.subr.mxu0 0.0
        %1246 = vmatpush2.msra.mxu0 0.0
        %1247 = vmatprep.subr.mxu0 0.0
        %1248 = vmatpush2.msra.mxu0 0.0
        %1249 = vmatprep.subr.mxu0 0.0
        %1250 = vmatpush2.msra.mxu0 0.0
        %1251 = vmatprep.subr.mxu0 0.0
        %1252 = vmatpush2.msra.mxu0 0.0
        %1253 = vmatprep.subr.mxu0 0.0
        %1254 = vmatpush2.msra.mxu0 0.0
        %1255 = vmatprep.subr.mxu0 0.0
        %1256 = vmatpush2.msra.mxu0 0.0
        %1257 = vmatprep.subr.mxu0 0.0
        %1258 = vmatpush2.msra.mxu0 0.0
        %1259 = vmatprep.subr.mxu0 0.0
        %1260 = vmatpush2.msra.mxu0 0.0
        %1261 = vmatprep.subr.mxu0 0.0
        %1262 = vmatpush2.msra.mxu0 0.0
        %1263 = vmatprep.subr.mxu0 0.0
        %1264 = vmatpush2.msra.mxu0 0.0
        %1265 = vmatprep.subr.mxu0 0.0
        %1266 = vmatpush2.msra.mxu0 0.0
        %1267 = vmatprep.subr.mxu0 0.0
        %1268 = vmatpush2.msra.mxu0 0.0
        %1269 = vmatprep.subr.mxu0 0.0
        %1270 = vmatpush2.msra.mxu0 0.0
        %1271 = vmatprep.mubr.f32.mxu0 0.0
        %1272 = vmatmul.mubr.f32.gmra.mxu0 %v915
        %v1273 = vpop.f32.mrf.mxu0
        %v1274 = vadd.f32 %v1049, %v1273
        %v1275 = vpop.f32.mrf.mxu0
        %v1276 = vadd.f32 %v1053, %v1275
        %1277 = vdwg.mxu0
        %1278 = vmatprep.subr.mxu0 0.0
        %1279 = vmatpush1.msra.mxu0 %v1027
        %1280 = vmatprep.subr.mxu0 0.0
        %1281 = vmatpush1.msra.mxu0 %v1020
        %1282 = vmatprep.subr.mxu0 0.0
        %1283 = vmatpush1.msra.mxu0 %v1013
        %1284 = vmatprep.subr.mxu0 0.0
        %1285 = vmatpush1.msra.mxu0 %v1006
        %1286 = vmatprep.subr.mxu0 0.0
        %1287 = vmatpush1.msra.mxu0 %v999
        %1288 = vmatprep.subr.mxu0 0.0
        %1289 = vmatpush1.msra.mxu0 %v992
        %1290 = vmatprep.subr.mxu0 0.0
        %1291 = vmatpush1.msra.mxu0 %v985
        %1292 = vmatprep.subr.mxu0 0.0
        %1293 = vmatpush1.msra.mxu0 %v978
        %1294 = vmatprep.subr.mxu0 0.0
        %1295 = vmatpush1.msra.mxu0 %v971
        %1296 = vmatprep.subr.mxu0 0.0
        %1297 = vmatpush1.msra.mxu0 %v964
        %1298 = vmatprep.subr.mxu0 0.0
        %1299 = vmatpush1.msra.mxu0 %v957
        %1300 = vmatprep.subr.mxu0 0.0
        %1301 = vmatpush1.msra.mxu0 %v950
        %1302 = vmatprep.subr.mxu0 0.0
        %1303 = vmatpush1.msra.mxu0 %v943
        %1304 = vmatprep.subr.mxu0 0.0
        %1305 = vmatpush1.msra.mxu0 %v936
        %1306 = vmatprep.subr.mxu0 0.0
        %1307 = vmatpush1.msra.mxu0 %v929
        %1308 = vmatprep.subr.mxu0 0.0
        %1309 = vmatpush1.msra.mxu0 %v922
        %1310 = vmatprep.subr.mxu0 0.0
        %1311 = vmatpush2.msra.mxu0 0.0
        %1312 = vmatprep.subr.mxu0 0.0
        %1313 = vmatpush2.msra.mxu0 0.0
        %1314 = vmatprep.subr.mxu0 0.0
        %1315 = vmatpush2.msra.mxu0 0.0
        %1316 = vmatprep.subr.mxu0 0.0
        %1317 = vmatpush2.msra.mxu0 0.0
        %1318 = vmatprep.subr.mxu0 0.0
        %1319 = vmatpush2.msra.mxu0 0.0
        %1320 = vmatprep.subr.mxu0 0.0
        %1321 = vmatpush2.msra.mxu0 0.0
        %1322 = vmatprep.subr.mxu0 0.0
        %1323 = vmatpush2.msra.mxu0 0.0
        %1324 = vmatprep.subr.mxu0 0.0
        %1325 = vmatpush2.msra.mxu0 0.0
        %1326 = vmatprep.subr.mxu0 0.0
        %1327 = vmatpush2.msra.mxu0 0.0
        %1328 = vmatprep.subr.mxu0 0.0
        %1329 = vmatpush2.msra.mxu0 0.0
        %1330 = vmatprep.subr.mxu0 0.0
        %1331 = vmatpush2.msra.mxu0 0.0
        %1332 = vmatprep.subr.mxu0 0.0
        %1333 = vmatpush2.msra.mxu0 0.0
        %1334 = vmatprep.subr.mxu0 0.0
        %1335 = vmatpush2.msra.mxu0 0.0
        %1336 = vmatprep.subr.mxu0 0.0
        %1337 = vmatpush2.msra.mxu0 0.0
        %1338 = vmatprep.subr.mxu0 0.0
        %1339 = vmatpush2.msra.mxu0 0.0
        %1340 = vmatprep.subr.mxu0 0.0
        %1341 = vmatpush2.msra.mxu0 0.0
        %1342 = vmatprep.mubr.f32.mxu0 0.0
        %1343 = vmatmul.mubr.f32.gmra.mxu0 %v915
        %v1344 = vpop.f32.mrf.mxu0
        %v1345 = vadd.f32 %v1057, %v1344
        %v1346 = vpop.f32.mrf.mxu0
        %1347 = vdwg.mxu0
        %v1348 = vsub.f32 0.0, %v1132
        %v1349 = vsub.f32 0.0, %v1134
        %v1350 = vsub.f32 0.0, %v1203
        %v1351 = vsub.f32 0.0, %v1205
        %v1352 = vsub.f32 0.0, %v1274
        %v1353 = vsub.f32 0.0, %v1276
        %v1354 = vsub.f32 0.0, %v1345
        %v1355 = vmul.f32 %v1348, 1.442695
        %v1356 = vpow.pop %v1355
        %v1357 = vmul.f32 %v1349, 1.442695
        %v1358 = vpow.pop %v1357
        %v1359 = vmul.f32 %v1350, 1.442695
        %v1360 = vpow.pop %v1359
        %v1361 = vmul.f32 %v1351, 1.442695
        %v1362 = vpow.pop %v1361
        %v1363 = vmul.f32 %v1352, 1.442695
        %v1364 = vpow.pop %v1363
        %v1365 = vmul.f32 %v1353, 1.442695
        %v1366 = vpow.pop %v1365
        %v1367 = vmul.f32 %v1354, 1.442695
        %v1368 = vpow.pop %v1367
        %v1369 = vadd.f32 %v1356, 1.0
        %v1370 = vadd.f32 %v1358, 1.0
        %v1371 = vadd.f32 %v1360, 1.0
        %v1372 = vadd.f32 %v1362, 1.0
        %v1373 = vadd.f32 %v1364, 1.0
        %v1374 = vadd.f32 %v1366, 1.0
        %v1375 = vadd.f32 %v1368, 1.0
        %v1376 = vrcp.pop %v1369
        %v1377 = vrcp.pop %v1370
        %v1378 = vrcp.pop %v1371
        %v1379 = vrcp.pop %v1372
        %v1380 = vrcp.pop %v1373
        %v1381 = vrcp.pop %v1374
        %v1382 = vrcp.pop %v1375
        %v1383 = vmax.f32 %v1376, 0.0
        %v1384 = vmax.f32 %v1377, 0.0
        %v1385 = vmax.f32 %v1378, 0.0
        %v1386 = vmax.f32 %v1379, 0.0
        %v1387 = vmax.f32 %v1380, 0.0
        %v1388 = vmax.f32 %v1381, 0.0
        %v1389 = vmax.f32 %v1382, 0.0
        %v1390 = vmin.f32 %v1383, 1.0
        %v1391 = vmin.f32 %v1384, 1.0
        %v1392 = vmin.f32 %v1385, 1.0
        %v1393 = vmin.f32 %v1386, 1.0
        %v1394 = vmin.f32 %v1387, 1.0
        %v1395 = vmin.f32 %v1388, 1.0
        %v1396 = vmin.f32 %v1389, 1.0
        %1397 = vst [vmem:[%s325] sm:$0xff] %v1390
        %1398 = vst [vmem:[%s325 + $0x8] sm:$0xff] %v1391
        %1399 = vst [vmem:[%s325 + $0x10] sm:$0xff] %v1392
        %1400 = vst [vmem:[%s325 + $0x18] sm:$0xff] %v1393
        %1401 = vst [vmem:[%s325 + $0x20] sm:$0xff] %v1394
        %1402 = vst [vmem:[%s325 + $0x28] sm:$0xff] %v1395
        %1403 = vst.msk [vmem:[%s325 + $0x30] sm:$0xff] %vm443, %v1396
        %s1404 = sand.u32 %s225, 1
        %s1405 = scalar_lea.sflag [#allocation3], %s1404
        %s1406 = sand.u32 %s225, 1
        %s1407 = smul.addr %s1406, 56
        %s1408 = scalar_lea.vmem [#allocation2], %s1407
        // Predicated region
        $region57: #{tpu_custom_call.1} parent=55 // pred_check
          %p1409 = pneg %p235
        $region58: #{tpu_custom_call.1} parent=55 // pred_check_branch
          %1411 = sbr.rel (%p1409) target = $region60
        $region59: #{tpu_custom_call.1} parent=55 // pred_region
          %s1413 = ssub.s32 896, 896
          %1414 = vsyncadd %s1405, %s1413
          %s1415 = smul.addr %s23, 7
          %s1416 = smul.addr %s1415, 128
          %s1417 = scalar_lea.hbm %s9, %s1416
          %s1419 = sshll.u32 %s1408, 4
          %s1420 = int_to_ptr.vmem [resolvable:$true] %s1419
          %1422 = dma.vmem_to_hbm [thread:$0]  %s1420, 896, %s1417, %s1405
        $region60: #{tpu_custom_call.1} parent=55 // pred_fallthru
          _
      $region56: #{tpu_custom_call.1} parent=5 // pred_fallthru
        _
      %p1423 = scmp.le.s32.totalorder 2, %s18
      // Predicated region
      $region61: #{tpu_custom_call.1} parent=5 // pred_check
        %p1424 = pneg %p1423
      $region62: #{tpu_custom_call.1} parent=5 // pred_check_branch
        %1426 = sbr.rel (%p1424) target = $region64
      $region63: #{tpu_custom_call.1} parent=5 // pred_region
        %s1427 = ssub.s32 %s18, 2
        // Predicated region
        $region65: #{tpu_custom_call.1} parent=63 // pred_check
          %p1428 = pneg %p241
        $region66: #{tpu_custom_call.1} parent=63 // pred_check_branch
          %1430 = sbr.rel (%p1428) target = $region68
        $region67: #{tpu_custom_call.1} parent=63 // pred_region
          %s1431 = sand.u32 %s226, 1
          %s1432 = scalar_lea.sflag [#allocation3], %s1431
          %s1433 = sand.u32 %s226, 1
          %s1434 = smul.addr %s1433, 56
          %s1435 = scalar_lea.vmem [#allocation2], %s1434
          %1436 = dma.done %s1432, 896
        $region68: #{tpu_custom_call.1} parent=63 // pred_fallthru
          _
      $region64: #{tpu_custom_call.1} parent=5 // pred_fallthru
        _
    $region6: #{tpu_custom_call.1} parent=1 // loop_footer
      %s22 = sadd.s32 1, %s18
    $region7: #{tpu_custom_call.1} parent=1 // loop_footer_branch
      %17 = sbr.rel target = $region3
    $region8: #{tpu_custom_call.1} parent=1 // loop_exit
      _
    %1437 = vsyncpa [#allocation3], 1
    %s1438 = scalar_lea.sflag [#allocation3], 1
    %1439 = vsyncpa %s1438, 1

// kernel: tpu_custom_call.1
$region0: #{tpu_custom_call.1}
  #allocation0 [shape = 'u32[]', space=smem, size = 0x4, offset = 0x4, fixed_abs, tag = 'smem constant byte address 0x4 - core index']
  #allocation1 [shape = 'u32[144,128]{1,0:T(1,128)}', space=vmem, size = 0x12000, scoped, tag = 'internal scratch']
  %s0 = inlined_call_operand.vmem [shape: f32[16,784], index: 0, kind: input, shape index: {}]
  %s1 = inlined_call_operand.vmem [shape: f32[784,128], index: 1, kind: input, shape index: {}]
  %s2 = inlined_call_operand.vmem [shape: f32[1,128], index: 2, kind: input, shape index: {}]
  %s3 = inlined_call_operand.vmem [shape: f32[128,128], index: 3, kind: input, shape index: {}]
  %s4 = inlined_call_operand.vmem [shape: f32[1,128], index: 4, kind: input, shape index: {}]
  %s5 = inlined_call_operand.vmem [shape: f32[128,128], index: 5, kind: input, shape index: {}]
  %s6 = inlined_call_operand.vmem [shape: f32[1,128], index: 6, kind: input, shape index: {}]
  %s7 = inlined_call_operand.vmem [shape: f32[128,784], index: 7, kind: input, shape index: {}]
  %s8 = inlined_call_operand.vmem [shape: f32[1,784], index: 8, kind: input, shape index: {}]
  %s9 = inlined_call_operand.hbm [shape: f32[16,784], index: 9, kind: output, shape index: {}]
  %s10 = sld [smem:[#allocation0]]
  $region69: #{tpu_custom_call.1} parent=0
    _
  %s12 = ssub.s32 1, %s10
  %s13 = scalar_select 0, %s12, %s10
  $region1: #{tpu_custom_call.1} parent=0
    #allocation2 [shape = 'u8[57344]{0}', space=vmem, size = 0xe000, scoped, tag = 'output window, operand 0']
    #allocation3 [shape = 's32[2]{0}', space=sflag, size = 0x8, scoped, tag = 'scoped memory for tpu_custom_call.1']
    %14 = vsyncpa [#allocation3], 0
    %s15 = scalar_lea.sflag [#allocation3], 1
    %16 = vsyncpa %s15, 0
    loop: start=0, step=1, limit=4
    $region2: #{tpu_custom_call.1} parent=1 // loop_pre_header
      _
    $region3: #{tpu_custom_call.1} parent=1 // loop_header
      %s18 = sphi 0, %s22
      %p19 = scmp.ge.s32.totalorder %s18, 4
      %s28 = sphi 0, %s30
      %s31 = sphi 0, %s28
      %s32 = sphi 0, %s31
      %s48 = sphi 0, %s32
      %s52 = sphi 0, %s52
      %s54 = sphi 0, %s52
      %s55 = sphi 0, %s54
      %s69 = sphi 0, %s55
      %s73 = sphi 0, %s73
      %s75 = sphi 0, %s73
      %s76 = sphi 0, %s75
      %s90 = sphi 0, %s76
      %s94 = sphi 0, %s94
      %s96 = sphi 0, %s94
      %s97 = sphi 0, %s96
      %s111 = sphi 0, %s97
      %s115 = sphi 0, %s115
      %s117 = sphi 0, %s115
      %s118 = sphi 0, %s117
      %s132 = sphi 0, %s118
      %s136 = sphi 0, %s136
      %s138 = sphi 0, %s136
      %s139 = sphi 0, %s138
      %s153 = sphi 0, %s139
      %s157 = sphi 0, %s157
      %s159 = sphi 0, %s157
      %s160 = sphi 0, %s159
      %s174 = sphi 0, %s160
      %s178 = sphi 0, %s178
      %s180 = sphi 0, %s178
      %s181 = sphi 0, %s180
      %s195 = sphi 0, %s181
      %s199 = sphi 0, %s199
      %s201 = sphi 0, %s199
      %s202 = sphi 0, %s201
      %s216 = sphi 0, %s202
      %s222 = sphi 0, %s224
      %s225 = sphi 0, %s222
      %s226 = sphi 0, %s225
      %s242 = sphi 0, %s226
    $region4: #{tpu_custom_call.1} parent=1 // loop_header_branch
      %21 = sbr.rel (%p19) target = $region8
    $region5: #{tpu_custom_call.1} parent=1 // loop_body
      %s23 = ssub.s32 %s18, 1
      %s24 = ssub.s32 %s18, 2
      %s25 = sadd.s32 %s18, 1
      %s26 = ssub.s32 %s18, %s25
      %p27 = scmp.eq.s32.totalorder %s26, 0
      %s29 = sadd.s32 %s28, 1
      %s30 = scalar_select %p27, %s28, %s29
      %p33 = pneg %p27
      %p34 = scmp.eq.s32.totalorder %s18, 1
      %p35 = por %p33, %p34
      %p36 = scmp.ne.s32.totalorder %s28, %s31
      %p37 = scmp.eq.s32.totalorder %s18, 0
      %p38 = por %p36, %p37
      %p39 = scmp.ne.s32.totalorder %s28, %s31
      %p40 = scmp.eq.s32.totalorder %s23, 1
      %p41 = por %p39, %p40
      %p42 = scmp.ne.s32.totalorder %s31, %s32
      %p43 = scmp.eq.s32.totalorder %s23, 0
      %p44 = por %p42, %p43
      %p45 = scmp.ne.s32.totalorder %s31, %s32
      %p46 = scmp.eq.s32.totalorder %s24, 1
      %p47 = por %p45, %p46
      %p49 = scmp.ne.s32.totalorder %s32, %s48
      %p50 = scmp.eq.s32.totalorder %s24, 0
      %p51 = por %p49, %p50
      %s53 = sadd.s32 %s52, 1
      %p56 = scmp.eq.s32.totalorder %s18, 1
      %p57 = scmp.ne.s32.totalorder %s52, %s54
      %p58 = scmp.eq.s32.totalorder %s18, 0
      %p59 = por %p57, %p58
      %p60 = scmp.ne.s32.totalorder %s52, %s54
      %p61 = scmp.eq.s32.totalorder %s23, 1
      %p62 = por %p60, %p61
      %p63 = scmp.ne.s32.totalorder %s54, %s55
      %p64 = scmp.eq.s32.totalorder %s23, 0
      %p65 = por %p63, %p64
      %p66 = scmp.ne.s32.totalorder %s54, %s55
      %p67 = scmp.eq.s32.totalorder %s24, 1
      %p68 = por %p66, %p67
      %p70 = scmp.ne.s32.totalorder %s55, %s69
      %p71 = scmp.eq.s32.totalorder %s24, 0
      %p72 = por %p70, %p71
      %s74 = sadd.s32 %s73, 1
      %p77 = scmp.eq.s32.totalorder %s18, 1
      %p78 = scmp.ne.s32.totalorder %s73, %s75
      %p79 = scmp.eq.s32.totalorder %s18, 0
      %p80 = por %p78, %p79
      %p81 = scmp.ne.s32.totalorder %s73, %s75
      %p82 = scmp.eq.s32.totalorder %s23, 1
      %p83 = por %p81, %p82
      %p84 = scmp.ne.s32.totalorder %s75, %s76
      %p85 = scmp.eq.s32.totalorder %s23, 0
      %p86 = por %p84, %p85
      %p87 = scmp.ne.s32.totalorder %s75, %s76
      %p88 = scmp.eq.s32.totalorder %s24, 1
      %p89 = por %p87, %p88
      %p91 = scmp.ne.s32.totalorder %s76, %s90
      %p92 = scmp.eq.s32.totalorder %s24, 0
      %p93 = por %p91, %p92
      %s95 = sadd.s32 %s94, 1
      %p98 = scmp.eq.s32.totalorder %s18, 1
      %p99 = scmp.ne.s32.totalorder %s94, %s96
      %p100 = scmp.eq.s32.totalorder %s18, 0
      %p101 = por %p99, %p100
      %p102 = scmp.ne.s32.totalorder %s94, %s96
      %p103 = scmp.eq.s32.totalorder %s23, 1
      %p104 = por %p102, %p103
      %p105 = scmp.ne.s32.totalorder %s96, %s97
      %p106 = scmp.eq.s32.totalorder %s23, 0
      %p107 = por %p105, %p106
      %p108 = scmp.ne.s32.totalorder %s96, %s97
      %p109 = scmp.eq.s32.totalorder %s24, 1
      %p110 = por %p108, %p109
      %p112 = scmp.ne.s32.totalorder %s97, %s111
      %p113 = scmp.eq.s32.totalorder %s24, 0
      %p114 = por %p112, %p113
      %s116 = sadd.s32 %s115, 1
      %p119 = scmp.eq.s32.totalorder %s18, 1
      %p120 = scmp.ne.s32.totalorder %s115, %s117
      %p121 = scmp.eq.s32.totalorder %s18, 0
      %p122 = por %p120, %p121
      %p123 = scmp.ne.s32.totalorder %s115, %s117
      %p124 = scmp.eq.s32.totalorder %s23, 1
      %p125 = por %p123, %p124
      %p126 = scmp.ne.s32.totalorder %s117, %s118
      %p127 = scmp.eq.s32.totalorder %s23, 0
      %p128 = por %p126, %p127
      %p129 = scmp.ne.s32.totalorder %s117, %s118
      %p130 = scmp.eq.s32.totalorder %s24, 1
      %p131 = por %p129, %p130
      %p133 = scmp.ne.s32.totalorder %s118, %s132
      %p134 = scmp.eq.s32.totalorder %s24, 0
      %p135 = por %p133, %p134
      %s137 = sadd.s32 %s136, 1
      %p140 = scmp.eq.s32.totalorder %s18, 1
      %p141 = scmp.ne.s32.totalorder %s136, %s138
      %p142 = scmp.eq.s32.totalorder %s18, 0
      %p143 = por %p141, %p142
      %p144 = scmp.ne.s32.totalorder %s136, %s138
      %p145 = scmp.eq.s32.totalorder %s23, 1
      %p146 = por %p144, %p145
      %p147 = scmp.ne.s32.totalorder %s138, %s139
      %p148 = scmp.eq.s32.totalorder %s23, 0
      %p149 = por %p147, %p148
      %p150 = scmp.ne.s32.totalorder %s138, %s139
      %p151 = scmp.eq.s32.totalorder %s24, 1
      %p152 = por %p150, %p151
      %p154 = scmp.ne.s32.totalorder %s139, %s153
      %p155 = scmp.eq.s32.totalorder %s24, 0
      %p156 = por %p154, %p155
      %s158 = sadd.s32 %s157, 1
      %p161 = scmp.eq.s32.totalorder %s18, 1
      %p162 = scmp.ne.s32.totalorder %s157, %s159
      %p163 = scmp.eq.s32.totalorder %s18, 0
      %p164 = por %p162, %p163
      %p165 = scmp.ne.s32.totalorder %s157, %s159
      %p166 = scmp.eq.s32.totalorder %s23, 1
      %p167 = por %p165, %p166
      %p168 = scmp.ne.s32.totalorder %s159, %s160
      %p169 = scmp.eq.s32.totalorder %s23, 0
      %p170 = por %p168, %p169
      %p171 = scmp.ne.s32.totalorder %s159, %s160
      %p172 = scmp.eq.s32.totalorder %s24, 1
      %p173 = por %p171, %p172
      %p175 = scmp.ne.s32.totalorder %s160, %s174
      %p176 = scmp.eq.s32.totalorder %s24, 0
      %p177 = por %p175, %p176
      %s179 = sadd.s32 %s178, 1
      %p182 = scmp.eq.s32.totalorder %s18, 1
      %p183 = scmp.ne.s32.totalorder %s178, %s180
      %p184 = scmp.eq.s32.totalorder %s18, 0
      %p185 = por %p183, %p184
      %p186 = scmp.ne.s32.totalorder %s178, %s180
      %p187 = scmp.eq.s32.totalorder %s23, 1
      %p188 = por %p186, %p187
      %p189 = scmp.ne.s32.totalorder %s180, %s181
      %p190 = scmp.eq.s32.totalorder %s23, 0
      %p191 = por %p189, %p190
      %p192 = scmp.ne.s32.totalorder %s180, %s181
      %p193 = scmp.eq.s32.totalorder %s24, 1
      %p194 = por %p192, %p193
      %p196 = scmp.ne.s32.totalorder %s181, %s195
      %p197 = scmp.eq.s32.totalorder %s24, 0
      %p198 = por %p196, %p197
      %s200 = sadd.s32 %s199, 1
      %p203 = scmp.eq.s32.totalorder %s18, 1
      %p204 = scmp.ne.s32.totalorder %s199, %s201
      %p205 = scmp.eq.s32.totalorder %s18, 0
      %p206 = por %p204, %p205
      %p207 = scmp.ne.s32.totalorder %s199, %s201
      %p208 = scmp.eq.s32.totalorder %s23, 1
      %p209 = por %p207, %p208
      %p210 = scmp.ne.s32.totalorder %s201, %s202
      %p211 = scmp.eq.s32.totalorder %s23, 0
      %p212 = por %p210, %p211
      %p213 = scmp.ne.s32.totalorder %s201, %s202
      %p214 = scmp.eq.s32.totalorder %s24, 1
      %p215 = por %p213, %p214
      %p217 = scmp.ne.s32.totalorder %s202, %s216
      %p218 = scmp.eq.s32.totalorder %s24, 0
      %p219 = por %p217, %p218
      %s220 = ssub.s32 %s18, %s25
      %p221 = scmp.eq.s32.totalorder %s220, 0
      %s223 = sadd.s32 %s222, 1
      %s224 = scalar_select %p221, %s222, %s223
      %p227 = pneg %p221
      %p228 = scmp.eq.s32.totalorder %s18, 1
      %p229 = por %p227, %p228
      %p230 = scmp.ne.s32.totalorder %s222, %s225
      %p231 = scmp.eq.s32.totalorder %s18, 0
      %p232 = por %p230, %p231
      %p233 = scmp.ne.s32.totalorder %s222, %s225
      %p234 = scmp.eq.s32.totalorder %s23, 1
      %p235 = por %p233, %p234
      %p236 = scmp.ne.s32.totalorder %s225, %s226
      %p237 = scmp.eq.s32.totalorder %s23, 0
      %p238 = por %p236, %p237
      %p239 = scmp.ne.s32.totalorder %s225, %s226
      %p240 = scmp.eq.s32.totalorder %s24, 1
      %p241 = por %p239, %p240
      %p243 = scmp.ne.s32.totalorder %s226, %s242
      %p244 = scmp.eq.s32.totalorder %s24, 0
      %p245 = por %p243, %p244
      %p246 = scmp.le.s32.totalorder 1, %s18
      %p247 = scmp.lt.s32.totalorder %s18, 3
      %p248 = pnand %p246, %p247
      %p249 = pneg %p248
      // Predicated region
      $region9: #{tpu_custom_call.1} parent=5 // pred_check
        _
      $region10: #{tpu_custom_call.1} parent=5 // pred_check_branch
        %251 = sbr.rel (%p248) target = $region12
      $region11: #{tpu_custom_call.1} parent=5 // pred_region
        %s252 = ssub.s32 %s18, 1
        // Predicated region
        $region13: #{tpu_custom_call.1} parent=11 // pred_check
          %p253 = pneg %p65
        $region14: #{tpu_custom_call.1} parent=11 // pred_check_branch
          %255 = sbr.rel (%p253) target = $region16
        $region15: #{tpu_custom_call.1} parent=11 // pred_region
          _
        $region16: #{tpu_custom_call.1} parent=11 // pred_fallthru
          _
        // Predicated region
        $region17: #{tpu_custom_call.1} parent=11 // pred_check
          %p256 = pneg %p86
        $region18: #{tpu_custom_call.1} parent=11 // pred_check_branch
          %258 = sbr.rel (%p256) target = $region20
        $region19: #{tpu_custom_call.1} parent=11 // pred_region
          _
        $region20: #{tpu_custom_call.1} parent=11 // pred_fallthru
          _
        // Predicated region
        $region21: #{tpu_custom_call.1} parent=11 // pred_check
          %p259 = pneg %p107
        $region22: #{tpu_custom_call.1} parent=11 // pred_check_branch
          %261 = sbr.rel (%p259) target = $region24
        $region23: #{tpu_custom_call.1} parent=11 // pred_region
          _
        $region24: #{tpu_custom_call.1} parent=11 // pred_fallthru
          _
        // Predicated region
        $region25: #{tpu_custom_call.1} parent=11 // pred_check
          %p262 = pneg %p128
        $region26: #{tpu_custom_call.1} parent=11 // pred_check_branch
          %264 = sbr.rel (%p262) target = $region28
        $region27: #{tpu_custom_call.1} parent=11 // pred_region
          _
        $region28: #{tpu_custom_call.1} parent=11 // pred_fallthru
          _
        // Predicated region
        $region29: #{tpu_custom_call.1} parent=11 // pred_check
          %p265 = pneg %p149
        $region30: #{tpu_custom_call.1} parent=11 // pred_check_branch
          %267 = sbr.rel (%p265) target = $region32
        $region31: #{tpu_custom_call.1} parent=11 // pred_region
          _
        $region32: #{tpu_custom_call.1} parent=11 // pred_fallthru
          _
        // Predicated region
        $region33: #{tpu_custom_call.1} parent=11 // pred_check
          %p268 = pneg %p170
        $region34: #{tpu_custom_call.1} parent=11 // pred_check_branch
          %270 = sbr.rel (%p268) target = $region36
        $region35: #{tpu_custom_call.1} parent=11 // pred_region
          _
        $region36: #{tpu_custom_call.1} parent=11 // pred_fallthru
          _
        // Predicated region
        $region37: #{tpu_custom_call.1} parent=11 // pred_check
          %p271 = pneg %p191
        $region38: #{tpu_custom_call.1} parent=11 // pred_check_branch
          %273 = sbr.rel (%p271) target = $region40
        $region39: #{tpu_custom_call.1} parent=11 // pred_region
          _
        $region40: #{tpu_custom_call.1} parent=11 // pred_fallthru
          _
        // Predicated region
        $region41: #{tpu_custom_call.1} parent=11 // pred_check
          %p274 = pneg %p212
        $region42: #{tpu_custom_call.1} parent=11 // pred_check_branch
          %276 = sbr.rel (%p274) target = $region44
        $region43: #{tpu_custom_call.1} parent=11 // pred_region
          _
        $region44: #{tpu_custom_call.1} parent=11 // pred_fallthru
          _
      $region12: #{tpu_custom_call.1} parent=5 // pred_fallthru
        _
      %p277 = scmp.lt.s32.totalorder %s18, 2
      // Predicated region
      $region45: #{tpu_custom_call.1} parent=5 // pred_check
        %p278 = pneg %p277
      $region46: #{tpu_custom_call.1} parent=5 // pred_check_branch
        %280 = sbr.rel (%p278) target = $region48
      $region47: #{tpu_custom_call.1} parent=5 // pred_region
        // Predicated region
        $region49: #{tpu_custom_call.1} parent=47 // pred_check
          %p281 = pneg %p38
        $region50: #{tpu_custom_call.1} parent=47 // pred_check_branch
          %283 = sbr.rel (%p281) target = $region52
        $region51: #{tpu_custom_call.1} parent=47 // pred_region
          %p284 = scmp.lt.s32.totalorder %s18, 1
          %s285 = scalar_select %p284, %s18, 1
          %s286 = smul.addr %s285, 7
          %s287 = smul.addr %s286, 8
          %s288 = scalar_lea.vmem %s0, %s287
        $region52: #{tpu_custom_call.1} parent=47 // pred_fallthru
          _
      $region48: #{tpu_custom_call.1} parent=5 // pred_fallthru
        _
      %p289 = scmp.le.s32.totalorder 1, %s18
      %p290 = scmp.lt.s32.totalorder %s18, 3
      %p291 = pnand %p289, %p290
      %p292 = pneg %p291
      // Predicated region
      $region53: #{tpu_custom_call.1} parent=5 // pred_check
        _
      $region54: #{tpu_custom_call.1} parent=5 // pred_check_branch
        %294 = sbr.rel (%p291) target = $region56
      $region55: #{tpu_custom_call.1} parent=5 // pred_region
        %s295 = ssub.s32 %s18, 1
        %p296 = scmp.lt.s32.totalorder %s23, 1
        %s297 = scalar_select %p296, %s23, 1
        %s298 = smul.addr %s297, 7
        %s299 = smul.addr %s298, 8
        %s300 = scalar_lea.vmem %s0, %s299
        %p301 = pneg %p44
        %p302 = pneg %p41
        %p303 = pneg %p65
        %p304 = pneg %p62
        %p305 = pneg %p86
        %p306 = pneg %p83
        %p307 = pneg %p107
        %p308 = pneg %p104
        %p309 = pneg %p128
        %p310 = pneg %p125
        %p311 = pneg %p149
        %p312 = pneg %p146
        %p313 = pneg %p170
        %p314 = pneg %p167
        %p315 = pneg %p191
        %p316 = pneg %p188
        %p317 = pneg %p212
        %p318 = pneg %p209
        %p319 = pneg %p238
        %p320 = pneg %p235
        %s321 = sand.u32 %s225, 1
        %s322 = scalar_lea.sflag [#allocation3], %s321
        %s323 = sand.u32 %s225, 1
        %s324 = smul.addr %s323, 56
        %s325 = scalar_lea.vmem [#allocation2], %s324
        %p326 = scmp.lt.s32.totalorder %s23, 1
        %s327 = scalar_select %p326, %s23, 1
        %s328 = smul.addr %s327, 7
        %s329 = smul.addr %s328, 8
        %s330 = scalar_lea.vmem %s0, %s329
        %v331 = vld [vmem:[%s330] sm:$0xff]
        %v332 = vld [vmem:[%s330 + $0x8] sm:$0xff]
        %v333 = vld [vmem:[%s330 + $0x10] sm:$0xff]
        %v334 = vld [vmem:[%s330 + $0x18] sm:$0xff]
        %v335 = vld [vmem:[%s330 + $0x20] sm:$0xff]
        %v336 = vld [vmem:[%s330 + $0x28] sm:$0xff]
        %v337 = vld [vmem:[%s330 + $0x30] sm:$0xff]
        %v338 = vld [vmem:[%s1] sm:$0xff]
        %v339 = vld [vmem:[%s1 + $0x8] sm:$0xff]
        %v340 = vld [vmem:[%s1 + $0x10] sm:$0xff]
        %v341 = vld [vmem:[%s1 + $0x18] sm:$0xff]
        %v342 = vld [vmem:[%s1 + $0x20] sm:$0xff]
        %v343 = vld [vmem:[%s1 + $0x28] sm:$0xff]
        %v344 = vld [vmem:[%s1 + $0x30] sm:$0xff]
        %v345 = vld [vmem:[%s1 + $0x38] sm:$0xff]
        %v346 = vld [vmem:[%s1 + $0x40] sm:$0xff]
        %v347 = vld [vmem:[%s1 + $0x48] sm:$0xff]
        %v348 = vld [vmem:[%s1 + $0x50] sm:$0xff]
        %v349 = vld [vmem:[%s1 + $0x58] sm:$0xff]
        %v350 = vld [vmem:[%s1 + $0x60] sm:$0xff]
        %v351 = vld [vmem:[%s1 + $0x68] sm:$0xff]
        %v352 = vld [vmem:[%s1 + $0x70] sm:$0xff]
        %v353 = vld [vmem:[%s1 + $0x78] sm:$0xff]
        %v354 = vld [vmem:[%s1 + $0x80] sm:$0xff]
        %v355 = vld [vmem:[%s1 + $0x88] sm:$0xff]
        %v356 = vld [vmem:[%s1 + $0x90] sm:$0xff]
        %v357 = vld [vmem:[%s1 + $0x98] sm:$0xff]
        %v358 = vld [vmem:[%s1 + $0xa0] sm:$0xff]
        %v359 = vld [vmem:[%s1 + $0xa8] sm:$0xff]
        %v360 = vld [vmem:[%s1 + $0xb0] sm:$0xff]
        %v361 = vld [vmem:[%s1 + $0xb8] sm:$0xff]
        %v362 = vld [vmem:[%s1 + $0xc0] sm:$0xff]
        %v363 = vld [vmem:[%s1 + $0xc8] sm:$0xff]
        %v364 = vld [vmem:[%s1 + $0xd0] sm:$0xff]
        %v365 = vld [vmem:[%s1 + $0xd8] sm:$0xff]
        %v366 = vld [vmem:[%s1 + $0xe0] sm:$0xff]
        %v367 = vld [vmem:[%s1 + $0xe8] sm:$0xff]
        %v368 = vld [vmem:[%s1 + $0xf0] sm:$0xff]
        %v369 = vld [vmem:[%s1 + $0xf8] sm:$0xff]
        %v370 = vld [vmem:[%s1 + $0x100] sm:$0xff]
        %v371 = vld [vmem:[%s1 + $0x108] sm:$0xff]
        %v372 = vld [vmem:[%s1 + $0x110] sm:$0xff]
        %v373 = vld [vmem:[%s1 + $0x118] sm:$0xff]
        %v374 = vld [vmem:[%s1 + $0x120] sm:$0xff]
        %v375 = vld [vmem:[%s1 + $0x128] sm:$0xff]
        %v376 = vld [vmem:[%s1 + $0x130] sm:$0xff]
        %v377 = vld [vmem:[%s1 + $0x138] sm:$0xff]
        %v378 = vld [vmem:[%s1 + $0x140] sm:$0xff]
        %v379 = vld [vmem:[%s1 + $0x148] sm:$0xff]
        %v380 = vld [vmem:[%s1 + $0x150] sm:$0xff]
        %v381 = vld [vmem:[%s1 + $0x158] sm:$0xff]
        %v382 = vld [vmem:[%s1 + $0x160] sm:$0xff]
        %v383 = vld [vmem:[%s1 + $0x168] sm:$0xff]
        %v384 = vld [vmem:[%s1 + $0x170] sm:$0xff]
        %v385 = vld [vmem:[%s1 + $0x178] sm:$0xff]
        %v386 = vld [vmem:[%s1 + $0x180] sm:$0xff]
        %v387 = vld [vmem:[%s1 + $0x188] sm:$0xff]
        %v388 = vld [vmem:[%s1 + $0x190] sm:$0xff]
        %v389 = vld [vmem:[%s1 + $0x198] sm:$0xff]
        %v390 = vld [vmem:[%s1 + $0x1a0] sm:$0xff]
        %v391 = vld [vmem:[%s1 + $0x1a8] sm:$0xff]
        %v392 = vld [vmem:[%s1 + $0x1b0] sm:$0xff]
        %v393 = vld [vmem:[%s1 + $0x1b8] sm:$0xff]
        %v394 = vld [vmem:[%s1 + $0x1c0] sm:$0xff]
        %v395 = vld [vmem:[%s1 + $0x1c8] sm:$0xff]
        %v396 = vld [vmem:[%s1 + $0x1d0] sm:$0xff]
        %v397 = vld [vmem:[%s1 + $0x1d8] sm:$0xff]
        %v398 = vld [vmem:[%s1 + $0x1e0] sm:$0xff]
        %v399 = vld [vmem:[%s1 + $0x1e8] sm:$0xff]
        %v400 = vld [vmem:[%s1 + $0x1f0] sm:$0xff]
        %v401 = vld [vmem:[%s1 + $0x1f8] sm:$0xff]
        %v402 = vld [vmem:[%s1 + $0x200] sm:$0xff]
        %v403 = vld [vmem:[%s1 + $0x208] sm:$0xff]
        %v404 = vld [vmem:[%s1 + $0x210] sm:$0xff]
        %v405 = vld [vmem:[%s1 + $0x218] sm:$0xff]
        %v406 = vld [vmem:[%s1 + $0x220] sm:$0xff]
        %v407 = vld [vmem:[%s1 + $0x228] sm:$0xff]
        %v408 = vld [vmem:[%s1 + $0x230] sm:$0xff]
        %v409 = vld [vmem:[%s1 + $0x238] sm:$0xff]
        %v410 = vld [vmem:[%s1 + $0x240] sm:$0xff]
        %v411 = vld [vmem:[%s1 + $0x248] sm:$0xff]
        %v412 = vld [vmem:[%s1 + $0x250] sm:$0xff]
        %v413 = vld [vmem:[%s1 + $0x258] sm:$0xff]
        %v414 = vld [vmem:[%s1 + $0x260] sm:$0xff]
        %v415 = vld [vmem:[%s1 + $0x268] sm:$0xff]
        %v416 = vld [vmem:[%s1 + $0x270] sm:$0xff]
        %v417 = vld [vmem:[%s1 + $0x278] sm:$0xff]
        %v418 = vld [vmem:[%s1 + $0x280] sm:$0xff]
        %v419 = vld [vmem:[%s1 + $0x288] sm:$0xff]
        %v420 = vld [vmem:[%s1 + $0x290] sm:$0xff]
        %v421 = vld [vmem:[%s1 + $0x298] sm:$0xff]
        %v422 = vld [vmem:[%s1 + $0x2a0] sm:$0xff]
        %v423 = vld [vmem:[%s1 + $0x2a8] sm:$0xff]
        %v424 = vld [vmem:[%s1 + $0x2b0] sm:$0xff]
        %v425 = vld [vmem:[%s1 + $0x2b8] sm:$0xff]
        %v426 = vld [vmem:[%s1 + $0x2c0] sm:$0xff]
        %v427 = vld [vmem:[%s1 + $0x2c8] sm:$0xff]
        %v428 = vld [vmem:[%s1 + $0x2d0] sm:$0xff]
        %v429 = vld [vmem:[%s1 + $0x2d8] sm:$0xff]
        %v430 = vld [vmem:[%s1 + $0x2e0] sm:$0xff]
        %v431 = vld [vmem:[%s1 + $0x2e8] sm:$0xff]
        %v432 = vld [vmem:[%s1 + $0x2f0] sm:$0xff]
        %v433 = vld [vmem:[%s1 + $0x2f8] sm:$0xff]
        %v434 = vld [vmem:[%s1 + $0x300] sm:$0xff]
        %v435 = vld [vmem:[%s1 + $0x308] sm:$0xff]
        %v436 = vld [vmem:[%s2] sm:$0x1]
        %v438 = vlaneseq
        %v439 = vshrl.u32 %v438, 7
        %v440 = vsub.s32 0, %v439
        %v441 = vrot.slane %v436, %v440
        %vm443 = vcmask 130048
        %v445 = vsel %vm443, %v337, 0
        %447 = vmatprep.subr.mxu0 0.0
        %448 = vmatpush1.msra.mxu0 %v353
        %449 = vmatprep.subr.mxu0 0.0
        %450 = vmatpush1.msra.mxu0 %v352
        %451 = vmatprep.subr.mxu0 0.0
        %452 = vmatpush1.msra.mxu0 %v351
        %453 = vmatprep.subr.mxu0 0.0
        %454 = vmatpush1.msra.mxu0 %v350
        %455 = vmatprep.subr.mxu0 0.0
        %456 = vmatpush1.msra.mxu0 %v349
        %457 = vmatprep.subr.mxu0 0.0
        %458 = vmatpush1.msra.mxu0 %v348
        %459 = vmatprep.subr.mxu0 0.0
        %460 = vmatpush1.msra.mxu0 %v347
        %461 = vmatprep.subr.mxu0 0.0
        %462 = vmatpush1.msra.mxu0 %v346
        %463 = vmatprep.subr.mxu0 0.0
        %464 = vmatpush1.msra.mxu0 %v345
        %465 = vmatprep.subr.mxu0 0.0
        %466 = vmatpush1.msra.mxu0 %v344
        %467 = vmatprep.subr.mxu0 0.0
        %468 = vmatpush1.msra.mxu0 %v343
        %469 = vmatprep.subr.mxu0 0.0
        %470 = vmatpush1.msra.mxu0 %v342
        %471 = vmatprep.subr.mxu0 0.0
        %472 = vmatpush1.msra.mxu0 %v341
        %473 = vmatprep.subr.mxu0 0.0
        %474 = vmatpush1.msra.mxu0 %v340
        %475 = vmatprep.subr.mxu0 0.0
        %476 = vmatpush1.msra.mxu0 %v339
        %477 = vmatprep.subr.mxu0 0.0
        %478 = vmatpush1.msra.mxu0 %v338
        %479 = vmatprep.subr.mxu0 0.0
        %480 = vmatpush2.msra.mxu0 %v369
        %481 = vmatprep.subr.mxu0 0.0
        %482 = vmatpush2.msra.mxu0 %v368
        %483 = vmatprep.subr.mxu0 0.0
        %484 = vmatpush2.msra.mxu0 %v367
        %485 = vmatprep.subr.mxu0 0.0
        %486 = vmatpush2.msra.mxu0 %v366
        %487 = vmatprep.subr.mxu0 0.0
        %488 = vmatpush2.msra.mxu0 %v365
        %489 = vmatprep.subr.mxu0 0.0
        %490 = vmatpush2.msra.mxu0 %v364
        %491 = vmatprep.subr.mxu0 0.0
        %492 = vmatpush2.msra.mxu0 %v363
        %493 = vmatprep.subr.mxu0 0.0
        %494 = vmatpush2.msra.mxu0 %v362
        %495 = vmatprep.subr.mxu0 0.0
        %496 = vmatpush2.msra.mxu0 %v361
        %497 = vmatprep.subr.mxu0 0.0
        %498 = vmatpush2.msra.mxu0 %v360
        %499 = vmatprep.subr.mxu0 0.0
        %500 = vmatpush2.msra.mxu0 %v359
        %501 = vmatprep.subr.mxu0 0.0
        %502 = vmatpush2.msra.mxu0 %v358
        %503 = vmatprep.subr.mxu0 0.0
        %504 = vmatpush2.msra.mxu0 %v357
        %505 = vmatprep.subr.mxu0 0.0
        %506 = vmatpush2.msra.mxu0 %v356
        %507 = vmatprep.subr.mxu0 0.0
        %508 = vmatpush2.msra.mxu0 %v355
        %509 = vmatprep.subr.mxu0 0.0
        %510 = vmatpush2.msra.mxu0 %v354
        %511 = vmatprep.mubr.f32.mxu0 %v332
        %512 = vmatmul.mubr.f32.gmra.mxu0 %v331
        %v513 = vpop.f32.mrf.mxu0
        %v514 = vadd.f32 %v441, %v513
        %v515 = vpop.f32.mrf.mxu0
        %516 = vdwg.mxu0
        %517 = vmatprep.subr.mxu0 0.0
        %518 = vmatpush1.msra.mxu0 %v385
        %519 = vmatprep.subr.mxu0 0.0
        %520 = vmatpush1.msra.mxu0 %v384
        %521 = vmatprep.subr.mxu0 0.0
        %522 = vmatpush1.msra.mxu0 %v383
        %523 = vmatprep.subr.mxu0 0.0
        %524 = vmatpush1.msra.mxu0 %v382
        %525 = vmatprep.subr.mxu0 0.0
        %526 = vmatpush1.msra.mxu0 %v381
        %527 = vmatprep.subr.mxu0 0.0
        %528 = vmatpush1.msra.mxu0 %v380
        %529 = vmatprep.subr.mxu0 0.0
        %530 = vmatpush1.msra.mxu0 %v379
        %531 = vmatprep.subr.mxu0 0.0
        %532 = vmatpush1.msra.mxu0 %v378
        %533 = vmatprep.subr.mxu0 0.0
        %534 = vmatpush1.msra.mxu0 %v377
        %535 = vmatprep.subr.mxu0 0.0
        %536 = vmatpush1.msra.mxu0 %v376
        %537 = vmatprep.subr.mxu0 0.0
        %538 = vmatpush1.msra.mxu0 %v375
        %539 = vmatprep.subr.mxu0 0.0
        %540 = vmatpush1.msra.mxu0 %v374
        %541 = vmatprep.subr.mxu0 0.0
        %542 = vmatpush1.msra.mxu0 %v373
        %543 = vmatprep.subr.mxu0 0.0
        %544 = vmatpush1.msra.mxu0 %v372
        %545 = vmatprep.subr.mxu0 0.0
        %546 = vmatpush1.msra.mxu0 %v371
        %547 = vmatprep.subr.mxu0 0.0
        %548 = vmatpush1.msra.mxu0 %v370
        %549 = vmatprep.subr.mxu0 0.0
        %550 = vmatpush2.msra.mxu0 %v401
        %551 = vmatprep.subr.mxu0 0.0
        %552 = vmatpush2.msra.mxu0 %v400
        %553 = vmatprep.subr.mxu0 0.0
        %554 = vmatpush2.msra.mxu0 %v399
        %555 = vmatprep.subr.mxu0 0.0
        %556 = vmatpush2.msra.mxu0 %v398
        %557 = vmatprep.subr.mxu0 0.0
        %558 = vmatpush2.msra.mxu0 %v397
        %559 = vmatprep.subr.mxu0 0.0
        %560 = vmatpush2.msra.mxu0 %v396
        %561 = vmatprep.subr.mxu0 0.0
        %562 = vmatpush2.msra.mxu0 %v395
        %563 = vmatprep.subr.mxu0 0.0
        %564 = vmatpush2.msra.mxu0 %v394
        %565 = vmatprep.subr.mxu0 0.0
        %566 = vmatpush2.msra.mxu0 %v393
        %567 = vmatprep.subr.mxu0 0.0
        %568 = vmatpush2.msra.mxu0 %v392
        %569 = vmatprep.subr.mxu0 0.0
        %570 = vmatpush2.msra.mxu0 %v391
        %571 = vmatprep.subr.mxu0 0.0
        %572 = vmatpush2.msra.mxu0 %v390
        %573 = vmatprep.subr.mxu0 0.0
        %574 = vmatpush2.msra.mxu0 %v389
        %575 = vmatprep.subr.mxu0 0.0
        %576 = vmatpush2.msra.mxu0 %v388
        %577 = vmatprep.subr.mxu0 0.0
        %578 = vmatpush2.msra.mxu0 %v387
        %579 = vmatprep.subr.mxu0 0.0
        %580 = vmatpush2.msra.mxu0 %v386
        %581 = vmatprep.mubr.f32.mxu0 %v334
        %582 = vmatmul.mubr.f32.gmra.mxu0 %v333
        %v583 = vpop.f32.mrf.mxu0
        %v584 = vadd.f32 %v514, %v583
        %v585 = vpop.f32.mrf.mxu0
        %586 = vdwg.mxu0
        %587 = vmatprep.subr.mxu0 0.0
        %588 = vmatpush1.msra.mxu0 %v417
        %589 = vmatprep.subr.mxu0 0.0
        %590 = vmatpush1.msra.mxu0 %v416
        %591 = vmatprep.subr.mxu0 0.0
        %592 = vmatpush1.msra.mxu0 %v415
        %593 = vmatprep.subr.mxu0 0.0
        %594 = vmatpush1.msra.mxu0 %v414
        %595 = vmatprep.subr.mxu0 0.0
        %596 = vmatpush1.msra.mxu0 %v413
        %597 = vmatprep.subr.mxu0 0.0
        %598 = vmatpush1.msra.mxu0 %v412
        %599 = vmatprep.subr.mxu0 0.0
        %600 = vmatpush1.msra.mxu0 %v411
        %601 = vmatprep.subr.mxu0 0.0
        %602 = vmatpush1.msra.mxu0 %v410
        %603 = vmatprep.subr.mxu0 0.0
        %604 = vmatpush1.msra.mxu0 %v409
        %605 = vmatprep.subr.mxu0 0.0
        %606 = vmatpush1.msra.mxu0 %v408
        %607 = vmatprep.subr.mxu0 0.0
        %608 = vmatpush1.msra.mxu0 %v407
        %609 = vmatprep.subr.mxu0 0.0
        %610 = vmatpush1.msra.mxu0 %v406
        %611 = vmatprep.subr.mxu0 0.0
        %612 = vmatpush1.msra.mxu0 %v405
        %613 = vmatprep.subr.mxu0 0.0
        %614 = vmatpush1.msra.mxu0 %v404
        %615 = vmatprep.subr.mxu0 0.0
        %616 = vmatpush1.msra.mxu0 %v403
        %617 = vmatprep.subr.mxu0 0.0
        %618 = vmatpush1.msra.mxu0 %v402
        %619 = vmatprep.subr.mxu0 0.0
        %620 = vmatpush2.msra.mxu0 %v433
        %621 = vmatprep.subr.mxu0 0.0
        %622 = vmatpush2.msra.mxu0 %v432
        %623 = vmatprep.subr.mxu0 0.0
        %624 = vmatpush2.msra.mxu0 %v431
        %625 = vmatprep.subr.mxu0 0.0
        %626 = vmatpush2.msra.mxu0 %v430
        %627 = vmatprep.subr.mxu0 0.0
        %628 = vmatpush2.msra.mxu0 %v429
        %629 = vmatprep.subr.mxu0 0.0
        %630 = vmatpush2.msra.mxu0 %v428
        %631 = vmatprep.subr.mxu0 0.0
        %632 = vmatpush2.msra.mxu0 %v427
        %633 = vmatprep.subr.mxu0 0.0
        %634 = vmatpush2.msra.mxu0 %v426
        %635 = vmatprep.subr.mxu0 0.0
        %636 = vmatpush2.msra.mxu0 %v425
        %637 = vmatprep.subr.mxu0 0.0
        %638 = vmatpush2.msra.mxu0 %v424
        %639 = vmatprep.subr.mxu0 0.0
        %640 = vmatpush2.msra.mxu0 %v423
        %641 = vmatprep.subr.mxu0 0.0
        %642 = vmatpush2.msra.mxu0 %v422
        %643 = vmatprep.subr.mxu0 0.0
        %644 = vmatpush2.msra.mxu0 %v421
        %645 = vmatprep.subr.mxu0 0.0
        %646 = vmatpush2.msra.mxu0 %v420
        %647 = vmatprep.subr.mxu0 0.0
        %648 = vmatpush2.msra.mxu0 %v419
        %649 = vmatprep.subr.mxu0 0.0
        %650 = vmatpush2.msra.mxu0 %v418
        %651 = vmatprep.mubr.f32.mxu0 %v336
        %652 = vmatmul.mubr.f32.gmra.mxu0 %v335
        %v653 = vpop.f32.mrf.mxu0
        %v654 = vadd.f32 %v584, %v653
        %v655 = vpop.f32.mrf.mxu0
        %656 = vdwg.mxu0
        %657 = vmatprep.subr.mxu0 0.0
        %658 = vmatpush1.msra.mxu0 0.0
        %659 = vmatprep.subr.mxu0 0.0
        %660 = vmatpush1.msra.mxu0 0.0
        %661 = vmatprep.subr.mxu0 0.0
        %662 = vmatpush1.msra.mxu0 0.0
        %663 = vmatprep.subr.mxu0 0.0
        %664 = vmatpush1.msra.mxu0 0.0
        %665 = vmatprep.subr.mxu0 0.0
        %666 = vmatpush1.msra.mxu0 0.0
        %667 = vmatprep.subr.mxu0 0.0
        %668 = vmatpush1.msra.mxu0 0.0
        %669 = vmatprep.subr.mxu0 0.0
        %670 = vmatpush1.msra.mxu0 0.0
        %671 = vmatprep.subr.mxu0 0.0
        %672 = vmatpush1.msra.mxu0 0.0
        %673 = vmatprep.subr.mxu0 0.0
        %674 = vmatpush1.msra.mxu0 0.0
        %675 = vmatprep.subr.mxu0 0.0
        %676 = vmatpush1.msra.mxu0 0.0
        %677 = vmatprep.subr.mxu0 0.0
        %678 = vmatpush1.msra.mxu0 0.0
        %679 = vmatprep.subr.mxu0 0.0
        %680 = vmatpush1.msra.mxu0 0.0
        %681 = vmatprep.subr.mxu0 0.0
        %682 = vmatpush1.msra.mxu0 0.0
        %683 = vmatprep.subr.mxu0 0.0
        %684 = vmatpush1.msra.mxu0 0.0
        %685 = vmatprep.subr.mxu0 0.0
        %686 = vmatpush1.msra.mxu0 %v435
        %687 = vmatprep.subr.mxu0 0.0
        %688 = vmatpush1.msra.mxu0 %v434
        %689 = vmatprep.subr.mxu0 0.0
        %690 = vmatpush2.msra.mxu0 0.0
        %691 = vmatprep.subr.mxu0 0.0
        %692 = vmatpush2.msra.mxu0 0.0
        %693 = vmatprep.subr.mxu0 0.0
        %694 = vmatpush2.msra.mxu0 0.0
        %695 = vmatprep.subr.mxu0 0.0
        %696 = vmatpush2.msra.mxu0 0.0
        %697 = vmatprep.subr.mxu0 0.0
        %698 = vmatpush2.msra.mxu0 0.0
        %699 = vmatprep.subr.mxu0 0.0
        %700 = vmatpush2.msra.mxu0 0.0
        %701 = vmatprep.subr.mxu0 0.0
        %702 = vmatpush2.msra.mxu0 0.0
        %703 = vmatprep.subr.mxu0 0.0
        %704 = vmatpush2.msra.mxu0 0.0
        %705 = vmatprep.subr.mxu0 0.0
        %706 = vmatpush2.msra.mxu0 0.0
        %707 = vmatprep.subr.mxu0 0.0
        %708 = vmatpush2.msra.mxu0 0.0
        %709 = vmatprep.subr.mxu0 0.0
        %710 = vmatpush2.msra.mxu0 0.0
        %711 = vmatprep.subr.mxu0 0.0
        %712 = vmatpush2.msra.mxu0 0.0
        %713 = vmatprep.subr.mxu0 0.0
        %714 = vmatpush2.msra.mxu0 0.0
        %715 = vmatprep.subr.mxu0 0.0
        %716 = vmatpush2.msra.mxu0 0.0
        %717 = vmatprep.subr.mxu0 0.0
        %718 = vmatpush2.msra.mxu0 0.0
        %719 = vmatprep.subr.mxu0 0.0
        %720 = vmatpush2.msra.mxu0 0.0
        %721 = vmatprep.mubr.f32.mxu0 0.0
        %722 = vmatmul.mubr.f32.gmra.mxu0 %v445
        %v723 = vpop.f32.mrf.mxu0
        %v724 = vadd.f32 %v654, %v723
        %v725 = vpop.f32.mrf.mxu0
        %726 = vdwg.mxu0
        %v727 = vmax.f32 %v724, 0.0
        %v728 = vld [vmem:[%s3] sm:$0xff]
        %v729 = vld [vmem:[%s3 + $0x8] sm:$0xff]
        %v730 = vld [vmem:[%s3 + $0x10] sm:$0xff]
        %v731 = vld [vmem:[%s3 + $0x18] sm:$0xff]
        %v732 = vld [vmem:[%s3 + $0x20] sm:$0xff]
        %v733 = vld [vmem:[%s3 + $0x28] sm:$0xff]
        %v734 = vld [vmem:[%s3 + $0x30] sm:$0xff]
        %v735 = vld [vmem:[%s3 + $0x38] sm:$0xff]
        %v736 = vld [vmem:[%s3 + $0x40] sm:$0xff]
        %v737 = vld [vmem:[%s3 + $0x48] sm:$0xff]
        %v738 = vld [vmem:[%s3 + $0x50] sm:$0xff]
        %v739 = vld [vmem:[%s3 + $0x58] sm:$0xff]
        %v740 = vld [vmem:[%s3 + $0x60] sm:$0xff]
        %v741 = vld [vmem:[%s3 + $0x68] sm:$0xff]
        %v742 = vld [vmem:[%s3 + $0x70] sm:$0xff]
        %v743 = vld [vmem:[%s3 + $0x78] sm:$0xff]
        %v744 = vld [vmem:[%s4] sm:$0x1]
        %v746 = vlaneseq
        %v747 = vshrl.u32 %v746, 7
        %v748 = vsub.s32 0, %v747
        %v749 = vrot.slane %v744, %v748
        %751 = vmatprep.subr.mxu0 0.0
        %752 = vmatpush1.msra.mxu0 %v743
        %753 = vmatprep.subr.mxu0 0.0
        %754 = vmatpush1.msra.mxu0 %v742
        %755 = vmatprep.subr.mxu0 0.0
        %756 = vmatpush1.msra.mxu0 %v741
        %757 = vmatprep.subr.mxu0 0.0
        %758 = vmatpush1.msra.mxu0 %v740
        %759 = vmatprep.subr.mxu0 0.0
        %760 = vmatpush1.msra.mxu0 %v739
        %761 = vmatprep.subr.mxu0 0.0
        %762 = vmatpush1.msra.mxu0 %v738
        %763 = vmatprep.subr.mxu0 0.0
        %764 = vmatpush1.msra.mxu0 %v737
        %765 = vmatprep.subr.mxu0 0.0
        %766 = vmatpush1.msra.mxu0 %v736
        %767 = vmatprep.subr.mxu0 0.0
        %768 = vmatpush1.msra.mxu0 %v735
        %769 = vmatprep.subr.mxu0 0.0
        %770 = vmatpush1.msra.mxu0 %v734
        %771 = vmatprep.subr.mxu0 0.0
        %772 = vmatpush1.msra.mxu0 %v733
        %773 = vmatprep.subr.mxu0 0.0
        %774 = vmatpush1.msra.mxu0 %v732
        %775 = vmatprep.subr.mxu0 0.0
        %776 = vmatpush1.msra.mxu0 %v731
        %777 = vmatprep.subr.mxu0 0.0
        %778 = vmatpush1.msra.mxu0 %v730
        %779 = vmatprep.subr.mxu0 0.0
        %780 = vmatpush1.msra.mxu0 %v729
        %781 = vmatprep.subr.mxu0 0.0
        %782 = vmatpush1.msra.mxu0 %v728
        %783 = vmatprep.subr.mxu0 0.0
        %784 = vmatpush2.msra.mxu0 0.0
        %785 = vmatprep.subr.mxu0 0.0
        %786 = vmatpush2.msra.mxu0 0.0
        %787 = vmatprep.subr.mxu0 0.0
        %788 = vmatpush2.msra.mxu0 0.0
        %789 = vmatprep.subr.mxu0 0.0
        %790 = vmatpush2.msra.mxu0 0.0
        %791 = vmatprep.subr.mxu0 0.0
        %792 = vmatpush2.msra.mxu0 0.0
        %793 = vmatprep.subr.mxu0 0.0
        %794 = vmatpush2.msra.mxu0 0.0
        %795 = vmatprep.subr.mxu0 0.0
        %796 = vmatpush2.msra.mxu0 0.0
        %797 = vmatprep.subr.mxu0 0.0
        %798 = vmatpush2.msra.mxu0 0.0
        %799 = vmatprep.subr.mxu0 0.0
        %800 = vmatpush2.msra.mxu0 0.0
        %801 = vmatprep.subr.mxu0 0.0
        %802 = vmatpush2.msra.mxu0 0.0
        %803 = vmatprep.subr.mxu0 0.0
        %804 = vmatpush2.msra.mxu0 0.0
        %805 = vmatprep.subr.mxu0 0.0
        %806 = vmatpush2.msra.mxu0 0.0
        %807 = vmatprep.subr.mxu0 0.0
        %808 = vmatpush2.msra.mxu0 0.0
        %809 = vmatprep.subr.mxu0 0.0
        %810 = vmatpush2.msra.mxu0 0.0
        %811 = vmatprep.subr.mxu0 0.0
        %812 = vmatpush2.msra.mxu0 0.0
        %813 = vmatprep.subr.mxu0 0.0
        %814 = vmatpush2.msra.mxu0 0.0
        %815 = vmatprep.mubr.f32.mxu0 0.0
        %816 = vmatmul.mubr.f32.gmra.mxu0 %v727
        %v817 = vpop.f32.mrf.mxu0
        %v818 = vadd.f32 %v749, %v817
        %v819 = vpop.f32.mrf.mxu0
        %820 = vdwg.mxu0
        %v821 = vmax.f32 %v818, 0.0
        %v822 = vld [vmem:[%s5] sm:$0xff]
        %v823 = vld [vmem:[%s5 + $0x8] sm:$0xff]
        %v824 = vld [vmem:[%s5 + $0x10] sm:$0xff]
        %v825 = vld [vmem:[%s5 + $0x18] sm:$0xff]
        %v826 = vld [vmem:[%s5 + $0x20] sm:$0xff]
        %v827 = vld [vmem:[%s5 + $0x28] sm:$0xff]
        %v828 = vld [vmem:[%s5 + $0x30] sm:$0xff]
        %v829 = vld [vmem:[%s5 + $0x38] sm:$0xff]
        %v830 = vld [vmem:[%s5 + $0x40] sm:$0xff]
        %v831 = vld [vmem:[%s5 + $0x48] sm:$0xff]
        %v832 = vld [vmem:[%s5 + $0x50] sm:$0xff]
        %v833 = vld [vmem:[%s5 + $0x58] sm:$0xff]
        %v834 = vld [vmem:[%s5 + $0x60] sm:$0xff]
        %v835 = vld [vmem:[%s5 + $0x68] sm:$0xff]
        %v836 = vld [vmem:[%s5 + $0x70] sm:$0xff]
        %v837 = vld [vmem:[%s5 + $0x78] sm:$0xff]
        %v838 = vld [vmem:[%s6] sm:$0x1]
        %v840 = vlaneseq
        %v841 = vshrl.u32 %v840, 7
        %v842 = vsub.s32 0, %v841
        %v843 = vrot.slane %v838, %v842
        %845 = vmatprep.subr.mxu0 0.0
        %846 = vmatpush1.msra.mxu0 %v837
        %847 = vmatprep.subr.mxu0 0.0
        %848 = vmatpush1.msra.mxu0 %v836
        %849 = vmatprep.subr.mxu0 0.0
        %850 = vmatpush1.msra.mxu0 %v835
        %851 = vmatprep.subr.mxu0 0.0
        %852 = vmatpush1.msra.mxu0 %v834
        %853 = vmatprep.subr.mxu0 0.0
        %854 = vmatpush1.msra.mxu0 %v833
        %855 = vmatprep.subr.mxu0 0.0
        %856 = vmatpush1.msra.mxu0 %v832
        %857 = vmatprep.subr.mxu0 0.0
        %858 = vmatpush1.msra.mxu0 %v831
        %859 = vmatprep.subr.mxu0 0.0
        %860 = vmatpush1.msra.mxu0 %v830
        %861 = vmatprep.subr.mxu0 0.0
        %862 = vmatpush1.msra.mxu0 %v829
        %863 = vmatprep.subr.mxu0 0.0
        %864 = vmatpush1.msra.mxu0 %v828
        %865 = vmatprep.subr.mxu0 0.0
        %866 = vmatpush1.msra.mxu0 %v827
        %867 = vmatprep.subr.mxu0 0.0
        %868 = vmatpush1.msra.mxu0 %v826
        %869 = vmatprep.subr.mxu0 0.0
        %870 = vmatpush1.msra.mxu0 %v825
        %871 = vmatprep.subr.mxu0 0.0
        %872 = vmatpush1.msra.mxu0 %v824
        %873 = vmatprep.subr.mxu0 0.0
        %874 = vmatpush1.msra.mxu0 %v823
        %875 = vmatprep.subr.mxu0 0.0
        %876 = vmatpush1.msra.mxu0 %v822
        %877 = vmatprep.subr.mxu0 0.0
        %878 = vmatpush2.msra.mxu0 0.0
        %879 = vmatprep.subr.mxu0 0.0
        %880 = vmatpush2.msra.mxu0 0.0
        %881 = vmatprep.subr.mxu0 0.0
        %882 = vmatpush2.msra.mxu0 0.0
        %883 = vmatprep.subr.mxu0 0.0
        %884 = vmatpush2.msra.mxu0 0.0
        %885 = vmatprep.subr.mxu0 0.0
        %886 = vmatpush2.msra.mxu0 0.0
        %887 = vmatprep.subr.mxu0 0.0
        %888 = vmatpush2.msra.mxu0 0.0
        %889 = vmatprep.subr.mxu0 0.0
        %890 = vmatpush2.msra.mxu0 0.0
        %891 = vmatprep.subr.mxu0 0.0
        %892 = vmatpush2.msra.mxu0 0.0
        %893 = vmatprep.subr.mxu0 0.0
        %894 = vmatpush2.msra.mxu0 0.0
        %895 = vmatprep.subr.mxu0 0.0
        %896 = vmatpush2.msra.mxu0 0.0
        %897 = vmatprep.subr.mxu0 0.0
        %898 = vmatpush2.msra.mxu0 0.0
        %899 = vmatprep.subr.mxu0 0.0
        %900 = vmatpush2.msra.mxu0 0.0
        %901 = vmatprep.subr.mxu0 0.0
        %902 = vmatpush2.msra.mxu0 0.0
        %903 = vmatprep.subr.mxu0 0.0
        %904 = vmatpush2.msra.mxu0 0.0
        %905 = vmatprep.subr.mxu0 0.0
        %906 = vmatpush2.msra.mxu0 0.0
        %907 = vmatprep.subr.mxu0 0.0
        %908 = vmatpush2.msra.mxu0 0.0
        %909 = vmatprep.mubr.f32.mxu0 0.0
        %910 = vmatmul.mubr.f32.gmra.mxu0 %v821
        %v911 = vpop.f32.mrf.mxu0
        %v912 = vadd.f32 %v843, %v911
        %v913 = vpop.f32.mrf.mxu0
        %914 = vdwg.mxu0
        %v915 = vmax.f32 %v912, 0.0
        %v916 = vld [vmem:[%s7] sm:$0xff]
        %v917 = vld [vmem:[%s7 + $0x8] sm:$0xff]
        %v918 = vld [vmem:[%s7 + $0x10] sm:$0xff]
        %v919 = vld [vmem:[%s7 + $0x18] sm:$0xff]
        %v920 = vld [vmem:[%s7 + $0x20] sm:$0xff]
        %v921 = vld [vmem:[%s7 + $0x28] sm:$0xff]
        %v922 = vld [vmem:[%s7 + $0x30] sm:$0xff]
        %v923 = vld [vmem:[%s7 + $0x38] sm:$0xff]
        %v924 = vld [vmem:[%s7 + $0x40] sm:$0xff]
        %v925 = vld [vmem:[%s7 + $0x48] sm:$0xff]
        %v926 = vld [vmem:[%s7 + $0x50] sm:$0xff]
        %v927 = vld [vmem:[%s7 + $0x58] sm:$0xff]
        %v928 = vld [vmem:[%s7 + $0x60] sm:$0xff]
        %v929 = vld [vmem:[%s7 + $0x68] sm:$0xff]
        %v930 = vld [vmem:[%s7 + $0x70] sm:$0xff]
        %v931 = vld [vmem:[%s7 + $0x78] sm:$0xff]
        %v932 = vld [vmem:[%s7 + $0x80] sm:$0xff]
        %v933 = vld [vmem:[%s7 + $0x88] sm:$0xff]
        %v934 = vld [vmem:[%s7 + $0x90] sm:$0xff]
        %v935 = vld [vmem:[%s7 + $0x98] sm:$0xff]
        %v936 = vld [vmem:[%s7 + $0xa0] sm:$0xff]
        %v937 = vld [vmem:[%s7 + $0xa8] sm:$0xff]
        %v938 = vld [vmem:[%s7 + $0xb0] sm:$0xff]
        %v939 = vld [vmem:[%s7 + $0xb8] sm:$0xff]
        %v940 = vld [vmem:[%s7 + $0xc0] sm:$0xff]
        %v941 = vld [vmem:[%s7 + $0xc8] sm:$0xff]
        %v942 = vld [vmem:[%s7 + $0xd0] sm:$0xff]
        %v943 = vld [vmem:[%s7 + $0xd8] sm:$0xff]
        %v944 = vld [vmem:[%s7 + $0xe0] sm:$0xff]
        %v945 = vld [vmem:[%s7 + $0xe8] sm:$0xff]
        %v946 = vld [vmem:[%s7 + $0xf0] sm:$0xff]
        %v947 = vld [vmem:[%s7 + $0xf8] sm:$0xff]
        %v948 = vld [vmem:[%s7 + $0x100] sm:$0xff]
        %v949 = vld [vmem:[%s7 + $0x108] sm:$0xff]
        %v950 = vld [vmem:[%s7 + $0x110] sm:$0xff]
        %v951 = vld [vmem:[%s7 + $0x118] sm:$0xff]
        %v952 = vld [vmem:[%s7 + $0x120] sm:$0xff]
        %v953 = vld [vmem:[%s7 + $0x128] sm:$0xff]
        %v954 = vld [vmem:[%s7 + $0x130] sm:$0xff]
        %v955 = vld [vmem:[%s7 + $0x138] sm:$0xff]
        %v956 = vld [vmem:[%s7 + $0x140] sm:$0xff]
        %v957 = vld [vmem:[%s7 + $0x148] sm:$0xff]
        %v958 = vld [vmem:[%s7 + $0x150] sm:$0xff]
        %v959 = vld [vmem:[%s7 + $0x158] sm:$0xff]
        %v960 = vld [vmem:[%s7 + $0x160] sm:$0xff]
        %v961 = vld [vmem:[%s7 + $0x168] sm:$0xff]
        %v962 = vld [vmem:[%s7 + $0x170] sm:$0xff]
        %v963 = vld [vmem:[%s7 + $0x178] sm:$0xff]
        %v964 = vld [vmem:[%s7 + $0x180] sm:$0xff]
        %v965 = vld [vmem:[%s7 + $0x188] sm:$0xff]
        %v966 = vld [vmem:[%s7 + $0x190] sm:$0xff]
        %v967 = vld [vmem:[%s7 + $0x198] sm:$0xff]
        %v968 = vld [vmem:[%s7 + $0x1a0] sm:$0xff]
        %v969 = vld [vmem:[%s7 + $0x1a8] sm:$0xff]
        %v970 = vld [vmem:[%s7 + $0x1b0] sm:$0xff]
        %v971 = vld [vmem:[%s7 + $0x1b8] sm:$0xff]
        %v972 = vld [vmem:[%s7 + $0x1c0] sm:$0xff]
        %v973 = vld [vmem:[%s7 + $0x1c8] sm:$0xff]
        %v974 = vld [vmem:[%s7 + $0x1d0] sm:$0xff]
        %v975 = vld [vmem:[%s7 + $0x1d8] sm:$0xff]
        %v976 = vld [vmem:[%s7 + $0x1e0] sm:$0xff]
        %v977 = vld [vmem:[%s7 + $0x1e8] sm:$0xff]
        %v978 = vld [vmem:[%s7 + $0x1f0] sm:$0xff]
        %v979 = vld [vmem:[%s7 + $0x1f8] sm:$0xff]
        %v980 = vld [vmem:[%s7 + $0x200] sm:$0xff]
        %v981 = vld [vmem:[%s7 + $0x208] sm:$0xff]
        %v982 = vld [vmem:[%s7 + $0x210] sm:$0xff]
        %v983 = vld [vmem:[%s7 + $0x218] sm:$0xff]
        %v984 = vld [vmem:[%s7 + $0x220] sm:$0xff]
        %v985 = vld [vmem:[%s7 + $0x228] sm:$0xff]
        %v986 = vld [vmem:[%s7 + $0x230] sm:$0xff]
        %v987 = vld [vmem:[%s7 + $0x238] sm:$0xff]
        %v988 = vld [vmem:[%s7 + $0x240] sm:$0xff]
        %v989 = vld [vmem:[%s7 + $0x248] sm:$0xff]
        %v990 = vld [vmem:[%s7 + $0x250] sm:$0xff]
        %v991 = vld [vmem:[%s7 + $0x258] sm:$0xff]
        %v992 = vld [vmem:[%s7 + $0x260] sm:$0xff]
        %v993 = vld [vmem:[%s7 + $0x268] sm:$0xff]
        %v994 = vld [vmem:[%s7 + $0x270] sm:$0xff]
        %v995 = vld [vmem:[%s7 + $0x278] sm:$0xff]
        %v996 = vld [vmem:[%s7 + $0x280] sm:$0xff]
        %v997 = vld [vmem:[%s7 + $0x288] sm:$0xff]
        %v998 = vld [vmem:[%s7 + $0x290] sm:$0xff]
        %v999 = vld [vmem:[%s7 + $0x298] sm:$0xff]
        %v1000 = vld [vmem:[%s7 + $0x2a0] sm:$0xff]
        %v1001 = vld [vmem:[%s7 + $0x2a8] sm:$0xff]
        %v1002 = vld [vmem:[%s7 + $0x2b0] sm:$0xff]
        %v1003 = vld [vmem:[%s7 + $0x2b8] sm:$0xff]
        %v1004 = vld [vmem:[%s7 + $0x2c0] sm:$0xff]
        %v1005 = vld [vmem:[%s7 + $0x2c8] sm:$0xff]
        %v1006 = vld [vmem:[%s7 + $0x2d0] sm:$0xff]
        %v1007 = vld [vmem:[%s7 + $0x2d8] sm:$0xff]
        %v1008 = vld [vmem:[%s7 + $0x2e0] sm:$0xff]
        %v1009 = vld [vmem:[%s7 + $0x2e8] sm:$0xff]
        %v1010 = vld [vmem:[%s7 + $0x2f0] sm:$0xff]
        %v1011 = vld [vmem:[%s7 + $0x2f8] sm:$0xff]
        %v1012 = vld [vmem:[%s7 + $0x300] sm:$0xff]
        %v1013 = vld [vmem:[%s7 + $0x308] sm:$0xff]
        %v1014 = vld [vmem:[%s7 + $0x310] sm:$0xff]
        %v1015 = vld [vmem:[%s7 + $0x318] sm:$0xff]
        %v1016 = vld [vmem:[%s7 + $0x320] sm:$0xff]
        %v1017 = vld [vmem:[%s7 + $0x328] sm:$0xff]
        %v1018 = vld [vmem:[%s7 + $0x330] sm:$0xff]
        %v1019 = vld [vmem:[%s7 + $0x338] sm:$0xff]
        %v1020 = vld [vmem:[%s7 + $0x340] sm:$0xff]
        %v1021 = vld [vmem:[%s7 + $0x348] sm:$0xff]
        %v1022 = vld [vmem:[%s7 + $0x350] sm:$0xff]
        %v1023 = vld [vmem:[%s7 + $0x358] sm:$0xff]
        %v1024 = vld [vmem:[%s7 + $0x360] sm:$0xff]
        %v1025 = vld [vmem:[%s7 + $0x368] sm:$0xff]
        %v1026 = vld [vmem:[%s7 + $0x370] sm:$0xff]
        %v1027 = vld [vmem:[%s7 + $0x378] sm:$0xff]
        %v1028 = vld [vmem:[%s8] sm:$0x7f]
        %v1030 = vlaneseq
        %v1031 = vshrl.u32 %v1030, 7
        %v1032 = vsub.s32 0, %v1031
        %v1033 = vrot.slane %v1028, %v1032
        %v1034 = vlaneseq
        %v1035 = vshrl.u32 %v1034, 7
        %v1036 = vsub.s32 1, %v1035
        %v1037 = vrot.slane %v1028, %v1036
        %v1038 = vlaneseq
        %v1039 = vshrl.u32 %v1038, 7
        %v1040 = vsub.s32 2, %v1039
        %v1041 = vrot.slane %v1028, %v1040
        %v1042 = vlaneseq
        %v1043 = vshrl.u32 %v1042, 7
        %v1044 = vsub.s32 3, %v1043
        %v1045 = vrot.slane %v1028, %v1044
        %v1046 = vlaneseq
        %v1047 = vshrl.u32 %v1046, 7
        %v1048 = vsub.s32 4, %v1047
        %v1049 = vrot.slane %v1028, %v1048
        %v1050 = vlaneseq
        %v1051 = vshrl.u32 %v1050, 7
        %v1052 = vsub.s32 5, %v1051
        %v1053 = vrot.slane %v1028, %v1052
        %v1054 = vlaneseq
        %v1055 = vshrl.u32 %v1054, 7
        %v1056 = vsub.s32 6, %v1055
        %v1057 = vrot.slane %v1028, %v1056
        %1065 = vmatprep.subr.mxu0 %v1022
        %1066 = vmatpush1.msra.mxu0 %v1021
        %1067 = vmatprep.subr.mxu0 %v1015
        %1068 = vmatpush1.msra.mxu0 %v1014
        %1069 = vmatprep.subr.mxu0 %v1008
        %1070 = vmatpush1.msra.mxu0 %v1007
        %1071 = vmatprep.subr.mxu0 %v1001
        %1072 = vmatpush1.msra.mxu0 %v1000
        %1073 = vmatprep.subr.mxu0 %v994
        %1074 = vmatpush1.msra.mxu0 %v993
        %1075 = vmatprep.subr.mxu0 %v987
        %1076 = vmatpush1.msra.mxu0 %v986
        %1077 = vmatprep.subr.mxu0 %v980
        %1078 = vmatpush1.msra.mxu0 %v979
        %1079 = vmatprep.subr.mxu0 %v973
        %1080 = vmatpush1.msra.mxu0 %v972
        %1081 = vmatprep.subr.mxu0 %v966
        %1082 = vmatpush1.msra.mxu0 %v965
        %1083 = vmatprep.subr.mxu0 %v959
        %1084 = vmatpush1.msra.mxu0 %v958
        %1085 = vmatprep.subr.mxu0 %v952
        %1086 = vmatpush1.msra.mxu0 %v951
        %1087 = vmatprep.subr.mxu0 %v945
        %1088 = vmatpush1.msra.mxu0 %v944
        %1089 = vmatprep.subr.mxu0 %v938
        %1090 = vmatpush1.msra.mxu0 %v937
        %1091 = vmatprep.subr.mxu0 %v931
        %1092 = vmatpush1.msra.mxu0 %v930
        %1093 = vmatprep.subr.mxu0 %v924
        %1094 = vmatpush1.msra.mxu0 %v923
        %1095 = vmatprep.subr.mxu0 %v917
        %1096 = vmatpush1.msra.mxu0 %v916
        %1097 = vmatprep.subr.mxu0 0.0
        %1098 = vmatpush2.msra.mxu0 0.0
        %1099 = vmatprep.subr.mxu0 0.0
        %1100 = vmatpush2.msra.mxu0 0.0
        %1101 = vmatprep.subr.mxu0 0.0
        %1102 = vmatpush2.msra.mxu0 0.0
        %1103 = vmatprep.subr.mxu0 0.0
        %1104 = vmatpush2.msra.mxu0 0.0
        %1105 = vmatprep.subr.mxu0 0.0
        %1106 = vmatpush2.msra.mxu0 0.0
        %1107 = vmatprep.subr.mxu0 0.0
        %1108 = vmatpush2.msra.mxu0 0.0
        %1109 = vmatprep.subr.mxu0 0.0
        %1110 = vmatpush2.msra.mxu0 0.0
        %1111 = vmatprep.subr.mxu0 0.0
        %1112 = vmatpush2.msra.mxu0 0.0
        %1113 = vmatprep.subr.mxu0 0.0
        %1114 = vmatpush2.msra.mxu0 0.0
        %1115 = vmatprep.subr.mxu0 0.0
        %1116 = vmatpush2.msra.mxu0 0.0
        %1117 = vmatprep.subr.mxu0 0.0
        %1118 = vmatpush2.msra.mxu0 0.0
        %1119 = vmatprep.subr.mxu0 0.0
        %1120 = vmatpush2.msra.mxu0 0.0
        %1121 = vmatprep.subr.mxu0 0.0
        %1122 = vmatpush2.msra.mxu0 0.0
        %1123 = vmatprep.subr.mxu0 0.0
        %1124 = vmatpush2.msra.mxu0 0.0
        %1125 = vmatprep.subr.mxu0 0.0
        %1126 = vmatpush2.msra.mxu0 0.0
        %1127 = vmatprep.subr.mxu0 0.0
        %1128 = vmatpush2.msra.mxu0 0.0
        %1129 = vmatprep.mubr.f32.mxu0 0.0
        %1130 = vmatmul.mubr.f32.gmra.mxu0 %v915
        %v1131 = vpop.f32.mrf.mxu0
        %v1132 = vadd.f32 %v1033, %v1131
        %v1133 = vpop.f32.mrf.mxu0
        %v1134 = vadd.f32 %v1037, %v1133
        %1135 = vdwg.mxu0
        %1136 = vmatprep.subr.mxu0 %v1024
        %1137 = vmatpush1.msra.mxu0 %v1023
        %1138 = vmatprep.subr.mxu0 %v1017
        %1139 = vmatpush1.msra.mxu0 %v1016
        %1140 = vmatprep.subr.mxu0 %v1010
        %1141 = vmatpush1.msra.mxu0 %v1009
        %1142 = vmatprep.subr.mxu0 %v1003
        %1143 = vmatpush1.msra.mxu0 %v1002
        %1144 = vmatprep.subr.mxu0 %v996
        %1145 = vmatpush1.msra.mxu0 %v995
        %1146 = vmatprep.subr.mxu0 %v989
        %1147 = vmatpush1.msra.mxu0 %v988
        %1148 = vmatprep.subr.mxu0 %v982
        %1149 = vmatpush1.msra.mxu0 %v981
        %1150 = vmatprep.subr.mxu0 %v975
        %1151 = vmatpush1.msra.mxu0 %v974
        %1152 = vmatprep.subr.mxu0 %v968
        %1153 = vmatpush1.msra.mxu0 %v967
        %1154 = vmatprep.subr.mxu0 %v961
        %1155 = vmatpush1.msra.mxu0 %v960
        %1156 = vmatprep.subr.mxu0 %v954
        %1157 = vmatpush1.msra.mxu0 %v953
        %1158 = vmatprep.subr.mxu0 %v947
        %1159 = vmatpush1.msra.mxu0 %v946
        %1160 = vmatprep.subr.mxu0 %v940
        %1161 = vmatpush1.msra.mxu0 %v939
        %1162 = vmatprep.subr.mxu0 %v933
        %1163 = vmatpush1.msra.mxu0 %v932
        %1164 = vmatprep.subr.mxu0 %v926
        %1165 = vmatpush1.msra.mxu0 %v925
        %1166 = vmatprep.subr.mxu0 %v919
        %1167 = vmatpush1.msra.mxu0 %v918
        %1168 = vmatprep.subr.mxu0 0.0
        %1169 = vmatpush2.msra.mxu0 0.0
        %1170 = vmatprep.subr.mxu0 0.0
        %1171 = vmatpush2.msra.mxu0 0.0
        %1172 = vmatprep.subr.mxu0 0.0
        %1173 = vmatpush2.msra.mxu0 0.0
        %1174 = vmatprep.subr.mxu0 0.0
        %1175 = vmatpush2.msra.mxu0 0.0
        %1176 = vmatprep.subr.mxu0 0.0
        %1177 = vmatpush2.msra.mxu0 0.0
        %1178 = vmatprep.subr.mxu0 0.0
        %1179 = vmatpush2.msra.mxu0 0.0
        %1180 = vmatprep.subr.mxu0 0.0
        %1181 = vmatpush2.msra.mxu0 0.0
        %1182 = vmatprep.subr.mxu0 0.0
        %1183 = vmatpush2.msra.mxu0 0.0
        %1184 = vmatprep.subr.mxu0 0.0
        %1185 = vmatpush2.msra.mxu0 0.0
        %1186 = vmatprep.subr.mxu0 0.0
        %1187 = vmatpush2.msra.mxu0 0.0
        %1188 = vmatprep.subr.mxu0 0.0
        %1189 = vmatpush2.msra.mxu0 0.0
        %1190 = vmatprep.subr.mxu0 0.0
        %1191 = vmatpush2.msra.mxu0 0.0
        %1192 = vmatprep.subr.mxu0 0.0
        %1193 = vmatpush2.msra.mxu0 0.0
        %1194 = vmatprep.subr.mxu0 0.0
        %1195 = vmatpush2.msra.mxu0 0.0
        %1196 = vmatprep.subr.mxu0 0.0
        %1197 = vmatpush2.msra.mxu0 0.0
        %1198 = vmatprep.subr.mxu0 0.0
        %1199 = vmatpush2.msra.mxu0 0.0
        %1200 = vmatprep.mubr.f32.mxu0 0.0
        %1201 = vmatmul.mubr.f32.gmra.mxu0 %v915
        %v1202 = vpop.f32.mrf.mxu0
        %v1203 = vadd.f32 %v1041, %v1202
        %v1204 = vpop.f32.mrf.mxu0
        %v1205 = vadd.f32 %v1045, %v1204
        %1206 = vdwg.mxu0
        %1207 = vmatprep.subr.mxu0 %v1026
        %1208 = vmatpush1.msra.mxu0 %v1025
        %1209 = vmatprep.subr.mxu0 %v1019
        %1210 = vmatpush1.msra.mxu0 %v1018
        %1211 = vmatprep.subr.mxu0 %v1012
        %1212 = vmatpush1.msra.mxu0 %v1011
        %1213 = vmatprep.subr.mxu0 %v1005
        %1214 = vmatpush1.msra.mxu0 %v1004
        %1215 = vmatprep.subr.mxu0 %v998
        %1216 = vmatpush1.msra.mxu0 %v997
        %1217 = vmatprep.subr.mxu0 %v991
        %1218 = vmatpush1.msra.mxu0 %v990
        %1219 = vmatprep.subr.mxu0 %v984
        %1220 = vmatpush1.msra.mxu0 %v983
        %1221 = vmatprep.subr.mxu0 %v977
        %1222 = vmatpush1.msra.mxu0 %v976
        %1223 = vmatprep.subr.mxu0 %v970
        %1224 = vmatpush1.msra.mxu0 %v969
        %1225 = vmatprep.subr.mxu0 %v963
        %1226 = vmatpush1.msra.mxu0 %v962
        %1227 = vmatprep.subr.mxu0 %v956
        %1228 = vmatpush1.msra.mxu0 %v955
        %1229 = vmatprep.subr.mxu0 %v949
        %1230 = vmatpush1.msra.mxu0 %v948
        %1231 = vmatprep.subr.mxu0 %v942
        %1232 = vmatpush1.msra.mxu0 %v941
        %1233 = vmatprep.subr.mxu0 %v935
        %1234 = vmatpush1.msra.mxu0 %v934
        %1235 = vmatprep.subr.mxu0 %v928
        %1236 = vmatpush1.msra.mxu0 %v927
        %1237 = vmatprep.subr.mxu0 %v921
        %1238 = vmatpush1.msra.mxu0 %v920
        %1239 = vmatprep.subr.mxu0 0.0
        %1240 = vmatpush2.msra.mxu0 0.0
        %1241 = vmatprep.subr.mxu0 0.0
        %1242 = vmatpush2.msra.mxu0 0.0
        %1243 = vmatprep.subr.mxu0 0.0
        %1244 = vmatpush2.msra.mxu0 0.0
        %1245 = vmatprep.subr.mxu0 0.0
        %1246 = vmatpush2.msra.mxu0 0.0
        %1247 = vmatprep.subr.mxu0 0.0
        %1248 = vmatpush2.msra.mxu0 0.0
        %1249 = vmatprep.subr.mxu0 0.0
        %1250 = vmatpush2.msra.mxu0 0.0
        %1251 = vmatprep.subr.mxu0 0.0
        %1252 = vmatpush2.msra.mxu0 0.0
        %1253 = vmatprep.subr.mxu0 0.0
        %1254 = vmatpush2.msra.mxu0 0.0
        %1255 = vmatprep.subr.mxu0 0.0
        %1256 = vmatpush2.msra.mxu0 0.0
        %1257 = vmatprep.subr.mxu0 0.0
        %1258 = vmatpush2.msra.mxu0 0.0
        %1259 = vmatprep.subr.mxu0 0.0
        %1260 = vmatpush2.msra.mxu0 0.0
        %1261 = vmatprep.subr.mxu0 0.0
        %1262 = vmatpush2.msra.mxu0 0.0
        %1263 = vmatprep.subr.mxu0 0.0
        %1264 = vmatpush2.msra.mxu0 0.0
        %1265 = vmatprep.subr.mxu0 0.0
        %1266 = vmatpush2.msra.mxu0 0.0
        %1267 = vmatprep.subr.mxu0 0.0
        %1268 = vmatpush2.msra.mxu0 0.0
        %1269 = vmatprep.subr.mxu0 0.0
        %1270 = vmatpush2.msra.mxu0 0.0
        %1271 = vmatprep.mubr.f32.mxu0 0.0
        %1272 = vmatmul.mubr.f32.gmra.mxu0 %v915
        %v1273 = vpop.f32.mrf.mxu0
        %v1274 = vadd.f32 %v1049, %v1273
        %v1275 = vpop.f32.mrf.mxu0
        %v1276 = vadd.f32 %v1053, %v1275
        %1277 = vdwg.mxu0
        %1278 = vmatprep.subr.mxu0 0.0
        %1279 = vmatpush1.msra.mxu0 %v1027
        %1280 = vmatprep.subr.mxu0 0.0
        %1281 = vmatpush1.msra.mxu0 %v1020
        %1282 = vmatprep.subr.mxu0 0.0
        %1283 = vmatpush1.msra.mxu0 %v1013
        %1284 = vmatprep.subr.mxu0 0.0
        %1285 = vmatpush1.msra.mxu0 %v1006
        %1286 = vmatprep.subr.mxu0 0.0
        %1287 = vmatpush1.msra.mxu0 %v999
        %1288 = vmatprep.subr.mxu0 0.0
        %1289 = vmatpush1.msra.mxu0 %v992
        %1290 = vmatprep.subr.mxu0 0.0
        %1291 = vmatpush1.msra.mxu0 %v985
        %1292 = vmatprep.subr.mxu0 0.0
        %1293 = vmatpush1.msra.mxu0 %v978
        %1294 = vmatprep.subr.mxu0 0.0
        %1295 = vmatpush1.msra.mxu0 %v971
        %1296 = vmatprep.subr.mxu0 0.0
        %1297 = vmatpush1.msra.mxu0 %v964
        %1298 = vmatprep.subr.mxu0 0.0
        %1299 = vmatpush1.msra.mxu0 %v957
        %1300 = vmatprep.subr.mxu0 0.0
        %1301 = vmatpush1.msra.mxu0 %v950
        %1302 = vmatprep.subr.mxu0 0.0
        %1303 = vmatpush1.msra.mxu0 %v943
        %1304 = vmatprep.subr.mxu0 0.0
        %1305 = vmatpush1.msra.mxu0 %v936
        %1306 = vmatprep.subr.mxu0 0.0
        %1307 = vmatpush1.msra.mxu0 %v929
        %1308 = vmatprep.subr.mxu0 0.0
        %1309 = vmatpush1.msra.mxu0 %v922
        %1310 = vmatprep.subr.mxu0 0.0
        %1311 = vmatpush2.msra.mxu0 0.0
        %1312 = vmatprep.subr.mxu0 0.0
        %1313 = vmatpush2.msra.mxu0 0.0
        %1314 = vmatprep.subr.mxu0 0.0
        %1315 = vmatpush2.msra.mxu0 0.0
        %1316 = vmatprep.subr.mxu0 0.0
        %1317 = vmatpush2.msra.mxu0 0.0
        %1318 = vmatprep.subr.mxu0 0.0
        %1319 = vmatpush2.msra.mxu0 0.0
        %1320 = vmatprep.subr.mxu0 0.0
        %1321 = vmatpush2.msra.mxu0 0.0
        %1322 = vmatprep.subr.mxu0 0.0
        %1323 = vmatpush2.msra.mxu0 0.0
        %1324 = vmatprep.subr.mxu0 0.0
        %1325 = vmatpush2.msra.mxu0 0.0
        %1326 = vmatprep.subr.mxu0 0.0
        %1327 = vmatpush2.msra.mxu0 0.0
        %1328 = vmatprep.subr.mxu0 0.0
        %1329 = vmatpush2.msra.mxu0 0.0
        %1330 = vmatprep.subr.mxu0 0.0
        %1331 = vmatpush2.msra.mxu0 0.0
        %1332 = vmatprep.subr.mxu0 0.0
        %1333 = vmatpush2.msra.mxu0 0.0
        %1334 = vmatprep.subr.mxu0 0.0
        %1335 = vmatpush2.msra.mxu0 0.0
        %1336 = vmatprep.subr.mxu0 0.0
        %1337 = vmatpush2.msra.mxu0 0.0
        %1338 = vmatprep.subr.mxu0 0.0
        %1339 = vmatpush2.msra.mxu0 0.0
        %1340 = vmatprep.subr.mxu0 0.0
        %1341 = vmatpush2.msra.mxu0 0.0
        %1342 = vmatprep.mubr.f32.mxu0 0.0
        %1343 = vmatmul.mubr.f32.gmra.mxu0 %v915
        %v1344 = vpop.f32.mrf.mxu0
        %v1345 = vadd.f32 %v1057, %v1344
        %v1346 = vpop.f32.mrf.mxu0
        %1347 = vdwg.mxu0
        %v1348 = vsub.f32 0.0, %v1132
        %v1349 = vsub.f32 0.0, %v1134
        %v1350 = vsub.f32 0.0, %v1203
        %v1351 = vsub.f32 0.0, %v1205
        %v1352 = vsub.f32 0.0, %v1274
        %v1353 = vsub.f32 0.0, %v1276
        %v1354 = vsub.f32 0.0, %v1345
        %v1355 = vmul.f32 %v1348, 1.442695
        %v1356 = vpow.pop %v1355
        %v1357 = vmul.f32 %v1349, 1.442695
        %v1358 = vpow.pop %v1357
        %v1359 = vmul.f32 %v1350, 1.442695
        %v1360 = vpow.pop %v1359
        %v1361 = vmul.f32 %v1351, 1.442695
        %v1362 = vpow.pop %v1361
        %v1363 = vmul.f32 %v1352, 1.442695
        %v1364 = vpow.pop %v1363
        %v1365 = vmul.f32 %v1353, 1.442695
        %v1366 = vpow.pop %v1365
        %v1367 = vmul.f32 %v1354, 1.442695
        %v1368 = vpow.pop %v1367
        %v1369 = vadd.f32 %v1356, 1.0
        %v1370 = vadd.f32 %v1358, 1.0
        %v1371 = vadd.f32 %v1360, 1.0
        %v1372 = vadd.f32 %v1362, 1.0
        %v1373 = vadd.f32 %v1364, 1.0
        %v1374 = vadd.f32 %v1366, 1.0
        %v1375 = vadd.f32 %v1368, 1.0
        %v1376 = vrcp.pop %v1369
        %v1377 = vrcp.pop %v1370
        %v1378 = vrcp.pop %v1371
        %v1379 = vrcp.pop %v1372
        %v1380 = vrcp.pop %v1373
        %v1381 = vrcp.pop %v1374
        %v1382 = vrcp.pop %v1375
        %v1383 = vmax.f32 %v1376, 0.0
        %v1384 = vmax.f32 %v1377, 0.0
        %v1385 = vmax.f32 %v1378, 0.0
        %v1386 = vmax.f32 %v1379, 0.0
        %v1387 = vmax.f32 %v1380, 0.0
        %v1388 = vmax.f32 %v1381, 0.0
        %v1389 = vmax.f32 %v1382, 0.0
        %v1390 = vmin.f32 %v1383, 1.0
        %v1391 = vmin.f32 %v1384, 1.0
        %v1392 = vmin.f32 %v1385, 1.0
        %v1393 = vmin.f32 %v1386, 1.0
        %v1394 = vmin.f32 %v1387, 1.0
        %v1395 = vmin.f32 %v1388, 1.0
        %v1396 = vmin.f32 %v1389, 1.0
        %1397 = vst [vmem:[%s325] sm:$0xff] %v1390
        %1398 = vst [vmem:[%s325 + $0x8] sm:$0xff] %v1391
        %1399 = vst [vmem:[%s325 + $0x10] sm:$0xff] %v1392
        %1400 = vst [vmem:[%s325 + $0x18] sm:$0xff] %v1393
        %1401 = vst [vmem:[%s325 + $0x20] sm:$0xff] %v1394
        %1402 = vst [vmem:[%s325 + $0x28] sm:$0xff] %v1395
        %1403 = vst.msk [vmem:[%s325 + $0x30] sm:$0xff] %vm443, %v1396
        %s1404 = sand.u32 %s225, 1
        %s1405 = scalar_lea.sflag [#allocation3], %s1404
        %s1406 = sand.u32 %s225, 1
        %s1407 = smul.addr %s1406, 56
        %s1408 = scalar_lea.vmem [#allocation2], %s1407
        // Predicated region
        $region57: #{tpu_custom_call.1} parent=55 // pred_check
          %p1409 = pneg %p235
        $region58: #{tpu_custom_call.1} parent=55 // pred_check_branch
          %1411 = sbr.rel (%p1409) target = $region60
        $region59: #{tpu_custom_call.1} parent=55 // pred_region
          %s1413 = ssub.s32 896, 896
          %1414 = vsyncadd %s1405, %s1413
          %s1415 = smul.addr %s23, 7
          %s1416 = smul.addr %s1415, 128
          %s1417 = scalar_lea.hbm %s9, %s1416
          %s1419 = sshll.u32 %s1408, 4
          %s1420 = int_to_ptr.vmem [resolvable:$true] %s1419
          %1422 = dma.vmem_to_hbm [thread:$0]  %s1420, 896, %s1417, %s1405
        $region60: #{tpu_custom_call.1} parent=55 // pred_fallthru
          _
      $region56: #{tpu_custom_call.1} parent=5 // pred_fallthru
        _
      %p1423 = scmp.le.s32.totalorder 2, %s18
      // Predicated region
      $region61: #{tpu_custom_call.1} parent=5 // pred_check
        %p1424 = pneg %p1423
      $region62: #{tpu_custom_call.1} parent=5 // pred_check_branch
        %1426 = sbr.rel (%p1424) target = $region64
      $region63: #{tpu_custom_call.1} parent=5 // pred_region
        %s1427 = ssub.s32 %s18, 2
        // Predicated region
        $region65: #{tpu_custom_call.1} parent=63 // pred_check
          %p1428 = pneg %p241
        $region66: #{tpu_custom_call.1} parent=63 // pred_check_branch
          %1430 = sbr.rel (%p1428) target = $region68
        $region67: #{tpu_custom_call.1} parent=63 // pred_region
          %s1431 = sand.u32 %s226, 1
          %s1432 = scalar_lea.sflag [#allocation3], %s1431
          %s1433 = sand.u32 %s226, 1
          %s1434 = smul.addr %s1433, 56
          %s1435 = scalar_lea.vmem [#allocation2], %s1434
          %1436 = dma.done %s1432, 896
        $region68: #{tpu_custom_call.1} parent=63 // pred_fallthru
          _
      $region64: #{tpu_custom_call.1} parent=5 // pred_fallthru
        _
    $region6: #{tpu_custom_call.1} parent=1 // loop_footer
      %s22 = sadd.s32 1, %s18
    $region7: #{tpu_custom_call.1} parent=1 // loop_footer_branch
      %17 = sbr.rel target = $region3
    $region8: #{tpu_custom_call.1} parent=1 // loop_exit
      _
    %1437 = vsyncpa [#allocation3], 1
    %s1438 = scalar_lea.sflag [#allocation3], 1
    %1439 = vsyncpa %s1438, 1

</llo_original>
